<compile_context>
chip_gen: v7x
topology: tpu7x:2x2x1
jax: 0.10.0
libtpu: 0.0.40
codegen_flags: <defaults>
</compile_context>

<pallas_src>
import functools
import math

import jax
import jax.numpy as jnp
from jax.experimental import pallas as pl
from jax.experimental.pallas import tpu as pltpu


def _round_up(n, m):
    return ((n + m - 1) // m) * m


# ----------------------------------------------------------------------------
# Fused kernel: one grid step == one LSTM layer; last step also runs the head.
# All shapes are padded: Bp % 8 == 0, F/Hp/Op % 128 == 0.  Gate layout in the
# packed weights is (i, f, o, g), each gate occupying Hp lanes.
# ----------------------------------------------------------------------------
def _make_fused_kernel(S, Bp, F, Hp, Op, T_CHUNK, unroll=8):
    G = 4 * Hp

    def kernel(x_ref, wih_ref, whh_ref, b_ref, w1_ref, b1_ref, w2_ref, b2_ref,
               o_ref, seq_sc, gx_sc):
        l = pl.program_id(0)

        # Stage layer-0 input into the persistent inter-layer buffer once.
        @pl.when(l == 0)
        def _():
            seq_sc[...] = x_ref[...]

        wdt = whh_ref.dtype            # bf16 (perf path) or f32 (exact path)
        bias = b_ref[...]              # (1, 4Hp) f32, b_ih + b_hh folded

        # h/c live in registers (loop carries), zero-initialized per layer.
        hc = (jnp.zeros((Bp, Hp), jnp.float32),
              jnp.zeros((Bp, Hp), jnp.float32))

        for c_start in range(0, S, T_CHUNK):
            tc = min(T_CHUNK, S - c_start)

            # Hoisted input projection (+ bias) for T_CHUNK timesteps: one MXU matmul.
            xin = seq_sc[c_start:c_start + tc].reshape(tc * Bp, F)
            gx = jnp.dot(xin.astype(wdt), wih_ref[...],
                         preferred_element_type=jnp.float32) + bias
            gx_sc[0:tc] = gx.reshape(tc, Bp, G)

            def step(t, carry, c_start=c_start):
                h, c = carry
                gates = gx_sc[t] + jnp.dot(h.astype(wdt), whh_ref[...],
                                           preferred_element_type=jnp.float32)
                # Packed gate order (i | f | o | g): sigmoids are one contiguous slice.
                sig = jax.nn.sigmoid(gates[:, :3 * Hp])
                g_g = jnp.tanh(gates[:, 3 * Hp:])
                i_g = sig[:, 0 * Hp:1 * Hp]
                f_g = sig[:, 1 * Hp:2 * Hp]
                o_g = sig[:, 2 * Hp:3 * Hp]
                c_new = f_g * c + i_g * g_g
                h_new = o_g * jnp.tanh(c_new)
                if F == Hp:
                    seq_sc[c_start + t] = h_new
                else:
                    seq_sc[c_start + t, :, :Hp] = h_new
                return (h_new, c_new)

            hc = jax.lax.fori_loop(0, tc, step, hc, unroll=min(tc, unroll))

        # Regression head (Linear -> Tanh -> Linear) only after the last layer.
        @pl.when(l == pl.num_programs(0) - 1)
        def _():
            y = seq_sc[...].reshape(S * Bp, F)
            h1 = jnp.tanh(jnp.dot(y.astype(w1_ref.dtype), w1_ref[...],
                                  preferred_element_type=jnp.float32) + b1_ref[...])
            out = jnp.dot(h1.astype(w2_ref.dtype), w2_ref[...],
                          preferred_element_type=jnp.float32) + b2_ref[...]
            o_ref[...] = out.reshape(S, Bp, Op)

    return kernel


# ----------------------------------------------------------------------------
# Parameter init (PyTorch-style uniform(-1/sqrt(H), 1/sqrt(H))) -> raw params.
# ----------------------------------------------------------------------------
def init_params(key, inp_dim, out_dim, mid_dim, mid_layers):
    k = 1.0 / math.sqrt(mid_dim)
    raw = {"lstm": []}
    for layer in range(mid_layers):
        din = inp_dim if layer == 0 else mid_dim
        key, k1, k2, k3, k4 = jax.random.split(key, 5)
        raw["lstm"].append(dict(
            w_ih=jax.random.uniform(k1, (4 * mid_dim, din), jnp.float32, -k, k),
            w_hh=jax.random.uniform(k2, (4 * mid_dim, mid_dim), jnp.float32, -k, k),
            b_ih=jax.random.uniform(k3, (4 * mid_dim,), jnp.float32, -k, k),
            b_hh=jax.random.uniform(k4, (4 * mid_dim,), jnp.float32, -k, k)))
    key, k1, k2, k3, k4 = jax.random.split(key, 5)
    raw["w1"] = jax.random.uniform(k1, (mid_dim, mid_dim), jnp.float32, -k, k)
    raw["b1"] = jax.random.uniform(k2, (mid_dim,), jnp.float32, -k, k)
    raw["w2"] = jax.random.uniform(k3, (out_dim, mid_dim), jnp.float32, -k, k)
    raw["b2"] = jax.random.uniform(k4, (out_dim,), jnp.float32, -k, k)
    return raw


# ----------------------------------------------------------------------------
# Pack raw (PyTorch-layout) params into transposed, gate-reordered, zero-padded,
# layer-stacked kernel arrays.  Kernel gate order is (i, f, o, g).
# ----------------------------------------------------------------------------
_GATE_PERM = jnp.array([0, 1, 3, 2])     # PyTorch (i, f, g, o) -> kernel (i, f, o, g)


def _pack_gates(w, H, Hp):
    rows = w.shape[0]
    wg = w.reshape(rows, 4, H)[:, _GATE_PERM, :]
    return jnp.pad(wg, ((0, 0), (0, 0), (0, Hp - H))).reshape(rows, 4 * Hp)


def pack_params(raw, inp_dim, out_dim, mid_dim, mid_layers,
                param_dtype=jnp.bfloat16):
    H = mid_dim
    Hp = _round_up(H, 128)
    Dp = _round_up(inp_dim, 128)
    Op = _round_up(out_dim, 128)
    F = max(Dp, Hp)                       # uniform per-layer input feature width

    wih_l, whh_l, bias_l = [], [], []
    for l, lp in enumerate(raw["lstm"]):
        din = inp_dim if l == 0 else H
        wih_t = _pack_gates(lp["w_ih"].T, H, Hp)          # (din, 4Hp)
        wih_t = jnp.pad(wih_t, ((0, F - din), (0, 0)))     # (F, 4Hp), extra rows zero
        whh_t = _pack_gates(lp["w_hh"].T, H, Hp)           # (H, 4Hp)
        whh_t = jnp.pad(whh_t, ((0, Hp - H), (0, 0)))      # (Hp, 4Hp)
        bias = _pack_gates((lp["b_ih"] + lp["b_hh"]).reshape(1, 4 * H), H, Hp)
        wih_l.append(wih_t)
        whh_l.append(whh_t)
        bias_l.append(bias)

    return dict(
        wih=jnp.stack(wih_l).astype(param_dtype),          # (L, F, 4Hp)
        whh=jnp.stack(whh_l).astype(param_dtype),          # (L, Hp, 4Hp)
        bias=jnp.stack(bias_l).astype(jnp.float32),        # (L, 1, 4Hp)
        w1_t=jnp.pad(raw["w1"].T, ((0, F - H), (0, Hp - H))).astype(param_dtype),
        b1=jnp.pad(raw["b1"].reshape(1, H), ((0, 0), (0, Hp - H))).astype(jnp.float32),
        w2_t=jnp.pad(raw["w2"].T, ((0, Hp - H), (0, Op - out_dim))).astype(param_dtype),
        b2=jnp.pad(raw["b2"].reshape(1, out_dim),
                   ((0, 0), (0, Op - out_dim))).astype(jnp.float32),
    )


# ----------------------------------------------------------------------------
# Forward wrapper: pad x, run the fused kernel over a layer grid, slice padding off.
# ----------------------------------------------------------------------------
@functools.partial(jax.jit, static_argnames=("out_dim",))
def reg_lstm_forward(packed, x, *, out_dim):
    S, B, Din = x.shape
    L, F, G = packed["wih"].shape         # G = 4*Hp
    Hp = packed["whh"].shape[1]
    Op = packed["w2_t"].shape[1]
    Bp = _round_up(B, 8)
    T_CHUNK = min(S, 16)

    xp = jnp.zeros((S, Bp, F), jnp.float32).at[:, :B, :Din].set(x)

    # Size the scoped VMEM limit from the actual buffers (x2 headroom, capped).
    wbytes = jnp.dtype(packed["wih"].dtype).itemsize
    vmem_bytes = (
        2 * S * Bp * F * 4                      # x block (double-buffered)
        + 2 * (F + Hp) * G * wbytes             # per-layer w_ih/w_hh blocks (x2 bufs)
        + 2 * G * 4                             # per-layer bias block
        + 2 * (F * Hp + Hp * Op) * wbytes       # head weights
        + 2 * (Hp + Op) * 4                     # head biases
        + 2 * S * Bp * Op * 4                   # output block
        + S * Bp * F * 4                        # seq scratch
        + T_CHUNK * Bp * G * 4                  # gates_x chunk scratch
    )
    vmem_limit = int(min(max(2 * vmem_bytes, 32 * 1024 * 1024), 100 * 1024 * 1024))

    out_p = pl.pallas_call(
        _make_fused_kernel(S, Bp, F, Hp, Op, T_CHUNK),
        out_shape=jax.ShapeDtypeStruct((S, Bp, Op), jnp.float32),
        grid=(L,),
        in_specs=[
            pl.BlockSpec((S, Bp, F), lambda l: (0, 0, 0)),     # x (resident)
            pl.BlockSpec((None, F, G), lambda l: (l, 0, 0)),   # w_ih of layer l
            pl.BlockSpec((None, Hp, G), lambda l: (l, 0, 0)),  # w_hh of layer l
            pl.BlockSpec((None, 1, G), lambda l: (l, 0, 0)),   # bias of layer l
            pl.BlockSpec((F, Hp), lambda l: (0, 0)),           # head w1
            pl.BlockSpec((1, Hp), lambda l: (0, 0)),           # head b1
            pl.BlockSpec((Hp, Op), lambda l: (0, 0)),          # head w2
            pl.BlockSpec((1, Op), lambda l: (0, 0)),           # head b2
        ],
        out_specs=pl.BlockSpec((S, Bp, Op), lambda l: (0, 0, 0)),
        scratch_shapes=[
            pltpu.VMEM((S, Bp, F), jnp.float32),        # inter-layer sequence buffer
            pltpu.VMEM((T_CHUNK, Bp, G), jnp.float32),  # hoisted gates_x chunk
        ],
        compiler_params=pltpu.CompilerParams(
            dimension_semantics=("arbitrary",),
            vmem_limit_bytes=vmem_limit,
        ),
    )(xp, packed["wih"], packed["whh"], packed["bias"],
      packed["w1_t"], packed["b1"], packed["w2_t"], packed["b2"])

    return out_p[:, :B, :out_dim]


# ----------------------------------------------------------------------------
# Pure-JAX reference (matches the PyTorch module) for a semantic sanity check.
# ----------------------------------------------------------------------------
def reg_lstm_reference(raw, x):
    HIGH = jax.lax.Precision.HIGHEST
    y = x
    B = x.shape[1]
    for lp in raw["lstm"]:
        H = lp["w_hh"].shape[1]
        wih_t, whh_t = lp["w_ih"].T, lp["w_hh"].T
        bias = lp["b_ih"] + lp["b_hh"]

        def step(carry, x_t, wih_t=wih_t, whh_t=whh_t, bias=bias, H=H):
            h, c = carry
            gates = (jnp.dot(x_t, wih_t, precision=HIGH)
                     + jnp.dot(h, whh_t, precision=HIGH) + bias)
            i = jax.nn.sigmoid(gates[:, 0 * H:1 * H])
            f = jax.nn.sigmoid(gates[:, 1 * H:2 * H])
            g = jnp.tanh(gates[:, 2 * H:3 * H])
            o = jax.nn.sigmoid(gates[:, 3 * H:4 * H])
            c = f * c + i * g
            h = o * jnp.tanh(c)
            return (h, c), h

        init = (jnp.zeros((B, H), jnp.float32), jnp.zeros((B, H), jnp.float32))
        _, y = jax.lax.scan(step, init, y)
    h = jnp.tanh(jnp.dot(y, raw["w1"].T, precision=HIGH) + raw["b1"])
    return jnp.dot(h, raw["w2"].T, precision=HIGH) + raw["b2"]


if __name__ == "__main__":
    seq_len, batch, inp_dim, mid_dim, mid_layers, out_dim = 8, 2, 4, 32, 2, 4

    key = jax.random.PRNGKey(0)
    key, kx, kp = jax.random.split(key, 3)
    x = jax.random.normal(kx, (seq_len, batch, inp_dim), jnp.float32)
    raw = init_params(kp, inp_dim, out_dim, mid_dim, mid_layers)
    ref = reg_lstm_reference(raw, x)

    # Exact-semantics path (f32 weights): tight tolerance vs. the reference.
    packed_f32 = pack_params(raw, inp_dim, out_dim, mid_dim, mid_layers,
                             param_dtype=jnp.float32)
    out_f32 = reg_lstm_forward(packed_f32, x, out_dim=out_dim)
    jax.block_until_ready(out_f32)
    assert out_f32.shape == (seq_len, batch, out_dim)
    assert jnp.allclose(out_f32, ref, atol=2e-4, rtol=2e-4), float(
        jnp.max(jnp.abs(out_f32 - ref)))

    # Performance path (bf16 MXU operands, f32 accumulate / gate math): looser tolerance.
    packed_bf16 = pack_params(raw, inp_dim, out_dim, mid_dim, mid_layers,
                              param_dtype=jnp.bfloat16)
    out_bf16 = reg_lstm_forward(packed_bf16, x, out_dim=out_dim)
    jax.block_until_ready(out_bf16)
    assert out_bf16.shape == (seq_len, batch, out_dim)
    assert jnp.allclose(out_bf16, ref, atol=3e-2, rtol=3e-2), float(
        jnp.max(jnp.abs(out_bf16 - ref)))

    print("KERNEL_OK")
</pallas_src>

<mosaic_0001>
module attributes {stable_mosaic.version = 11 : i64} {
  func.func @kernel(%arg0: i32, %arg1: memref<8x8x128xf32, #tpu.memory_space<vmem>>, %arg2: memref<1x128x512xf32, #tpu.memory_space<vmem>>, %arg3: memref<1x128x512xf32, #tpu.memory_space<vmem>>, %arg4: memref<1x1x512xf32, #tpu.memory_space<vmem>>, %arg5: memref<128x128xf32, #tpu.memory_space<vmem>>, %arg6: memref<1x128xf32, #tpu.memory_space<vmem>>, %arg7: memref<128x128xf32, #tpu.memory_space<vmem>>, %arg8: memref<1x128xf32, #tpu.memory_space<vmem>>, %arg9: memref<8x8x128xf32, #tpu.memory_space<vmem>>, %arg10: memref<8x8x128xf32, #tpu.memory_space<vmem>>, %arg11: memref<8x8x512xf32, #tpu.memory_space<vmem>>) attributes {dimension_semantics = [#tpu.dimension_semantics<arbitrary>], iteration_bounds = array<i64: 2>, scalar_prefetch = 0 : i64, scratch_operands = 2 : i64, tpu.core_type = #tpu.core_type<tc>, window_params = [{pipeline_mode = #tpu.pipeline_mode<synchronous>, transform_indices = @transform_0, window_bounds = array<i64: 8, 8, 128>}, {transform_indices = @transform_1, window_bounds = array<i64: 1, 128, 512>}, {transform_indices = @transform_2, window_bounds = array<i64: 1, 128, 512>}, {transform_indices = @transform_3, window_bounds = array<i64: 1, 1, 512>}, {pipeline_mode = #tpu.pipeline_mode<synchronous>, transform_indices = @transform_4, window_bounds = array<i64: 128, 128>}, {pipeline_mode = #tpu.pipeline_mode<synchronous>, transform_indices = @transform_5, window_bounds = array<i64: 1, 128>}, {pipeline_mode = #tpu.pipeline_mode<synchronous>, transform_indices = @transform_6, window_bounds = array<i64: 128, 128>}, {pipeline_mode = #tpu.pipeline_mode<synchronous>, transform_indices = @transform_7, window_bounds = array<i64: 1, 128>}, {pipeline_mode = #tpu.pipeline_mode<synchronous>, transform_indices = @transform_8, window_bounds = array<i64: 8, 8, 128>}]} {
    %c0_i32 = arith.constant 0 : i32
    %0 = arith.cmpi eq, %arg0, %c0_i32 : i32
    %1 = arith.extui %0 : i1 to i32
    %c0_i32_0 = arith.constant 0 : i32
    %2 = arith.cmpi ne, %1, %c0_i32_0 : i32
    scf.if %2 {
      %c0_97 = arith.constant 0 : index
      %c0_98 = arith.constant 0 : index
      %c0_99 = arith.constant 0 : index
      %243 = vector.load %arg1[%c0_97, %c0_98, %c0_99] : memref<8x8x128xf32, #tpu.memory_space<vmem>>, vector<8x8x128xf32>
      %c0_100 = arith.constant 0 : index
      %c0_101 = arith.constant 0 : index
      %c0_102 = arith.constant 0 : index
      %244 = vector.load %arg10[%c0_100, %c0_101, %c0_102] : memref<8x8x128xf32, #tpu.memory_space<vmem>>, vector<8x8x128xf32>
      tpu.vector_store %arg10[%c0_100, %c0_101, %c0_102], %243 {strides = array<i32>} : memref<8x8x128xf32, #tpu.memory_space<vmem>>, vector<8x8x128xf32>,
    } else {
    }
    %c0 = arith.constant 0 : index
    %c0_1 = arith.constant 0 : index
    %c0_2 = arith.constant 0 : index
    %3 = vector.load %arg4[%c0, %c0_1, %c0_2] : memref<1x1x512xf32, #tpu.memory_space<vmem>>, vector<1x1x512xf32>
    %4 = vector.shape_cast %3 : vector<1x1x512xf32> to vector<1x512xf32>
    %cst = arith.constant 0.000000e+00 : f32
    %5 = vector.broadcast %cst : f32 to vector<8x128xf32>
    %cst_3 = arith.constant 0.000000e+00 : f32
    %6 = vector.broadcast %cst_3 : f32 to vector<8x128xf32>
    %c0_4 = arith.constant 0 : index
    %c0_5 = arith.constant 0 : index
    %c0_6 = arith.constant 0 : index
    %7 = vector.load %arg10[%c0_4, %c0_5, %c0_6] : memref<8x8x128xf32, #tpu.memory_space<vmem>>, vector<8x8x128xf32>
    %8 = vector.shape_cast %7 : vector<8x8x128xf32> to vector<64x128xf32>
    %c0_7 = arith.constant 0 : index
    %c0_8 = arith.constant 0 : index
    %c0_9 = arith.constant 0 : index
    %9 = vector.load %arg2[%c0_7, %c0_8, %c0_9] : memref<1x128x512xf32, #tpu.memory_space<vmem>>, vector<1x128x512xf32>
    %10 = vector.shape_cast %9 : vector<1x128x512xf32> to vector<128x512xf32>
    %cst_10 = arith.constant dense<0.000000e+00> : vector<64x512xf32>
    %11 = tpu.matmul %8, %10, %cst_10 {dimension_numbers = #tpu.dot_dimension_numbers<[1], [0], [0], [1], [0, 0, 1, 1], [], []>} : vector<64x128xf32>, vector<128x512xf32>, vector<64x512xf32> -> vector<64x512xf32>
    %12 = vector.broadcast %4 : vector<1x512xf32> to vector<64x512xf32>
    %13 = arith.addf %11, %12 : vector<64x512xf32>
    %14 = vector.shape_cast %13 : vector<64x512xf32> to vector<8x8x512xf32>
    %c0_11 = arith.constant 0 : index
    %c0_12 = arith.constant 0 : index
    %c0_13 = arith.constant 0 : index
    %15 = vector.load %arg11[%c0_11, %c0_12, %c0_13] : memref<8x8x512xf32, #tpu.memory_space<vmem>>, vector<8x8x512xf32>
    tpu.vector_store %arg11[%c0_11, %c0_12, %c0_13], %14 {strides = array<i32>} : memref<8x8x512xf32, #tpu.memory_space<vmem>>, vector<8x8x512xf32>,
    %c0_i32_14 = arith.constant 0 : i32
    %16 = arith.index_cast %c0_i32_14 : i32 to index
    %c0_15 = arith.constant 0 : index
    %c0_16 = arith.constant 0 : index
    %17 = vector.load %arg11[%16, %c0_15, %c0_16] : memref<8x8x512xf32, #tpu.memory_space<vmem>>, vector<1x8x512xf32>
    %18 = vector.shape_cast %17 : vector<1x8x512xf32> to vector<8x512xf32>
    %c0_17 = arith.constant 0 : index
    %c0_18 = arith.constant 0 : index
    %c0_19 = arith.constant 0 : index
    %19 = vector.load %arg3[%c0_17, %c0_18, %c0_19] : memref<1x128x512xf32, #tpu.memory_space<vmem>>, vector<1x128x512xf32>
    %20 = vector.shape_cast %19 : vector<1x128x512xf32> to vector<128x512xf32>
    %cst_20 = arith.constant dense<0.000000e+00> : vector<8x512xf32>
    %21 = tpu.matmul %5, %20, %cst_20 {dimension_numbers = #tpu.dot_dimension_numbers<[1], [0], [0], [1], [0, 0, 1, 1], [], []>} : vector<8x128xf32>, vector<128x512xf32>, vector<8x512xf32> -> vector<8x512xf32>
    %22 = arith.addf %18, %21 : vector<8x512xf32>
    %23 = vector.extract_strided_slice %22 {offsets = [0, 0], sizes = [8, 384], strides = [1, 1]} : vector<8x512xf32> to vector<8x384xf32>
    %24 = arith.negf %23 : vector<8x384xf32>
    %25 = math.exp %24 : vector<8x384xf32>
    %cst_21 = arith.constant 1.000000e+00 : f32
    %26 = vector.broadcast %cst_21 : f32 to vector<8x384xf32>
    %27 = arith.addf %26, %25 : vector<8x384xf32>
    %28 = arith.divf %26, %27 : vector<8x384xf32>
    %29 = vector.extract_strided_slice %22 {offsets = [0, 384], sizes = [8, 128], strides = [1, 1]} : vector<8x512xf32> to vector<8x128xf32>
    %30 = math.tanh %29 : vector<8x128xf32>
    %31 = vector.extract_strided_slice %28 {offsets = [0, 0], sizes = [8, 128], strides = [1, 1]} : vector<8x384xf32> to vector<8x128xf32>
    %32 = vector.extract_strided_slice %28 {offsets = [0, 128], sizes = [8, 128], strides = [1, 1]} : vector<8x384xf32> to vector<8x128xf32>
    %33 = vector.extract_strided_slice %28 {offsets = [0, 256], sizes = [8, 128], strides = [1, 1]} : vector<8x384xf32> to vector<8x128xf32>
    %34 = arith.mulf %32, %6 : vector<8x128xf32>
    %35 = arith.mulf %31, %30 : vector<8x128xf32>
    %36 = arith.addf %34, %35 : vector<8x128xf32>
    %37 = math.tanh %36 : vector<8x128xf32>
    %38 = arith.mulf %33, %37 : vector<8x128xf32>
    %c0_i32_22 = arith.constant 0 : i32
    %39 = arith.addi %c0_i32_22, %c0_i32_14 : i32
    %40 = arith.index_cast %39 : i32 to index
    %c0_23 = arith.constant 0 : index
    %c0_24 = arith.constant 0 : index
    %41 = vector.load %arg10[%40, %c0_23, %c0_24] : memref<8x8x128xf32, #tpu.memory_space<vmem>>, vector<1x8x128xf32>
    %42 = vector.shape_cast %41 : vector<1x8x128xf32> to vector<8x128xf32>
    %43 = vector.shape_cast %38 : vector<8x128xf32> to vector<1x8x128xf32>
    tpu.vector_store %arg10[%40, %c0_23, %c0_24], %43 {strides = array<i32>} : memref<8x8x128xf32, #tpu.memory_space<vmem>>, vector<1x8x128xf32>,
    %c1_i32 = arith.constant 1 : i32
    %44 = arith.index_cast %c1_i32 : i32 to index
    %c0_25 = arith.constant 0 : index
    %c0_26 = arith.constant 0 : index
    %45 = vector.load %arg11[%44, %c0_25, %c0_26] : memref<8x8x512xf32, #tpu.memory_space<vmem>>, vector<1x8x512xf32>
    %46 = vector.shape_cast %45 : vector<1x8x512xf32> to vector<8x512xf32>
    %c0_27 = arith.constant 0 : index
    %c0_28 = arith.constant 0 : index
    %c0_29 = arith.constant 0 : index
    %47 = vector.load %arg3[%c0_27, %c0_28, %c0_29] : memref<1x128x512xf32, #tpu.memory_space<vmem>>, vector<1x128x512xf32>
    %48 = vector.shape_cast %47 : vector<1x128x512xf32> to vector<128x512xf32>
    %cst_30 = arith.constant dense<0.000000e+00> : vector<8x512xf32>
    %49 = tpu.matmul %38, %48, %cst_30 {dimension_numbers = #tpu.dot_dimension_numbers<[1], [0], [0], [1], [0, 0, 1, 1], [], []>} : vector<8x128xf32>, vector<128x512xf32>, vector<8x512xf32> -> vector<8x512xf32>
    %50 = arith.addf %46, %49 : vector<8x512xf32>
    %51 = vector.extract_strided_slice %50 {offsets = [0, 0], sizes = [8, 384], strides = [1, 1]} : vector<8x512xf32> to vector<8x384xf32>
    %52 = arith.negf %51 : vector<8x384xf32>
    %53 = math.exp %52 : vector<8x384xf32>
    %cst_31 = arith.constant 1.000000e+00 : f32
    %54 = vector.broadcast %cst_31 : f32 to vector<8x384xf32>
    %55 = arith.addf %54, %53 : vector<8x384xf32>
    %56 = arith.divf %54, %55 : vector<8x384xf32>
    %57 = vector.extract_strided_slice %50 {offsets = [0, 384], sizes = [8, 128], strides = [1, 1]} : vector<8x512xf32> to vector<8x128xf32>
    %58 = math.tanh %57 : vector<8x128xf32>
    %59 = vector.extract_strided_slice %56 {offsets = [0, 0], sizes = [8, 128], strides = [1, 1]} : vector<8x384xf32> to vector<8x128xf32>
    %60 = vector.extract_strided_slice %56 {offsets = [0, 128], sizes = [8, 128], strides = [1, 1]} : vector<8x384xf32> to vector<8x128xf32>
    %61 = vector.extract_strided_slice %56 {offsets = [0, 256], sizes = [8, 128], strides = [1, 1]} : vector<8x384xf32> to vector<8x128xf32>
    %62 = arith.mulf %60, %36 : vector<8x128xf32>
    %63 = arith.mulf %59, %58 : vector<8x128xf32>
    %64 = arith.addf %62, %63 : vector<8x128xf32>
    %65 = math.tanh %64 : vector<8x128xf32>
    %66 = arith.mulf %61, %65 : vector<8x128xf32>
    %c0_i32_32 = arith.constant 0 : i32
    %67 = arith.addi %c0_i32_32, %c1_i32 : i32
    %68 = arith.index_cast %67 : i32 to index
    %c0_33 = arith.constant 0 : index
    %c0_34 = arith.constant 0 : index
    %69 = vector.load %arg10[%68, %c0_33, %c0_34] : memref<8x8x128xf32, #tpu.memory_space<vmem>>, vector<1x8x128xf32>
    %70 = vector.shape_cast %69 : vector<1x8x128xf32> to vector<8x128xf32>
    %71 = vector.shape_cast %66 : vector<8x128xf32> to vector<1x8x128xf32>
    tpu.vector_store %arg10[%68, %c0_33, %c0_34], %71 {strides = array<i32>} : memref<8x8x128xf32, #tpu.memory_space<vmem>>, vector<1x8x128xf32>,
    %c2_i32 = arith.constant 2 : i32
    %72 = arith.index_cast %c2_i32 : i32 to index
    %c0_35 = arith.constant 0 : index
    %c0_36 = arith.constant 0 : index
    %73 = vector.load %arg11[%72, %c0_35, %c0_36] : memref<8x8x512xf32, #tpu.memory_space<vmem>>, vector<1x8x512xf32>
    %74 = vector.shape_cast %73 : vector<1x8x512xf32> to vector<8x512xf32>
    %c0_37 = arith.constant 0 : index
    %c0_38 = arith.constant 0 : index
    %c0_39 = arith.constant 0 : index
    %75 = vector.load %arg3[%c0_37, %c0_38, %c0_39] : memref<1x128x512xf32, #tpu.memory_space<vmem>>, vector<1x128x512xf32>
    %76 = vector.shape_cast %75 : vector<1x128x512xf32> to vector<128x512xf32>
    %cst_40 = arith.constant dense<0.000000e+00> : vector<8x512xf32>
    %77 = tpu.matmul %66, %76, %cst_40 {dimension_numbers = #tpu.dot_dimension_numbers<[1], [0], [0], [1], [0, 0, 1, 1], [], []>} : vector<8x128xf32>, vector<128x512xf32>, vector<8x512xf32> -> vector<8x512xf32>
    %78 = arith.addf %74, %77 : vector<8x512xf32>
    %79 = vector.extract_strided_slice %78 {offsets = [0, 0], sizes = [8, 384], strides = [1, 1]} : vector<8x512xf32> to vector<8x384xf32>
    %80 = arith.negf %79 : vector<8x384xf32>
    %81 = math.exp %80 : vector<8x384xf32>
    %cst_41 = arith.constant 1.000000e+00 : f32
    %82 = vector.broadcast %cst_41 : f32 to vector<8x384xf32>
    %83 = arith.addf %82, %81 : vector<8x384xf32>
    %84 = arith.divf %82, %83 : vector<8x384xf32>
    %85 = vector.extract_strided_slice %78 {offsets = [0, 384], sizes = [8, 128], strides = [1, 1]} : vector<8x512xf32> to vector<8x128xf32>
    %86 = math.tanh %85 : vector<8x128xf32>
    %87 = vector.extract_strided_slice %84 {offsets = [0, 0], sizes = [8, 128], strides = [1, 1]} : vector<8x384xf32> to vector<8x128xf32>
    %88 = vector.extract_strided_slice %84 {offsets = [0, 128], sizes = [8, 128], strides = [1, 1]} : vector<8x384xf32> to vector<8x128xf32>
    %89 = vector.extract_strided_slice %84 {offsets = [0, 256], sizes = [8, 128], strides = [1, 1]} : vector<8x384xf32> to vector<8x128xf32>
    %90 = arith.mulf %88, %64 : vector<8x128xf32>
    %91 = arith.mulf %87, %86 : vector<8x128xf32>
    %92 = arith.addf %90, %91 : vector<8x128xf32>
    %93 = math.tanh %92 : vector<8x128xf32>
    %94 = arith.mulf %89, %93 : vector<8x128xf32>
    %c0_i32_42 = arith.constant 0 : i32
    %95 = arith.addi %c0_i32_42, %c2_i32 : i32
    %96 = arith.index_cast %95 : i32 to index
    %c0_43 = arith.constant 0 : index
    %c0_44 = arith.constant 0 : index
    %97 = vector.load %arg10[%96, %c0_43, %c0_44] : memref<8x8x128xf32, #tpu.memory_space<vmem>>, vector<1x8x128xf32>
    %98 = vector.shape_cast %97 : vector<1x8x128xf32> to vector<8x128xf32>
    %99 = vector.shape_cast %94 : vector<8x128xf32> to vector<1x8x128xf32>
    tpu.vector_store %arg10[%96, %c0_43, %c0_44], %99 {strides = array<i32>} : memref<8x8x128xf32, #tpu.memory_space<vmem>>, vector<1x8x128xf32>,
    %c3_i32 = arith.constant 3 : i32
    %100 = arith.index_cast %c3_i32 : i32 to index
    %c0_45 = arith.constant 0 : index
    %c0_46 = arith.constant 0 : index
    %101 = vector.load %arg11[%100, %c0_45, %c0_46] : memref<8x8x512xf32, #tpu.memory_space<vmem>>, vector<1x8x512xf32>
    %102 = vector.shape_cast %101 : vector<1x8x512xf32> to vector<8x512xf32>
    %c0_47 = arith.constant 0 : index
    %c0_48 = arith.constant 0 : index
    %c0_49 = arith.constant 0 : index
    %103 = vector.load %arg3[%c0_47, %c0_48, %c0_49] : memref<1x128x512xf32, #tpu.memory_space<vmem>>, vector<1x128x512xf32>
    %104 = vector.shape_cast %103 : vector<1x128x512xf32> to vector<128x512xf32>
    %cst_50 = arith.constant dense<0.000000e+00> : vector<8x512xf32>
    %105 = tpu.matmul %94, %104, %cst_50 {dimension_numbers = #tpu.dot_dimension_numbers<[1], [0], [0], [1], [0, 0, 1, 1], [], []>} : vector<8x128xf32>, vector<128x512xf32>, vector<8x512xf32> -> vector<8x512xf32>
    %106 = arith.addf %102, %105 : vector<8x512xf32>
    %107 = vector.extract_strided_slice %106 {offsets = [0, 0], sizes = [8, 384], strides = [1, 1]} : vector<8x512xf32> to vector<8x384xf32>
    %108 = arith.negf %107 : vector<8x384xf32>
    %109 = math.exp %108 : vector<8x384xf32>
    %cst_51 = arith.constant 1.000000e+00 : f32
    %110 = vector.broadcast %cst_51 : f32 to vector<8x384xf32>
    %111 = arith.addf %110, %109 : vector<8x384xf32>
    %112 = arith.divf %110, %111 : vector<8x384xf32>
    %113 = vector.extract_strided_slice %106 {offsets = [0, 384], sizes = [8, 128], strides = [1, 1]} : vector<8x512xf32> to vector<8x128xf32>
    %114 = math.tanh %113 : vector<8x128xf32>
    %115 = vector.extract_strided_slice %112 {offsets = [0, 0], sizes = [8, 128], strides = [1, 1]} : vector<8x384xf32> to vector<8x128xf32>
    %116 = vector.extract_strided_slice %112 {offsets = [0, 128], sizes = [8, 128], strides = [1, 1]} : vector<8x384xf32> to vector<8x128xf32>
    %117 = vector.extract_strided_slice %112 {offsets = [0, 256], sizes = [8, 128], strides = [1, 1]} : vector<8x384xf32> to vector<8x128xf32>
    %118 = arith.mulf %116, %92 : vector<8x128xf32>
    %119 = arith.mulf %115, %114 : vector<8x128xf32>
    %120 = arith.addf %118, %119 : vector<8x128xf32>
    %121 = math.tanh %120 : vector<8x128xf32>
    %122 = arith.mulf %117, %121 : vector<8x128xf32>
    %c0_i32_52 = arith.constant 0 : i32
    %123 = arith.addi %c0_i32_52, %c3_i32 : i32
    %124 = arith.index_cast %123 : i32 to index
    %c0_53 = arith.constant 0 : index
    %c0_54 = arith.constant 0 : index
    %125 = vector.load %arg10[%124, %c0_53, %c0_54] : memref<8x8x128xf32, #tpu.memory_space<vmem>>, vector<1x8x128xf32>
    %126 = vector.shape_cast %125 : vector<1x8x128xf32> to vector<8x128xf32>
    %127 = vector.shape_cast %122 : vector<8x128xf32> to vector<1x8x128xf32>
    tpu.vector_store %arg10[%124, %c0_53, %c0_54], %127 {strides = array<i32>} : memref<8x8x128xf32, #tpu.memory_space<vmem>>, vector<1x8x128xf32>,
    %c4_i32 = arith.constant 4 : i32
    %128 = arith.index_cast %c4_i32 : i32 to index
    %c0_55 = arith.constant 0 : index
    %c0_56 = arith.constant 0 : index
    %129 = vector.load %arg11[%128, %c0_55, %c0_56] : memref<8x8x512xf32, #tpu.memory_space<vmem>>, vector<1x8x512xf32>
    %130 = vector.shape_cast %129 : vector<1x8x512xf32> to vector<8x512xf32>
    %c0_57 = arith.constant 0 : index
    %c0_58 = arith.constant 0 : index
    %c0_59 = arith.constant 0 : index
    %131 = vector.load %arg3[%c0_57, %c0_58, %c0_59] : memref<1x128x512xf32, #tpu.memory_space<vmem>>, vector<1x128x512xf32>
    %132 = vector.shape_cast %131 : vector<1x128x512xf32> to vector<128x512xf32>
    %cst_60 = arith.constant dense<0.000000e+00> : vector<8x512xf32>
    %133 = tpu.matmul %122, %132, %cst_60 {dimension_numbers = #tpu.dot_dimension_numbers<[1], [0], [0], [1], [0, 0, 1, 1], [], []>} : vector<8x128xf32>, vector<128x512xf32>, vector<8x512xf32> -> vector<8x512xf32>
    %134 = arith.addf %130, %133 : vector<8x512xf32>
    %135 = vector.extract_strided_slice %134 {offsets = [0, 0], sizes = [8, 384], strides = [1, 1]} : vector<8x512xf32> to vector<8x384xf32>
    %136 = arith.negf %135 : vector<8x384xf32>
    %137 = math.exp %136 : vector<8x384xf32>
    %cst_61 = arith.constant 1.000000e+00 : f32
    %138 = vector.broadcast %cst_61 : f32 to vector<8x384xf32>
    %139 = arith.addf %138, %137 : vector<8x384xf32>
    %140 = arith.divf %138, %139 : vector<8x384xf32>
    %141 = vector.extract_strided_slice %134 {offsets = [0, 384], sizes = [8, 128], strides = [1, 1]} : vector<8x512xf32> to vector<8x128xf32>
    %142 = math.tanh %141 : vector<8x128xf32>
    %143 = vector.extract_strided_slice %140 {offsets = [0, 0], sizes = [8, 128], strides = [1, 1]} : vector<8x384xf32> to vector<8x128xf32>
    %144 = vector.extract_strided_slice %140 {offsets = [0, 128], sizes = [8, 128], strides = [1, 1]} : vector<8x384xf32> to vector<8x128xf32>
    %145 = vector.extract_strided_slice %140 {offsets = [0, 256], sizes = [8, 128], strides = [1, 1]} : vector<8x384xf32> to vector<8x128xf32>
    %146 = arith.mulf %144, %120 : vector<8x128xf32>
    %147 = arith.mulf %143, %142 : vector<8x128xf32>
    %148 = arith.addf %146, %147 : vector<8x128xf32>
    %149 = math.tanh %148 : vector<8x128xf32>
    %150 = arith.mulf %145, %149 : vector<8x128xf32>
    %c0_i32_62 = arith.constant 0 : i32
    %151 = arith.addi %c0_i32_62, %c4_i32 : i32
    %152 = arith.index_cast %151 : i32 to index
    %c0_63 = arith.constant 0 : index
    %c0_64 = arith.constant 0 : index
    %153 = vector.load %arg10[%152, %c0_63, %c0_64] : memref<8x8x128xf32, #tpu.memory_space<vmem>>, vector<1x8x128xf32>
    %154 = vector.shape_cast %153 : vector<1x8x128xf32> to vector<8x128xf32>
    %155 = vector.shape_cast %150 : vector<8x128xf32> to vector<1x8x128xf32>
    tpu.vector_store %arg10[%152, %c0_63, %c0_64], %155 {strides = array<i32>} : memref<8x8x128xf32, #tpu.memory_space<vmem>>, vector<1x8x128xf32>,
    %c5_i32 = arith.constant 5 : i32
    %156 = arith.index_cast %c5_i32 : i32 to index
    %c0_65 = arith.constant 0 : index
    %c0_66 = arith.constant 0 : index
    %157 = vector.load %arg11[%156, %c0_65, %c0_66] : memref<8x8x512xf32, #tpu.memory_space<vmem>>, vector<1x8x512xf32>
    %158 = vector.shape_cast %157 : vector<1x8x512xf32> to vector<8x512xf32>
    %c0_67 = arith.constant 0 : index
    %c0_68 = arith.constant 0 : index
    %c0_69 = arith.constant 0 : index
    %159 = vector.load %arg3[%c0_67, %c0_68, %c0_69] : memref<1x128x512xf32, #tpu.memory_space<vmem>>, vector<1x128x512xf32>
    %160 = vector.shape_cast %159 : vector<1x128x512xf32> to vector<128x512xf32>
    %cst_70 = arith.constant dense<0.000000e+00> : vector<8x512xf32>
    %161 = tpu.matmul %150, %160, %cst_70 {dimension_numbers = #tpu.dot_dimension_numbers<[1], [0], [0], [1], [0, 0, 1, 1], [], []>} : vector<8x128xf32>, vector<128x512xf32>, vector<8x512xf32> -> vector<8x512xf32>
    %162 = arith.addf %158, %161 : vector<8x512xf32>
    %163 = vector.extract_strided_slice %162 {offsets = [0, 0], sizes = [8, 384], strides = [1, 1]} : vector<8x512xf32> to vector<8x384xf32>
    %164 = arith.negf %163 : vector<8x384xf32>
    %165 = math.exp %164 : vector<8x384xf32>
    %cst_71 = arith.constant 1.000000e+00 : f32
    %166 = vector.broadcast %cst_71 : f32 to vector<8x384xf32>
    %167 = arith.addf %166, %165 : vector<8x384xf32>
    %168 = arith.divf %166, %167 : vector<8x384xf32>
    %169 = vector.extract_strided_slice %162 {offsets = [0, 384], sizes = [8, 128], strides = [1, 1]} : vector<8x512xf32> to vector<8x128xf32>
    %170 = math.tanh %169 : vector<8x128xf32>
    %171 = vector.extract_strided_slice %168 {offsets = [0, 0], sizes = [8, 128], strides = [1, 1]} : vector<8x384xf32> to vector<8x128xf32>
    %172 = vector.extract_strided_slice %168 {offsets = [0, 128], sizes = [8, 128], strides = [1, 1]} : vector<8x384xf32> to vector<8x128xf32>
    %173 = vector.extract_strided_slice %168 {offsets = [0, 256], sizes = [8, 128], strides = [1, 1]} : vector<8x384xf32> to vector<8x128xf32>
    %174 = arith.mulf %172, %148 : vector<8x128xf32>
    %175 = arith.mulf %171, %170 : vector<8x128xf32>
    %176 = arith.addf %174, %175 : vector<8x128xf32>
    %177 = math.tanh %176 : vector<8x128xf32>
    %178 = arith.mulf %173, %177 : vector<8x128xf32>
    %c0_i32_72 = arith.constant 0 : i32
    %179 = arith.addi %c0_i32_72, %c5_i32 : i32
    %180 = arith.index_cast %179 : i32 to index
    %c0_73 = arith.constant 0 : index
    %c0_74 = arith.constant 0 : index
    %181 = vector.load %arg10[%180, %c0_73, %c0_74] : memref<8x8x128xf32, #tpu.memory_space<vmem>>, vector<1x8x128xf32>
    %182 = vector.shape_cast %181 : vector<1x8x128xf32> to vector<8x128xf32>
    %183 = vector.shape_cast %178 : vector<8x128xf32> to vector<1x8x128xf32>
    tpu.vector_store %arg10[%180, %c0_73, %c0_74], %183 {strides = array<i32>} : memref<8x8x128xf32, #tpu.memory_space<vmem>>, vector<1x8x128xf32>,
    %c6_i32 = arith.constant 6 : i32
    %184 = arith.index_cast %c6_i32 : i32 to index
    %c0_75 = arith.constant 0 : index
    %c0_76 = arith.constant 0 : index
    %185 = vector.load %arg11[%184, %c0_75, %c0_76] : memref<8x8x512xf32, #tpu.memory_space<vmem>>, vector<1x8x512xf32>
    %186 = vector.shape_cast %185 : vector<1x8x512xf32> to vector<8x512xf32>
    %c0_77 = arith.constant 0 : index
    %c0_78 = arith.constant 0 : index
    %c0_79 = arith.constant 0 : index
    %187 = vector.load %arg3[%c0_77, %c0_78, %c0_79] : memref<1x128x512xf32, #tpu.memory_space<vmem>>, vector<1x128x512xf32>
    %188 = vector.shape_cast %187 : vector<1x128x512xf32> to vector<128x512xf32>
    %cst_80 = arith.constant dense<0.000000e+00> : vector<8x512xf32>
    %189 = tpu.matmul %178, %188, %cst_80 {dimension_numbers = #tpu.dot_dimension_numbers<[1], [0], [0], [1], [0, 0, 1, 1], [], []>} : vector<8x128xf32>, vector<128x512xf32>, vector<8x512xf32> -> vector<8x512xf32>
    %190 = arith.addf %186, %189 : vector<8x512xf32>
    %191 = vector.extract_strided_slice %190 {offsets = [0, 0], sizes = [8, 384], strides = [1, 1]} : vector<8x512xf32> to vector<8x384xf32>
    %192 = arith.negf %191 : vector<8x384xf32>
    %193 = math.exp %192 : vector<8x384xf32>
    %cst_81 = arith.constant 1.000000e+00 : f32
    %194 = vector.broadcast %cst_81 : f32 to vector<8x384xf32>
    %195 = arith.addf %194, %193 : vector<8x384xf32>
    %196 = arith.divf %194, %195 : vector<8x384xf32>
    %197 = vector.extract_strided_slice %190 {offsets = [0, 384], sizes = [8, 128], strides = [1, 1]} : vector<8x512xf32> to vector<8x128xf32>
    %198 = math.tanh %197 : vector<8x128xf32>
    %199 = vector.extract_strided_slice %196 {offsets = [0, 0], sizes = [8, 128], strides = [1, 1]} : vector<8x384xf32> to vector<8x128xf32>
    %200 = vector.extract_strided_slice %196 {offsets = [0, 128], sizes = [8, 128], strides = [1, 1]} : vector<8x384xf32> to vector<8x128xf32>
    %201 = vector.extract_strided_slice %196 {offsets = [0, 256], sizes = [8, 128], strides = [1, 1]} : vector<8x384xf32> to vector<8x128xf32>
    %202 = arith.mulf %200, %176 : vector<8x128xf32>
    %203 = arith.mulf %199, %198 : vector<8x128xf32>
    %204 = arith.addf %202, %203 : vector<8x128xf32>
    %205 = math.tanh %204 : vector<8x128xf32>
    %206 = arith.mulf %201, %205 : vector<8x128xf32>
    %c0_i32_82 = arith.constant 0 : i32
    %207 = arith.addi %c0_i32_82, %c6_i32 : i32
    %208 = arith.index_cast %207 : i32 to index
    %c0_83 = arith.constant 0 : index
    %c0_84 = arith.constant 0 : index
    %209 = vector.load %arg10[%208, %c0_83, %c0_84] : memref<8x8x128xf32, #tpu.memory_space<vmem>>, vector<1x8x128xf32>
    %210 = vector.shape_cast %209 : vector<1x8x128xf32> to vector<8x128xf32>
    %211 = vector.shape_cast %206 : vector<8x128xf32> to vector<1x8x128xf32>
    tpu.vector_store %arg10[%208, %c0_83, %c0_84], %211 {strides = array<i32>} : memref<8x8x128xf32, #tpu.memory_space<vmem>>, vector<1x8x128xf32>,
    %c7_i32 = arith.constant 7 : i32
    %212 = arith.index_cast %c7_i32 : i32 to index
    %c0_85 = arith.constant 0 : index
    %c0_86 = arith.constant 0 : index
    %213 = vector.load %arg11[%212, %c0_85, %c0_86] : memref<8x8x512xf32, #tpu.memory_space<vmem>>, vector<1x8x512xf32>
    %214 = vector.shape_cast %213 : vector<1x8x512xf32> to vector<8x512xf32>
    %c0_87 = arith.constant 0 : index
    %c0_88 = arith.constant 0 : index
    %c0_89 = arith.constant 0 : index
    %215 = vector.load %arg3[%c0_87, %c0_88, %c0_89] : memref<1x128x512xf32, #tpu.memory_space<vmem>>, vector<1x128x512xf32>
    %216 = vector.shape_cast %215 : vector<1x128x512xf32> to vector<128x512xf32>
    %cst_90 = arith.constant dense<0.000000e+00> : vector<8x512xf32>
    %217 = tpu.matmul %206, %216, %cst_90 {dimension_numbers = #tpu.dot_dimension_numbers<[1], [0], [0], [1], [0, 0, 1, 1], [], []>} : vector<8x128xf32>, vector<128x512xf32>, vector<8x512xf32> -> vector<8x512xf32>
    %218 = arith.addf %214, %217 : vector<8x512xf32>
    %219 = vector.extract_strided_slice %218 {offsets = [0, 0], sizes = [8, 384], strides = [1, 1]} : vector<8x512xf32> to vector<8x384xf32>
    %220 = arith.negf %219 : vector<8x384xf32>
    %221 = math.exp %220 : vector<8x384xf32>
    %cst_91 = arith.constant 1.000000e+00 : f32
    %222 = vector.broadcast %cst_91 : f32 to vector<8x384xf32>
    %223 = arith.addf %222, %221 : vector<8x384xf32>
    %224 = arith.divf %222, %223 : vector<8x384xf32>
    %225 = vector.extract_strided_slice %218 {offsets = [0, 384], sizes = [8, 128], strides = [1, 1]} : vector<8x512xf32> to vector<8x128xf32>
    %226 = math.tanh %225 : vector<8x128xf32>
    %227 = vector.extract_strided_slice %224 {offsets = [0, 0], sizes = [8, 128], strides = [1, 1]} : vector<8x384xf32> to vector<8x128xf32>
    %228 = vector.extract_strided_slice %224 {offsets = [0, 128], sizes = [8, 128], strides = [1, 1]} : vector<8x384xf32> to vector<8x128xf32>
    %229 = vector.extract_strided_slice %224 {offsets = [0, 256], sizes = [8, 128], strides = [1, 1]} : vector<8x384xf32> to vector<8x128xf32>
    %230 = arith.mulf %228, %204 : vector<8x128xf32>
    %231 = arith.mulf %227, %226 : vector<8x128xf32>
    %232 = arith.addf %230, %231 : vector<8x128xf32>
    %233 = math.tanh %232 : vector<8x128xf32>
    %234 = arith.mulf %229, %233 : vector<8x128xf32>
    %c0_i32_92 = arith.constant 0 : i32
    %235 = arith.addi %c0_i32_92, %c7_i32 : i32
    %236 = arith.index_cast %235 : i32 to index
    %c0_93 = arith.constant 0 : index
    %c0_94 = arith.constant 0 : index
    %237 = vector.load %arg10[%236, %c0_93, %c0_94] : memref<8x8x128xf32, #tpu.memory_space<vmem>>, vector<1x8x128xf32>
    %238 = vector.shape_cast %237 : vector<1x8x128xf32> to vector<8x128xf32>
    %239 = vector.shape_cast %234 : vector<8x128xf32> to vector<1x8x128xf32>
    tpu.vector_store %arg10[%236, %c0_93, %c0_94], %239 {strides = array<i32>} : memref<8x8x128xf32, #tpu.memory_space<vmem>>, vector<1x8x128xf32>,
    %c8_i32 = arith.constant 8 : i32
    %c1_i32_95 = arith.constant 1 : i32
    %240 = arith.cmpi eq, %arg0, %c1_i32_95 : i32
    %241 = arith.extui %240 : i1 to i32
    %c0_i32_96 = arith.constant 0 : i32
    %242 = arith.cmpi ne, %241, %c0_i32_96 : i32
    scf.if %242 {
      %c0_97 = arith.constant 0 : index
      %c0_98 = arith.constant 0 : index
      %c0_99 = arith.constant 0 : index
      %243 = vector.load %arg10[%c0_97, %c0_98, %c0_99] : memref<8x8x128xf32, #tpu.memory_space<vmem>>, vector<8x8x128xf32>
      %244 = vector.shape_cast %243 : vector<8x8x128xf32> to vector<64x128xf32>
      %c0_100 = arith.constant 0 : index
      %c0_101 = arith.constant 0 : index
      %245 = vector.load %arg5[%c0_100, %c0_101] : memref<128x128xf32, #tpu.memory_space<vmem>>, vector<128x128xf32>
      %cst_102 = arith.constant dense<0.000000e+00> : vector<64x128xf32>
      %246 = tpu.matmul %244, %245, %cst_102 {dimension_numbers = #tpu.dot_dimension_numbers<[1], [0], [0], [1], [0, 0, 1, 1], [], []>} : vector<64x128xf32>, vector<128x128xf32>, vector<64x128xf32> -> vector<64x128xf32>
      %c0_103 = arith.constant 0 : index
      %c0_104 = arith.constant 0 : index
      %247 = vector.load %arg6[%c0_103, %c0_104] : memref<1x128xf32, #tpu.memory_space<vmem>>, vector<1x128xf32>
      %248 = vector.broadcast %247 : vector<1x128xf32> to vector<64x128xf32>
      %249 = arith.addf %246, %248 : vector<64x128xf32>
      %250 = math.tanh %249 : vector<64x128xf32>
      %c0_105 = arith.constant 0 : index
      %c0_106 = arith.constant 0 : index
      %251 = vector.load %arg7[%c0_105, %c0_106] : memref<128x128xf32, #tpu.memory_space<vmem>>, vector<128x128xf32>
      %cst_107 = arith.constant dense<0.000000e+00> : vector<64x128xf32>
      %252 = tpu.matmul %250, %251, %cst_107 {dimension_numbers = #tpu.dot_dimension_numbers<[1], [0], [0], [1], [0, 0, 1, 1], [], []>} : vector<64x128xf32>, vector<128x128xf32>, vector<64x128xf32> -> vector<64x128xf32>
      %c0_108 = arith.constant 0 : index
      %c0_109 = arith.constant 0 : index
      %253 = vector.load %arg8[%c0_108, %c0_109] : memref<1x128xf32, #tpu.memory_space<vmem>>, vector<1x128xf32>
      %254 = vector.broadcast %253 : vector<1x128xf32> to vector<64x128xf32>
      %255 = arith.addf %252, %254 : vector<64x128xf32>
      %256 = vector.shape_cast %255 : vector<64x128xf32> to vector<8x8x128xf32>
      %c0_110 = arith.constant 0 : index
      %c0_111 = arith.constant 0 : index
      %c0_112 = arith.constant 0 : index
      %257 = vector.load %arg9[%c0_110, %c0_111, %c0_112] : memref<8x8x128xf32, #tpu.memory_space<vmem>>, vector<8x8x128xf32>
      tpu.vector_store %arg9[%c0_110, %c0_111, %c0_112], %256 {strides = array<i32>} : memref<8x8x128xf32, #tpu.memory_space<vmem>>, vector<8x8x128xf32>,
    } else {
    }
    return
  }
  func.func @transform_0(%arg0: i32) -> (i32, i32, i32) {
    %c0_i32 = arith.constant 0 : i32
    %c0_i32_0 = arith.constant 0 : i32
    %c0_i32_1 = arith.constant 0 : i32
    %c0_i32_2 = arith.constant 0 : i32
    return %c0_i32, %c0_i32_0, %c0_i32_1 : i32, i32, i32
  }
  func.func @transform_1(%arg0: i32) -> (i32, i32, i32) {
    %c0_i32 = arith.constant 0 : i32
    %c0_i32_0 = arith.constant 0 : i32
    %c0_i32_1 = arith.constant 0 : i32
    return %arg0, %c0_i32, %c0_i32_0 : i32, i32, i32
  }
  func.func @transform_2(%arg0: i32) -> (i32, i32, i32) {
    %c0_i32 = arith.constant 0 : i32
    %c0_i32_0 = arith.constant 0 : i32
    %c0_i32_1 = arith.constant 0 : i32
    return %arg0, %c0_i32, %c0_i32_0 : i32, i32, i32
  }
  func.func @transform_3(%arg0: i32) -> (i32, i32, i32) {
    %c0_i32 = arith.constant 0 : i32
    %c0_i32_0 = arith.constant 0 : i32
    %c0_i32_1 = arith.constant 0 : i32
    return %arg0, %c0_i32, %c0_i32_0 : i32, i32, i32
  }
  func.func @transform_4(%arg0: i32) -> (i32, i32) {
    %c0_i32 = arith.constant 0 : i32
    %c0_i32_0 = arith.constant 0 : i32
    %c0_i32_1 = arith.constant 0 : i32
    return %c0_i32, %c0_i32_0 : i32, i32
  }
  func.func @transform_5(%arg0: i32) -> (i32, i32) {
    %c0_i32 = arith.constant 0 : i32
    %c0_i32_0 = arith.constant 0 : i32
    %c0_i32_1 = arith.constant 0 : i32
    return %c0_i32, %c0_i32_0 : i32, i32
  }
  func.func @transform_6(%arg0: i32) -> (i32, i32) {
    %c0_i32 = arith.constant 0 : i32
    %c0_i32_0 = arith.constant 0 : i32
    %c0_i32_1 = arith.constant 0 : i32
    return %c0_i32, %c0_i32_0 : i32, i32
  }
  func.func @transform_7(%arg0: i32) -> (i32, i32) {
    %c0_i32 = arith.constant 0 : i32
    %c0_i32_0 = arith.constant 0 : i32
    %c0_i32_1 = arith.constant 0 : i32
    return %c0_i32, %c0_i32_0 : i32, i32
  }
  func.func @transform_8(%arg0: i32) -> (i32, i32, i32) {
    %c0_i32 = arith.constant 0 : i32
    %c0_i32_0 = arith.constant 0 : i32
    %c0_i32_1 = arith.constant 0 : i32
    %c0_i32_2 = arith.constant 0 : i32
    return %c0_i32, %c0_i32_0, %c0_i32_1 : i32, i32, i32
  }
}

</mosaic_0001>

<llo_original>
// kernel: reg_lstm_forward.1
$region0: #{reg_lstm_forward.1}
  #allocation0 [shape = 'u32[]', space=smem, size = 0x4, offset = 0x4, fixed_abs, tag = 'smem constant byte address 0x4 - core index']
  #allocation1 [shape = 'u32[144,128]{1,0:T(1,128)}', space=vmem, size = 0x12000, scoped, tag = 'internal scratch']
  #allocation2 [shape = 'f32[8,8,128]{2,1,0:T(8,128)}', space=vmem, size = 0x8000, scoped, tag = 'scratch operand']
  #allocation3 [shape = 'f32[8,8,512]{2,1,0:T(8,128)}', space=vmem, size = 0x20000, scoped, tag = 'scratch operand']
  %s0 = inlined_call_operand.vmem [shape: f32[8,8,128], index: 0, kind: input, shape index: {}]
  %s1 = inlined_call_operand.hbm [shape: f32[2,128,512], index: 1, kind: input, shape index: {}]
  %s2 = inlined_call_operand.hbm [shape: f32[2,128,512], index: 2, kind: input, shape index: {}]
  %s3 = inlined_call_operand.vmem [shape: f32[2,1,512], index: 3, kind: input, shape index: {}]
  %s4 = inlined_call_operand.hbm [shape: f32[128,128], index: 4, kind: input, shape index: {}]
  %s5 = inlined_call_operand.vmem [shape: f32[1,128], index: 5, kind: input, shape index: {}]
  %s6 = inlined_call_operand.hbm [shape: f32[128,128], index: 6, kind: input, shape index: {}]
  %s7 = inlined_call_operand.vmem [shape: f32[1,128], index: 7, kind: input, shape index: {}]
  %s8 = inlined_call_operand.vmem [shape: f32[8,8,128], index: 8, kind: output, shape index: {}]
  %s9 = sld [smem:[#allocation0]]
  $region89: #{reg_lstm_forward.1} parent=0
    _
  %s11 = ssub.s32 1, %s9
  %s12 = scalar_select 0, %s11, %s9
  $region1: #{reg_lstm_forward.1} parent=0
    #allocation4 [shape = 'u8[524288]{0}', space=vmem, size = 0x80000, scoped, tag = 'input window, operand 1']
    #allocation5 [shape = 's32[2]{0}', space=sflag, size = 0x8, scoped, tag = 'scoped memory for reg_lstm_forward.1']
    #allocation6 [shape = 'u8[524288]{0}', space=vmem, size = 0x80000, scoped, tag = 'input window, operand 2']
    #allocation7 [shape = 's32[2]{0}', space=sflag, size = 0x8, scoped, tag = 'scoped memory for reg_lstm_forward.1']
    #allocation8 [shape = 'u8[65536]{0}', space=vmem, size = 0x10000, scoped, tag = 'input window, operand 4, single buffered']
    #allocation9 [shape = 'u8[65536]{0}', space=vmem, size = 0x10000, scoped, tag = 'input window, operand 6, single buffered']
    #allocation10 [shape = 's32[1]{0}', space=sflag, size = 0x4, scoped, tag = 'scoped memory for reg_lstm_forward.1']
    %13 = vsyncpa [#allocation5], 0
    %s14 = scalar_lea.sflag [#allocation5], 1
    %15 = vsyncpa %s14, 0
    %16 = vsyncpa [#allocation7], 0
    %s17 = scalar_lea.sflag [#allocation7], 1
    %18 = vsyncpa %s17, 0
    %19 = vsyncpa [#allocation10], 0
    loop: start=0, step=1, limit=4
    $region2: #{reg_lstm_forward.1} parent=1 // loop_pre_header
      _
    $region3: #{reg_lstm_forward.1} parent=1 // loop_header
      %s21 = sphi 0, %s25
      %p22 = scmp.ge.s32.totalorder %s21, 4
      %s29 = sphi 0, %s29
      %s31 = sphi 0, %s29
      %s32 = sphi 0, %s31
      %s46 = sphi 0, %s32
      %s52 = sphi 0, %s54
      %s55 = sphi 0, %s52
      %s56 = sphi 0, %s55
      %s72 = sphi 0, %s56
      %s78 = sphi 0, %s80
      %s81 = sphi 0, %s78
      %s82 = sphi 0, %s81
      %s98 = sphi 0, %s82
      %s104 = sphi 0, %s106
      %s107 = sphi 0, %s104
      %s108 = sphi 0, %s107
      %s124 = sphi 0, %s108
      %s128 = sphi 0, %s128
      %s130 = sphi 0, %s128
      %s131 = sphi 0, %s130
      %s145 = sphi 0, %s131
      %s149 = sphi 0, %s149
      %s151 = sphi 0, %s149
      %s152 = sphi 0, %s151
      %s166 = sphi 0, %s152
      %s170 = sphi 0, %s170
      %s172 = sphi 0, %s170
      %s173 = sphi 0, %s172
      %s187 = sphi 0, %s173
      %s191 = sphi 0, %s191
      %s193 = sphi 0, %s191
      %s194 = sphi 0, %s193
      %s208 = sphi 0, %s194
      %s212 = sphi 0, %s212
      %s214 = sphi 0, %s212
      %s215 = sphi 0, %s214
      %s229 = sphi 0, %s215
    $region4: #{reg_lstm_forward.1} parent=1 // loop_header_branch
      %24 = sbr.rel (%p22) target = $region8
    $region5: #{reg_lstm_forward.1} parent=1 // loop_body
      %s26 = ssub.s32 %s21, 1
      %s27 = ssub.s32 %s21, 2
      %s28 = sadd.s32 %s21, 1
      %s30 = sadd.s32 %s29, 1
      %p33 = scmp.eq.s32.totalorder %s21, 1
      %p34 = scmp.ne.s32.totalorder %s29, %s31
      %p35 = scmp.eq.s32.totalorder %s21, 0
      %p36 = por %p34, %p35
      %p37 = scmp.ne.s32.totalorder %s29, %s31
      %p38 = scmp.eq.s32.totalorder %s26, 1
      %p39 = por %p37, %p38
      %p40 = scmp.ne.s32.totalorder %s31, %s32
      %p41 = scmp.eq.s32.totalorder %s26, 0
      %p42 = por %p40, %p41
      %p43 = scmp.ne.s32.totalorder %s31, %s32
      %p44 = scmp.eq.s32.totalorder %s27, 1
      %p45 = por %p43, %p44
      %p47 = scmp.ne.s32.totalorder %s32, %s46
      %p48 = scmp.eq.s32.totalorder %s27, 0
      %p49 = por %p47, %p48
      %s50 = ssub.s32 %s21, %s28
      %p51 = scmp.eq.s32.totalorder %s50, 0
      %s53 = sadd.s32 %s52, 1
      %s54 = scalar_select %p51, %s52, %s53
      %p57 = pneg %p51
      %p58 = scmp.eq.s32.totalorder %s21, 1
      %p59 = por %p57, %p58
      %p60 = scmp.ne.s32.totalorder %s52, %s55
      %p61 = scmp.eq.s32.totalorder %s21, 0
      %p62 = por %p60, %p61
      %p63 = scmp.ne.s32.totalorder %s52, %s55
      %p64 = scmp.eq.s32.totalorder %s26, 1
      %p65 = por %p63, %p64
      %p66 = scmp.ne.s32.totalorder %s55, %s56
      %p67 = scmp.eq.s32.totalorder %s26, 0
      %p68 = por %p66, %p67
      %p69 = scmp.ne.s32.totalorder %s55, %s56
      %p70 = scmp.eq.s32.totalorder %s27, 1
      %p71 = por %p69, %p70
      %p73 = scmp.ne.s32.totalorder %s56, %s72
      %p74 = scmp.eq.s32.totalorder %s27, 0
      %p75 = por %p73, %p74
      %s76 = ssub.s32 %s21, %s28
      %p77 = scmp.eq.s32.totalorder %s76, 0
      %s79 = sadd.s32 %s78, 1
      %s80 = scalar_select %p77, %s78, %s79
      %p83 = pneg %p77
      %p84 = scmp.eq.s32.totalorder %s21, 1
      %p85 = por %p83, %p84
      %p86 = scmp.ne.s32.totalorder %s78, %s81
      %p87 = scmp.eq.s32.totalorder %s21, 0
      %p88 = por %p86, %p87
      %p89 = scmp.ne.s32.totalorder %s78, %s81
      %p90 = scmp.eq.s32.totalorder %s26, 1
      %p91 = por %p89, %p90
      %p92 = scmp.ne.s32.totalorder %s81, %s82
      %p93 = scmp.eq.s32.totalorder %s26, 0
      %p94 = por %p92, %p93
      %p95 = scmp.ne.s32.totalorder %s81, %s82
      %p96 = scmp.eq.s32.totalorder %s27, 1
      %p97 = por %p95, %p96
      %p99 = scmp.ne.s32.totalorder %s82, %s98
      %p100 = scmp.eq.s32.totalorder %s27, 0
      %p101 = por %p99, %p100
      %s102 = ssub.s32 %s21, %s28
      %p103 = scmp.eq.s32.totalorder %s102, 0
      %s105 = sadd.s32 %s104, 1
      %s106 = scalar_select %p103, %s104, %s105
      %p109 = pneg %p103
      %p110 = scmp.eq.s32.totalorder %s21, 1
      %p111 = por %p109, %p110
      %p112 = scmp.ne.s32.totalorder %s104, %s107
      %p113 = scmp.eq.s32.totalorder %s21, 0
      %p114 = por %p112, %p113
      %p115 = scmp.ne.s32.totalorder %s104, %s107
      %p116 = scmp.eq.s32.totalorder %s26, 1
      %p117 = por %p115, %p116
      %p118 = scmp.ne.s32.totalorder %s107, %s108
      %p119 = scmp.eq.s32.totalorder %s26, 0
      %p120 = por %p118, %p119
      %p121 = scmp.ne.s32.totalorder %s107, %s108
      %p122 = scmp.eq.s32.totalorder %s27, 1
      %p123 = por %p121, %p122
      %p125 = scmp.ne.s32.totalorder %s108, %s124
      %p126 = scmp.eq.s32.totalorder %s27, 0
      %p127 = por %p125, %p126
      %s129 = sadd.s32 %s128, 1
      %p132 = scmp.eq.s32.totalorder %s21, 1
      %p133 = scmp.ne.s32.totalorder %s128, %s130
      %p134 = scmp.eq.s32.totalorder %s21, 0
      %p135 = por %p133, %p134
      %p136 = scmp.ne.s32.totalorder %s128, %s130
      %p137 = scmp.eq.s32.totalorder %s26, 1
      %p138 = por %p136, %p137
      %p139 = scmp.ne.s32.totalorder %s130, %s131
      %p140 = scmp.eq.s32.totalorder %s26, 0
      %p141 = por %p139, %p140
      %p142 = scmp.ne.s32.totalorder %s130, %s131
      %p143 = scmp.eq.s32.totalorder %s27, 1
      %p144 = por %p142, %p143
      %p146 = scmp.ne.s32.totalorder %s131, %s145
      %p147 = scmp.eq.s32.totalorder %s27, 0
      %p148 = por %p146, %p147
      %s150 = sadd.s32 %s149, 1
      %p153 = scmp.eq.s32.totalorder %s21, 1
      %p154 = scmp.ne.s32.totalorder %s149, %s151
      %p155 = scmp.eq.s32.totalorder %s21, 0
      %p156 = por %p154, %p155
      %p157 = scmp.ne.s32.totalorder %s149, %s151
      %p158 = scmp.eq.s32.totalorder %s26, 1
      %p159 = por %p157, %p158
      %p160 = scmp.ne.s32.totalorder %s151, %s152
      %p161 = scmp.eq.s32.totalorder %s26, 0
      %p162 = por %p160, %p161
      %p163 = scmp.ne.s32.totalorder %s151, %s152
      %p164 = scmp.eq.s32.totalorder %s27, 1
      %p165 = por %p163, %p164
      %p167 = scmp.ne.s32.totalorder %s152, %s166
      %p168 = scmp.eq.s32.totalorder %s27, 0
      %p169 = por %p167, %p168
      %s171 = sadd.s32 %s170, 1
      %p174 = scmp.eq.s32.totalorder %s21, 1
      %p175 = scmp.ne.s32.totalorder %s170, %s172
      %p176 = scmp.eq.s32.totalorder %s21, 0
      %p177 = por %p175, %p176
      %p178 = scmp.ne.s32.totalorder %s170, %s172
      %p179 = scmp.eq.s32.totalorder %s26, 1
      %p180 = por %p178, %p179
      %p181 = scmp.ne.s32.totalorder %s172, %s173
      %p182 = scmp.eq.s32.totalorder %s26, 0
      %p183 = por %p181, %p182
      %p184 = scmp.ne.s32.totalorder %s172, %s173
      %p185 = scmp.eq.s32.totalorder %s27, 1
      %p186 = por %p184, %p185
      %p188 = scmp.ne.s32.totalorder %s173, %s187
      %p189 = scmp.eq.s32.totalorder %s27, 0
      %p190 = por %p188, %p189
      %s192 = sadd.s32 %s191, 1
      %p195 = scmp.eq.s32.totalorder %s21, 1
      %p196 = scmp.ne.s32.totalorder %s191, %s193
      %p197 = scmp.eq.s32.totalorder %s21, 0
      %p198 = por %p196, %p197
      %p199 = scmp.ne.s32.totalorder %s191, %s193
      %p200 = scmp.eq.s32.totalorder %s26, 1
      %p201 = por %p199, %p200
      %p202 = scmp.ne.s32.totalorder %s193, %s194
      %p203 = scmp.eq.s32.totalorder %s26, 0
      %p204 = por %p202, %p203
      %p205 = scmp.ne.s32.totalorder %s193, %s194
      %p206 = scmp.eq.s32.totalorder %s27, 1
      %p207 = por %p205, %p206
      %p209 = scmp.ne.s32.totalorder %s194, %s208
      %p210 = scmp.eq.s32.totalorder %s27, 0
      %p211 = por %p209, %p210
      %s213 = sadd.s32 %s212, 1
      %p216 = scmp.eq.s32.totalorder %s21, 1
      %p217 = scmp.ne.s32.totalorder %s212, %s214
      %p218 = scmp.eq.s32.totalorder %s21, 0
      %p219 = por %p217, %p218
      %p220 = scmp.ne.s32.totalorder %s212, %s214
      %p221 = scmp.eq.s32.totalorder %s26, 1
      %p222 = por %p220, %p221
      %p223 = scmp.ne.s32.totalorder %s214, %s215
      %p224 = scmp.eq.s32.totalorder %s26, 0
      %p225 = por %p223, %p224
      %p226 = scmp.ne.s32.totalorder %s214, %s215
      %p227 = scmp.eq.s32.totalorder %s27, 1
      %p228 = por %p226, %p227
      %p230 = scmp.ne.s32.totalorder %s215, %s229
      %p231 = scmp.eq.s32.totalorder %s27, 0
      %p232 = por %p230, %p231
      %p233 = scmp.le.s32.totalorder 1, %s21
      %p234 = scmp.lt.s32.totalorder %s21, 3
      %p235 = pnand %p233, %p234
      %p236 = pneg %p235
      // Predicated region
      $region9: #{reg_lstm_forward.1} parent=5 // pred_check
        _
      $region10: #{reg_lstm_forward.1} parent=5 // pred_check_branch
        %238 = sbr.rel (%p235) target = $region12
      $region11: #{reg_lstm_forward.1} parent=5 // pred_region
        %s239 = ssub.s32 %s21, 1
        // Predicated region
        $region13: #{reg_lstm_forward.1} parent=11 // pred_check
          %p240 = pneg %p42
        $region14: #{reg_lstm_forward.1} parent=11 // pred_check_branch
          %242 = sbr.rel (%p240) target = $region16
        $region15: #{reg_lstm_forward.1} parent=11 // pred_region
          _
        $region16: #{reg_lstm_forward.1} parent=11 // pred_fallthru
          _
        // Predicated region
        $region17: #{reg_lstm_forward.1} parent=11 // pred_check
          %p243 = pneg %p141
        $region18: #{reg_lstm_forward.1} parent=11 // pred_check_branch
          %245 = sbr.rel (%p243) target = $region20
        $region19: #{reg_lstm_forward.1} parent=11 // pred_region
          %s247 = ssub.s32 2048, 2048
          %248 = vsyncadd [#allocation7], %s247
          %s249 = sshll.u32 [#allocation8], 4
          %s250 = int_to_ptr.vmem [resolvable:$true] %s249
          %255 = dma.hbm_to_vmem [thread:$0]  %s4, 2048, %s250, [#allocation7], 128, 128, 8
        $region20: #{reg_lstm_forward.1} parent=11 // pred_fallthru
          _
        // Predicated region
        $region21: #{reg_lstm_forward.1} parent=11 // pred_check
          %p256 = pneg %p162
        $region22: #{reg_lstm_forward.1} parent=11 // pred_check_branch
          %258 = sbr.rel (%p256) target = $region24
        $region23: #{reg_lstm_forward.1} parent=11 // pred_region
          _
        $region24: #{reg_lstm_forward.1} parent=11 // pred_fallthru
          _
        // Predicated region
        $region25: #{reg_lstm_forward.1} parent=11 // pred_check
          %p259 = pneg %p183
        $region26: #{reg_lstm_forward.1} parent=11 // pred_check_branch
          %261 = sbr.rel (%p259) target = $region28
        $region27: #{reg_lstm_forward.1} parent=11 // pred_region
          %s263 = ssub.s32 2048, 2048
          %264 = vsyncadd [#allocation10], %s263
          %s265 = sshll.u32 [#allocation9], 4
          %s266 = int_to_ptr.vmem [resolvable:$true] %s265
          %271 = dma.hbm_to_vmem [thread:$0]  %s6, 2048, %s266, [#allocation10], 128, 128, 8
        $region28: #{reg_lstm_forward.1} parent=11 // pred_fallthru
          _
        // Predicated region
        $region29: #{reg_lstm_forward.1} parent=11 // pred_check
          %p272 = pneg %p204
        $region30: #{reg_lstm_forward.1} parent=11 // pred_check_branch
          %274 = sbr.rel (%p272) target = $region32
        $region31: #{reg_lstm_forward.1} parent=11 // pred_region
          _
        $region32: #{reg_lstm_forward.1} parent=11 // pred_fallthru
          _
      $region12: #{reg_lstm_forward.1} parent=5 // pred_fallthru
        _
      %p275 = scmp.lt.s32.totalorder %s21, 2
      // Predicated region
      $region33: #{reg_lstm_forward.1} parent=5 // pred_check
        %p276 = pneg %p275
      $region34: #{reg_lstm_forward.1} parent=5 // pred_check_branch
        %278 = sbr.rel (%p276) target = $region36
      $region35: #{reg_lstm_forward.1} parent=5 // pred_region
        // Predicated region
        $region37: #{reg_lstm_forward.1} parent=35 // pred_check
          %p279 = pneg %p62
        $region38: #{reg_lstm_forward.1} parent=35 // pred_check_branch
          %281 = sbr.rel (%p279) target = $region40
        $region39: #{reg_lstm_forward.1} parent=35 // pred_region
          %s282 = sand.u32 %s52, 1
          %s283 = scalar_lea.sflag [#allocation5], %s282
          %s284 = sand.u32 %s52, 1
          %s285 = smul.addr %s284, 512
          %s286 = scalar_lea.vmem [#allocation4], %s285
          %s288 = ssub.s32 8192, 8192
          %289 = vsyncadd %s283, %s288
          %s290 = smul.addr %s21, 64
          %s291 = smul.addr %s290, 128
          %s292 = scalar_lea.hbm %s1, %s291
          %s293 = sshll.u32 %s286, 4
          %s294 = int_to_ptr.vmem [resolvable:$true] %s293
          %299 = dma.hbm_to_vmem [thread:$0]  %s292, 8192, %s294, %s283, 512, 512, 32
        $region40: #{reg_lstm_forward.1} parent=35 // pred_fallthru
          _
        // Predicated region
        $region41: #{reg_lstm_forward.1} parent=35 // pred_check
          %p300 = pneg %p88
        $region42: #{reg_lstm_forward.1} parent=35 // pred_check_branch
          %302 = sbr.rel (%p300) target = $region44
        $region43: #{reg_lstm_forward.1} parent=35 // pred_region
          %s303 = sand.u32 %s21, 1
          %s304 = scalar_lea.sflag [#allocation7], %s303
          %s305 = sand.u32 %s78, 1
          %s306 = smul.addr %s305, 512
          %s307 = scalar_lea.vmem [#allocation6], %s306
          %s309 = ssub.s32 8192, 8192
          %310 = vsyncadd %s304, %s309
          %s311 = smul.addr %s21, 64
          %s312 = smul.addr %s311, 128
          %s313 = scalar_lea.hbm %s2, %s312
          %s314 = sshll.u32 %s307, 4
          %s315 = int_to_ptr.vmem [resolvable:$true] %s314
          %320 = dma.hbm_to_vmem [thread:$0]  %s313, 8192, %s315, %s304, 512, 512, 32
        $region44: #{reg_lstm_forward.1} parent=35 // pred_fallthru
          _
        // Predicated region
        $region45: #{reg_lstm_forward.1} parent=35 // pred_check
          %p321 = pneg %p114
        $region46: #{reg_lstm_forward.1} parent=35 // pred_check_branch
          %323 = sbr.rel (%p321) target = $region48
        $region47: #{reg_lstm_forward.1} parent=35 // pred_region
          %p324 = scmp.lt.s32.totalorder %s21, 1
          %s325 = scalar_select %p324, %s21, 1
          %s326 = smul.addr %s325, 4
          %s327 = scalar_lea.vmem %s3, %s326
        $region48: #{reg_lstm_forward.1} parent=35 // pred_fallthru
          _
      $region36: #{reg_lstm_forward.1} parent=5 // pred_fallthru
        _
      %p328 = scmp.le.s32.totalorder 1, %s21
      %p329 = scmp.lt.s32.totalorder %s21, 3
      %p330 = pnand %p328, %p329
      %p331 = pneg %p330
      // Predicated region
      $region49: #{reg_lstm_forward.1} parent=5 // pred_check
        _
      $region50: #{reg_lstm_forward.1} parent=5 // pred_check_branch
        %333 = sbr.rel (%p330) target = $region52
      $region51: #{reg_lstm_forward.1} parent=5 // pred_region
        %s334 = ssub.s32 %s21, 1
        %s335 = sand.u32 %s55, 1
        %s336 = scalar_lea.sflag [#allocation5], %s335
        %s337 = sand.u32 %s55, 1
        %s338 = smul.addr %s337, 512
        %s339 = scalar_lea.vmem [#allocation4], %s338
        // Predicated region
        $region53: #{reg_lstm_forward.1} parent=51 // pred_check
          %p340 = pneg %p68
        $region54: #{reg_lstm_forward.1} parent=51 // pred_check_branch
          %342 = sbr.rel (%p340) target = $region56
        $region55: #{reg_lstm_forward.1} parent=51 // pred_region
          %343 = dma.done %s336, 8192
        $region56: #{reg_lstm_forward.1} parent=51 // pred_fallthru
          _
        %s344 = sand.u32 %s26, 1
        %s345 = scalar_lea.sflag [#allocation7], %s344
        %s346 = sand.u32 %s81, 1
        %s347 = smul.addr %s346, 512
        %s348 = scalar_lea.vmem [#allocation6], %s347
        // Predicated region
        $region57: #{reg_lstm_forward.1} parent=51 // pred_check
          %p349 = pneg %p94
        $region58: #{reg_lstm_forward.1} parent=51 // pred_check_branch
          %351 = sbr.rel (%p349) target = $region60
        $region59: #{reg_lstm_forward.1} parent=51 // pred_region
          %352 = dma.done %s345, 8192
        $region60: #{reg_lstm_forward.1} parent=51 // pred_fallthru
          _
        // Predicated region
        $region61: #{reg_lstm_forward.1} parent=51 // pred_check
          %p353 = pneg %p141
        $region62: #{reg_lstm_forward.1} parent=51 // pred_check_branch
          %355 = sbr.rel (%p353) target = $region64
        $region63: #{reg_lstm_forward.1} parent=51 // pred_region
          %356 = dma.done [#allocation7], 2048
        $region64: #{reg_lstm_forward.1} parent=51 // pred_fallthru
          _
        // Predicated region
        $region65: #{reg_lstm_forward.1} parent=51 // pred_check
          %p357 = pneg %p183
        $region66: #{reg_lstm_forward.1} parent=51 // pred_check_branch
          %359 = sbr.rel (%p357) target = $region68
        $region67: #{reg_lstm_forward.1} parent=51 // pred_region
          %360 = dma.done [#allocation10], 2048
        $region68: #{reg_lstm_forward.1} parent=51 // pred_fallthru
          _
        %p361 = pneg %p42
        %p362 = pneg %p39
        %s363 = sand.u32 %s55, 1
        %s364 = scalar_lea.sflag [#allocation5], %s363
        %s365 = sand.u32 %s55, 1
        %s366 = smul.addr %s365, 512
        %s367 = scalar_lea.vmem [#allocation4], %s366
        %p368 = pneg %p68
        %p369 = pneg %p65
        %s370 = sand.u32 %s26, 1
        %s371 = scalar_lea.sflag [#allocation7], %s370
        %s372 = sand.u32 %s81, 1
        %s373 = smul.addr %s372, 512
        %s374 = scalar_lea.vmem [#allocation6], %s373
        %p375 = pneg %p94
        %p376 = pneg %p91
        %p377 = scmp.lt.s32.totalorder %s26, 1
        %s378 = scalar_select %p377, %s26, 1
        %s379 = smul.addr %s378, 4
        %s380 = scalar_lea.vmem %s3, %s379
        %p381 = pneg %p120
        %p382 = pneg %p117
        %p383 = pneg %p141
        %p384 = pneg %p138
        %p385 = pneg %p162
        %p386 = pneg %p159
        %p387 = pneg %p183
        %p388 = pneg %p180
        %p389 = pneg %p204
        %p390 = pneg %p201
        %p391 = pneg %p225
        %p392 = pneg %p222
        %p393 = scmp.lt.s32.totalorder %s26, 1
        %s394 = scalar_select %p393, %s26, 1
        %s395 = smul.addr %s394, 4
        %s396 = scalar_lea.vmem %s3, %s395
        %p397 = scmp.eq.s32.totalorder %s26, 0
        // Predicated region
        $region69: #{reg_lstm_forward.1} parent=51 // pred_check
          %p398 = pneg %p397
        $region70: #{reg_lstm_forward.1} parent=51 // pred_check_branch
          %400 = sbr.rel (%p398) target = $region72
        $region71: #{reg_lstm_forward.1} parent=51 // pred_region
          %v401 = vld [vmem:[%s0] sm:$0xff]
          %v402 = vld [vmem:[%s0 + $0x8] sm:$0xff]
          %v403 = vld [vmem:[%s0 + $0x10] sm:$0xff]
          %v404 = vld [vmem:[%s0 + $0x18] sm:$0xff]
          %v405 = vld [vmem:[%s0 + $0x20] sm:$0xff]
          %v406 = vld [vmem:[%s0 + $0x28] sm:$0xff]
          %v407 = vld [vmem:[%s0 + $0x30] sm:$0xff]
          %v408 = vld [vmem:[%s0 + $0x38] sm:$0xff]
          %409 = vst [vmem:[#allocation2] sm:$0xff] %v401
          %410 = vst [vmem:[#allocation2 + $0x8] sm:$0xff] %v402
          %411 = vst [vmem:[#allocation2 + $0x10] sm:$0xff] %v403
          %412 = vst [vmem:[#allocation2 + $0x18] sm:$0xff] %v404
          %413 = vst [vmem:[#allocation2 + $0x20] sm:$0xff] %v405
          %414 = vst [vmem:[#allocation2 + $0x28] sm:$0xff] %v406
          %415 = vst [vmem:[#allocation2 + $0x30] sm:$0xff] %v407
          %416 = vst [vmem:[#allocation2 + $0x38] sm:$0xff] %v408
        $region72: #{reg_lstm_forward.1} parent=51 // pred_fallthru
          _
        %v417 = vld [vmem:[%s396] sm:$0xf]
        %v418 = vld [vmem:[#allocation2] sm:$0xff]
        %v419 = vld [vmem:[#allocation2 + $0x8] sm:$0xff]
        %v420 = vld [vmem:[#allocation2 + $0x10] sm:$0xff]
        %v421 = vld [vmem:[#allocation2 + $0x18] sm:$0xff]
        %v422 = vld [vmem:[#allocation2 + $0x20] sm:$0xff]
        %v423 = vld [vmem:[#allocation2 + $0x28] sm:$0xff]
        %v424 = vld [vmem:[#allocation2 + $0x30] sm:$0xff]
        %v425 = vld [vmem:[#allocation2 + $0x38] sm:$0xff]
        %v426 = vld [vmem:[%s339] sm:$0xff]
        %v427 = vld [vmem:[%s339 + $0x8] sm:$0xff]
        %v428 = vld [vmem:[%s339 + $0x10] sm:$0xff]
        %v429 = vld [vmem:[%s339 + $0x18] sm:$0xff]
        %v430 = vld [vmem:[%s339 + $0x20] sm:$0xff]
        %v431 = vld [vmem:[%s339 + $0x28] sm:$0xff]
        %v432 = vld [vmem:[%s339 + $0x30] sm:$0xff]
        %v433 = vld [vmem:[%s339 + $0x38] sm:$0xff]
        %v434 = vld [vmem:[%s339 + $0x40] sm:$0xff]
        %v435 = vld [vmem:[%s339 + $0x48] sm:$0xff]
        %v436 = vld [vmem:[%s339 + $0x50] sm:$0xff]
        %v437 = vld [vmem:[%s339 + $0x58] sm:$0xff]
        %v438 = vld [vmem:[%s339 + $0x60] sm:$0xff]
        %v439 = vld [vmem:[%s339 + $0x68] sm:$0xff]
        %v440 = vld [vmem:[%s339 + $0x70] sm:$0xff]
        %v441 = vld [vmem:[%s339 + $0x78] sm:$0xff]
        %v442 = vld [vmem:[%s339 + $0x80] sm:$0xff]
        %v443 = vld [vmem:[%s339 + $0x88] sm:$0xff]
        %v444 = vld [vmem:[%s339 + $0x90] sm:$0xff]
        %v445 = vld [vmem:[%s339 + $0x98] sm:$0xff]
        %v446 = vld [vmem:[%s339 + $0xa0] sm:$0xff]
        %v447 = vld [vmem:[%s339 + $0xa8] sm:$0xff]
        %v448 = vld [vmem:[%s339 + $0xb0] sm:$0xff]
        %v449 = vld [vmem:[%s339 + $0xb8] sm:$0xff]
        %v450 = vld [vmem:[%s339 + $0xc0] sm:$0xff]
        %v451 = vld [vmem:[%s339 + $0xc8] sm:$0xff]
        %v452 = vld [vmem:[%s339 + $0xd0] sm:$0xff]
        %v453 = vld [vmem:[%s339 + $0xd8] sm:$0xff]
        %v454 = vld [vmem:[%s339 + $0xe0] sm:$0xff]
        %v455 = vld [vmem:[%s339 + $0xe8] sm:$0xff]
        %v456 = vld [vmem:[%s339 + $0xf0] sm:$0xff]
        %v457 = vld [vmem:[%s339 + $0xf8] sm:$0xff]
        %v458 = vld [vmem:[%s339 + $0x100] sm:$0xff]
        %v459 = vld [vmem:[%s339 + $0x108] sm:$0xff]
        %v460 = vld [vmem:[%s339 + $0x110] sm:$0xff]
        %v461 = vld [vmem:[%s339 + $0x118] sm:$0xff]
        %v462 = vld [vmem:[%s339 + $0x120] sm:$0xff]
        %v463 = vld [vmem:[%s339 + $0x128] sm:$0xff]
        %v464 = vld [vmem:[%s339 + $0x130] sm:$0xff]
        %v465 = vld [vmem:[%s339 + $0x138] sm:$0xff]
        %v466 = vld [vmem:[%s339 + $0x140] sm:$0xff]
        %v467 = vld [vmem:[%s339 + $0x148] sm:$0xff]
        %v468 = vld [vmem:[%s339 + $0x150] sm:$0xff]
        %v469 = vld [vmem:[%s339 + $0x158] sm:$0xff]
        %v470 = vld [vmem:[%s339 + $0x160] sm:$0xff]
        %v471 = vld [vmem:[%s339 + $0x168] sm:$0xff]
        %v472 = vld [vmem:[%s339 + $0x170] sm:$0xff]
        %v473 = vld [vmem:[%s339 + $0x178] sm:$0xff]
        %v474 = vld [vmem:[%s339 + $0x180] sm:$0xff]
        %v475 = vld [vmem:[%s339 + $0x188] sm:$0xff]
        %v476 = vld [vmem:[%s339 + $0x190] sm:$0xff]
        %v477 = vld [vmem:[%s339 + $0x198] sm:$0xff]
        %v478 = vld [vmem:[%s339 + $0x1a0] sm:$0xff]
        %v479 = vld [vmem:[%s339 + $0x1a8] sm:$0xff]
        %v480 = vld [vmem:[%s339 + $0x1b0] sm:$0xff]
        %v481 = vld [vmem:[%s339 + $0x1b8] sm:$0xff]
        %v482 = vld [vmem:[%s339 + $0x1c0] sm:$0xff]
        %v483 = vld [vmem:[%s339 + $0x1c8] sm:$0xff]
        %v484 = vld [vmem:[%s339 + $0x1d0] sm:$0xff]
        %v485 = vld [vmem:[%s339 + $0x1d8] sm:$0xff]
        %v486 = vld [vmem:[%s339 + $0x1e0] sm:$0xff]
        %v487 = vld [vmem:[%s339 + $0x1e8] sm:$0xff]
        %v488 = vld [vmem:[%s339 + $0x1f0] sm:$0xff]
        %v489 = vld [vmem:[%s339 + $0x1f8] sm:$0xff]
        %v491 = vlaneseq
        %v492 = vshrl.u32 %v491, 7
        %v493 = vsub.s32 0, %v492
        %v494 = vrot.slane %v417, %v493
        %v495 = vlaneseq
        %v496 = vshrl.u32 %v495, 7
        %v497 = vsub.s32 1, %v496
        %v498 = vrot.slane %v417, %v497
        %v499 = vlaneseq
        %v500 = vshrl.u32 %v499, 7
        %v501 = vsub.s32 2, %v500
        %v502 = vrot.slane %v417, %v501
        %v503 = vlaneseq
        %v504 = vshrl.u32 %v503, 7
        %v505 = vsub.s32 3, %v504
        %v506 = vrot.slane %v417, %v505
        %511 = vmatprep.subr.mxu0 %v427
        %512 = vmatpush1.msra.mxu0 %v426
        %513 = vmatprep.subr.mxu0 %v431
        %514 = vmatpush1.msra.mxu0 %v430
        %515 = vmatprep.subr.mxu0 %v435
        %516 = vmatpush1.msra.mxu0 %v434
        %517 = vmatprep.subr.mxu0 %v439
        %518 = vmatpush1.msra.mxu0 %v438
        %519 = vmatprep.subr.mxu0 %v443
        %520 = vmatpush1.msra.mxu0 %v442
        %521 = vmatprep.subr.mxu0 %v447
        %522 = vmatpush1.msra.mxu0 %v446
        %523 = vmatprep.subr.mxu0 %v451
        %524 = vmatpush1.msra.mxu0 %v450
        %525 = vmatprep.subr.mxu0 %v455
        %526 = vmatpush1.msra.mxu0 %v454
        %527 = vmatprep.subr.mxu0 %v459
        %528 = vmatpush1.msra.mxu0 %v458
        %529 = vmatprep.subr.mxu0 %v463
        %530 = vmatpush1.msra.mxu0 %v462
        %531 = vmatprep.subr.mxu0 %v467
        %532 = vmatpush1.msra.mxu0 %v466
        %533 = vmatprep.subr.mxu0 %v471
        %534 = vmatpush1.msra.mxu0 %v470
        %535 = vmatprep.subr.mxu0 %v475
        %536 = vmatpush1.msra.mxu0 %v474
        %537 = vmatprep.subr.mxu0 %v479
        %538 = vmatpush1.msra.mxu0 %v478
        %539 = vmatprep.subr.mxu0 %v483
        %540 = vmatpush1.msra.mxu0 %v482
        %541 = vmatprep.subr.mxu0 %v487
        %542 = vmatpush1.msra.mxu0 %v486
        %543 = vmatprep.subr.mxu0 0.0
        %544 = vmatpush1.msra.mxu0 0.0
        %545 = vmatprep.subr.mxu0 0.0
        %546 = vmatpush1.msra.mxu0 0.0
        %547 = vmatprep.subr.mxu0 0.0
        %548 = vmatpush1.msra.mxu0 0.0
        %549 = vmatprep.subr.mxu0 0.0
        %550 = vmatpush1.msra.mxu0 0.0
        %551 = vmatprep.subr.mxu0 0.0
        %552 = vmatpush1.msra.mxu0 0.0
        %553 = vmatprep.subr.mxu0 0.0
        %554 = vmatpush1.msra.mxu0 0.0
        %555 = vmatprep.subr.mxu0 0.0
        %556 = vmatpush1.msra.mxu0 0.0
        %557 = vmatprep.subr.mxu0 0.0
        %558 = vmatpush1.msra.mxu0 0.0
        %559 = vmatprep.subr.mxu0 0.0
        %560 = vmatpush1.msra.mxu0 0.0
        %561 = vmatprep.subr.mxu0 0.0
        %562 = vmatpush1.msra.mxu0 0.0
        %563 = vmatprep.subr.mxu0 0.0
        %564 = vmatpush1.msra.mxu0 0.0
        %565 = vmatprep.subr.mxu0 0.0
        %566 = vmatpush1.msra.mxu0 0.0
        %567 = vmatprep.subr.mxu0 0.0
        %568 = vmatpush1.msra.mxu0 0.0
        %569 = vmatprep.subr.mxu0 0.0
        %570 = vmatpush1.msra.mxu0 0.0
        %571 = vmatprep.subr.mxu0 0.0
        %572 = vmatpush1.msra.mxu0 0.0
        %573 = vmatprep.subr.mxu0 0.0
        %574 = vmatpush1.msra.mxu0 0.0
        %575 = vmatprep.mubr.f32.mxu0 0.0
        %576 = vmatmul.mubr.f32.gmra.mrb[0].mxu0 %v418
        %v577 = vpop.f32.mrb[0].mxu0
        %v578 = vadd.f32 %v494, %v577
        %v579 = vpop.f32.mrb[0].mxu0
        %v580 = vadd.f32 %v498, %v579
        %581 = vmatprep.mubr.f32.mxu0 0.0
        %582 = vmatmul.mubr.f32.gmra.mrb[0].mxu0 %v419
        %v583 = vpop.f32.mrb[0].mxu0
        %v584 = vadd.f32 %v494, %v583
        %v585 = vpop.f32.mrb[0].mxu0
        %v586 = vadd.f32 %v498, %v585
        %587 = vmatprep.mubr.f32.mxu0 0.0
        %588 = vmatmul.mubr.f32.gmra.mrb[0].mxu0 %v420
        %v589 = vpop.f32.mrb[0].mxu0
        %v590 = vadd.f32 %v494, %v589
        %v591 = vpop.f32.mrb[0].mxu0
        %v592 = vadd.f32 %v498, %v591
        %593 = vmatprep.mubr.f32.mxu0 0.0
        %594 = vmatmul.mubr.f32.gmra.mrb[0].mxu0 %v421
        %v595 = vpop.f32.mrb[0].mxu0
        %v596 = vadd.f32 %v494, %v595
        %v597 = vpop.f32.mrb[0].mxu0
        %v598 = vadd.f32 %v498, %v597
        %599 = vmatprep.mubr.f32.mxu0 0.0
        %600 = vmatmul.mubr.f32.gmra.mrb[0].mxu0 %v422
        %v601 = vpop.f32.mrb[0].mxu0
        %v602 = vadd.f32 %v494, %v601
        %v603 = vpop.f32.mrb[0].mxu0
        %v604 = vadd.f32 %v498, %v603
        %605 = vmatprep.mubr.f32.mxu0 0.0
        %606 = vmatmul.mubr.f32.gmra.mrb[0].mxu0 %v423
        %v607 = vpop.f32.mrb[0].mxu0
        %v608 = vadd.f32 %v494, %v607
        %v609 = vpop.f32.mrb[0].mxu0
        %v610 = vadd.f32 %v498, %v609
        %611 = vmatprep.mubr.f32.mxu0 0.0
        %612 = vmatmul.mubr.f32.gmra.mrb[0].mxu0 %v424
        %v613 = vpop.f32.mrb[0].mxu0
        %v614 = vadd.f32 %v494, %v613
        %v615 = vpop.f32.mrb[0].mxu0
        %v616 = vadd.f32 %v498, %v615
        %617 = vmatprep.mubr.f32.mxu0 0.0
        %618 = vmatmul.mubr.f32.gmra.mrb[0].mxu0 %v425
        %v619 = vpop.f32.mrb[0].mxu0
        %v620 = vadd.f32 %v494, %v619
        %v621 = vpop.f32.mrb[0].mxu0
        %v622 = vadd.f32 %v498, %v621
        %623 = vdwg.mxu0
        %624 = vmatprep.subr.mxu0 %v429
        %625 = vmatpush1.msra.mxu0 %v428
        %626 = vmatprep.subr.mxu0 %v433
        %627 = vmatpush1.msra.mxu0 %v432
        %628 = vmatprep.subr.mxu0 %v437
        %629 = vmatpush1.msra.mxu0 %v436
        %630 = vmatprep.subr.mxu0 %v441
        %631 = vmatpush1.msra.mxu0 %v440
        %632 = vmatprep.subr.mxu0 %v445
        %633 = vmatpush1.msra.mxu0 %v444
        %634 = vmatprep.subr.mxu0 %v449
        %635 = vmatpush1.msra.mxu0 %v448
        %636 = vmatprep.subr.mxu0 %v453
        %637 = vmatpush1.msra.mxu0 %v452
        %638 = vmatprep.subr.mxu0 %v457
        %639 = vmatpush1.msra.mxu0 %v456
        %640 = vmatprep.subr.mxu0 %v461
        %641 = vmatpush1.msra.mxu0 %v460
        %642 = vmatprep.subr.mxu0 %v465
        %643 = vmatpush1.msra.mxu0 %v464
        %644 = vmatprep.subr.mxu0 %v469
        %645 = vmatpush1.msra.mxu0 %v468
        %646 = vmatprep.subr.mxu0 %v473
        %647 = vmatpush1.msra.mxu0 %v472
        %648 = vmatprep.subr.mxu0 %v477
        %649 = vmatpush1.msra.mxu0 %v476
        %650 = vmatprep.subr.mxu0 %v481
        %651 = vmatpush1.msra.mxu0 %v480
        %652 = vmatprep.subr.mxu0 %v485
        %653 = vmatpush1.msra.mxu0 %v484
        %654 = vmatprep.subr.mxu0 %v489
        %655 = vmatpush1.msra.mxu0 %v488
        %656 = vmatprep.subr.mxu0 0.0
        %657 = vmatpush1.msra.mxu0 0.0
        %658 = vmatprep.subr.mxu0 0.0
        %659 = vmatpush1.msra.mxu0 0.0
        %660 = vmatprep.subr.mxu0 0.0
        %661 = vmatpush1.msra.mxu0 0.0
        %662 = vmatprep.subr.mxu0 0.0
        %663 = vmatpush1.msra.mxu0 0.0
        %664 = vmatprep.subr.mxu0 0.0
        %665 = vmatpush1.msra.mxu0 0.0
        %666 = vmatprep.subr.mxu0 0.0
        %667 = vmatpush1.msra.mxu0 0.0
        %668 = vmatprep.subr.mxu0 0.0
        %669 = vmatpush1.msra.mxu0 0.0
        %670 = vmatprep.subr.mxu0 0.0
        %671 = vmatpush1.msra.mxu0 0.0
        %672 = vmatprep.subr.mxu0 0.0
        %673 = vmatpush1.msra.mxu0 0.0
        %674 = vmatprep.subr.mxu0 0.0
        %675 = vmatpush1.msra.mxu0 0.0
        %676 = vmatprep.subr.mxu0 0.0
        %677 = vmatpush1.msra.mxu0 0.0
        %678 = vmatprep.subr.mxu0 0.0
        %679 = vmatpush1.msra.mxu0 0.0
        %680 = vmatprep.subr.mxu0 0.0
        %681 = vmatpush1.msra.mxu0 0.0
        %682 = vmatprep.subr.mxu0 0.0
        %683 = vmatpush1.msra.mxu0 0.0
        %684 = vmatprep.subr.mxu0 0.0
        %685 = vmatpush1.msra.mxu0 0.0
        %686 = vmatprep.subr.mxu0 0.0
        %687 = vmatpush1.msra.mxu0 0.0
        %688 = vmatprep.mubr.f32.mxu0 0.0
        %689 = vmatmul.mubr.f32.gmra.mrb[0].mxu0 %v418
        %v690 = vpop.f32.mrb[0].mxu0
        %v691 = vadd.f32 %v502, %v690
        %v692 = vpop.f32.mrb[0].mxu0
        %v693 = vadd.f32 %v506, %v692
        %694 = vmatprep.mubr.f32.mxu0 0.0
        %695 = vmatmul.mubr.f32.gmra.mrb[0].mxu0 %v419
        %v696 = vpop.f32.mrb[0].mxu0
        %v697 = vadd.f32 %v502, %v696
        %v698 = vpop.f32.mrb[0].mxu0
        %v699 = vadd.f32 %v506, %v698
        %700 = vmatprep.mubr.f32.mxu0 0.0
        %701 = vmatmul.mubr.f32.gmra.mrb[0].mxu0 %v420
        %v702 = vpop.f32.mrb[0].mxu0
        %v703 = vadd.f32 %v502, %v702
        %v704 = vpop.f32.mrb[0].mxu0
        %v705 = vadd.f32 %v506, %v704
        %706 = vmatprep.mubr.f32.mxu0 0.0
        %707 = vmatmul.mubr.f32.gmra.mrb[0].mxu0 %v421
        %v708 = vpop.f32.mrb[0].mxu0
        %v709 = vadd.f32 %v502, %v708
        %v710 = vpop.f32.mrb[0].mxu0
        %v711 = vadd.f32 %v506, %v710
        %712 = vmatprep.mubr.f32.mxu0 0.0
        %713 = vmatmul.mubr.f32.gmra.mrb[0].mxu0 %v422
        %v714 = vpop.f32.mrb[0].mxu0
        %v715 = vadd.f32 %v502, %v714
        %v716 = vpop.f32.mrb[0].mxu0
        %v717 = vadd.f32 %v506, %v716
        %718 = vmatprep.mubr.f32.mxu0 0.0
        %719 = vmatmul.mubr.f32.gmra.mrb[0].mxu0 %v423
        %v720 = vpop.f32.mrb[0].mxu0
        %v721 = vadd.f32 %v502, %v720
        %v722 = vpop.f32.mrb[0].mxu0
        %v723 = vadd.f32 %v506, %v722
        %724 = vmatprep.mubr.f32.mxu0 0.0
        %725 = vmatmul.mubr.f32.gmra.mrb[0].mxu0 %v424
        %v726 = vpop.f32.mrb[0].mxu0
        %v727 = vadd.f32 %v502, %v726
        %v728 = vpop.f32.mrb[0].mxu0
        %v729 = vadd.f32 %v506, %v728
        %730 = vmatprep.mubr.f32.mxu0 0.0
        %731 = vmatmul.mubr.f32.gmra.mrb[0].mxu0 %v425
        %v732 = vpop.f32.mrb[0].mxu0
        %v733 = vadd.f32 %v502, %v732
        %v734 = vpop.f32.mrb[0].mxu0
        %v735 = vadd.f32 %v506, %v734
        %736 = vdwg.mxu0
        %737 = vst [vmem:[#allocation3] sm:$0xff] %v578
        %738 = vst [vmem:[#allocation3 + $0x8] sm:$0xff] %v580
        %739 = vst [vmem:[#allocation3 + $0x10] sm:$0xff] %v691
        %740 = vst [vmem:[#allocation3 + $0x18] sm:$0xff] %v693
        %741 = vst [vmem:[#allocation3 + $0x20] sm:$0xff] %v584
        %742 = vst [vmem:[#allocation3 + $0x28] sm:$0xff] %v586
        %743 = vst [vmem:[#allocation3 + $0x30] sm:$0xff] %v697
        %744 = vst [vmem:[#allocation3 + $0x38] sm:$0xff] %v699
        %745 = vst [vmem:[#allocation3 + $0x40] sm:$0xff] %v590
        %746 = vst [vmem:[#allocation3 + $0x48] sm:$0xff] %v592
        %747 = vst [vmem:[#allocation3 + $0x50] sm:$0xff] %v703
        %748 = vst [vmem:[#allocation3 + $0x58] sm:$0xff] %v705
        %749 = vst [vmem:[#allocation3 + $0x60] sm:$0xff] %v596
        %750 = vst [vmem:[#allocation3 + $0x68] sm:$0xff] %v598
        %751 = vst [vmem:[#allocation3 + $0x70] sm:$0xff] %v709
        %752 = vst [vmem:[#allocation3 + $0x78] sm:$0xff] %v711
        %753 = vst [vmem:[#allocation3 + $0x80] sm:$0xff] %v602
        %754 = vst [vmem:[#allocation3 + $0x88] sm:$0xff] %v604
        %755 = vst [vmem:[#allocation3 + $0x90] sm:$0xff] %v715
        %756 = vst [vmem:[#allocation3 + $0x98] sm:$0xff] %v717
        %757 = vst [vmem:[#allocation3 + $0xa0] sm:$0xff] %v608
        %758 = vst [vmem:[#allocation3 + $0xa8] sm:$0xff] %v610
        %759 = vst [vmem:[#allocation3 + $0xb0] sm:$0xff] %v721
        %760 = vst [vmem:[#allocation3 + $0xb8] sm:$0xff] %v723
        %761 = vst [vmem:[#allocation3 + $0xc0] sm:$0xff] %v614
        %762 = vst [vmem:[#allocation3 + $0xc8] sm:$0xff] %v616
        %763 = vst [vmem:[#allocation3 + $0xd0] sm:$0xff] %v727
        %764 = vst [vmem:[#allocation3 + $0xd8] sm:$0xff] %v729
        %765 = vst [vmem:[#allocation3 + $0xe0] sm:$0xff] %v620
        %766 = vst [vmem:[#allocation3 + $0xe8] sm:$0xff] %v622
        %767 = vst [vmem:[#allocation3 + $0xf0] sm:$0xff] %v733
        %768 = vst [vmem:[#allocation3 + $0xf8] sm:$0xff] %v735
        %v769 = vld [vmem:[#allocation3] sm:$0xff]
        %v770 = vld [vmem:[#allocation3 + $0x8] sm:$0xff]
        %v771 = vld [vmem:[#allocation3 + $0x10] sm:$0xff]
        %v772 = vld [vmem:[#allocation3 + $0x18] sm:$0xff]
        %v773 = vld [vmem:[%s348] sm:$0xff]
        %v774 = vld [vmem:[%s348 + $0x8] sm:$0xff]
        %v775 = vld [vmem:[%s348 + $0x10] sm:$0xff]
        %v776 = vld [vmem:[%s348 + $0x18] sm:$0xff]
        %v777 = vld [vmem:[%s348 + $0x20] sm:$0xff]
        %v778 = vld [vmem:[%s348 + $0x28] sm:$0xff]
        %v779 = vld [vmem:[%s348 + $0x30] sm:$0xff]
        %v780 = vld [vmem:[%s348 + $0x38] sm:$0xff]
        %v781 = vld [vmem:[%s348 + $0x40] sm:$0xff]
        %v782 = vld [vmem:[%s348 + $0x48] sm:$0xff]
        %v783 = vld [vmem:[%s348 + $0x50] sm:$0xff]
        %v784 = vld [vmem:[%s348 + $0x58] sm:$0xff]
        %v785 = vld [vmem:[%s348 + $0x60] sm:$0xff]
        %v786 = vld [vmem:[%s348 + $0x68] sm:$0xff]
        %v787 = vld [vmem:[%s348 + $0x70] sm:$0xff]
        %v788 = vld [vmem:[%s348 + $0x78] sm:$0xff]
        %v789 = vld [vmem:[%s348 + $0x80] sm:$0xff]
        %v790 = vld [vmem:[%s348 + $0x88] sm:$0xff]
        %v791 = vld [vmem:[%s348 + $0x90] sm:$0xff]
        %v792 = vld [vmem:[%s348 + $0x98] sm:$0xff]
        %v793 = vld [vmem:[%s348 + $0xa0] sm:$0xff]
        %v794 = vld [vmem:[%s348 + $0xa8] sm:$0xff]
        %v795 = vld [vmem:[%s348 + $0xb0] sm:$0xff]
        %v796 = vld [vmem:[%s348 + $0xb8] sm:$0xff]
        %v797 = vld [vmem:[%s348 + $0xc0] sm:$0xff]
        %v798 = vld [vmem:[%s348 + $0xc8] sm:$0xff]
        %v799 = vld [vmem:[%s348 + $0xd0] sm:$0xff]
        %v800 = vld [vmem:[%s348 + $0xd8] sm:$0xff]
        %v801 = vld [vmem:[%s348 + $0xe0] sm:$0xff]
        %v802 = vld [vmem:[%s348 + $0xe8] sm:$0xff]
        %v803 = vld [vmem:[%s348 + $0xf0] sm:$0xff]
        %v804 = vld [vmem:[%s348 + $0xf8] sm:$0xff]
        %v805 = vld [vmem:[%s348 + $0x100] sm:$0xff]
        %v806 = vld [vmem:[%s348 + $0x108] sm:$0xff]
        %v807 = vld [vmem:[%s348 + $0x110] sm:$0xff]
        %v808 = vld [vmem:[%s348 + $0x118] sm:$0xff]
        %v809 = vld [vmem:[%s348 + $0x120] sm:$0xff]
        %v810 = vld [vmem:[%s348 + $0x128] sm:$0xff]
        %v811 = vld [vmem:[%s348 + $0x130] sm:$0xff]
        %v812 = vld [vmem:[%s348 + $0x138] sm:$0xff]
        %v813 = vld [vmem:[%s348 + $0x140] sm:$0xff]
        %v814 = vld [vmem:[%s348 + $0x148] sm:$0xff]
        %v815 = vld [vmem:[%s348 + $0x150] sm:$0xff]
        %v816 = vld [vmem:[%s348 + $0x158] sm:$0xff]
        %v817 = vld [vmem:[%s348 + $0x160] sm:$0xff]
        %v818 = vld [vmem:[%s348 + $0x168] sm:$0xff]
        %v819 = vld [vmem:[%s348 + $0x170] sm:$0xff]
        %v820 = vld [vmem:[%s348 + $0x178] sm:$0xff]
        %v821 = vld [vmem:[%s348 + $0x180] sm:$0xff]
        %v822 = vld [vmem:[%s348 + $0x188] sm:$0xff]
        %v823 = vld [vmem:[%s348 + $0x190] sm:$0xff]
        %v824 = vld [vmem:[%s348 + $0x198] sm:$0xff]
        %v825 = vld [vmem:[%s348 + $0x1a0] sm:$0xff]
        %v826 = vld [vmem:[%s348 + $0x1a8] sm:$0xff]
        %v827 = vld [vmem:[%s348 + $0x1b0] sm:$0xff]
        %v828 = vld [vmem:[%s348 + $0x1b8] sm:$0xff]
        %v829 = vld [vmem:[%s348 + $0x1c0] sm:$0xff]
        %v830 = vld [vmem:[%s348 + $0x1c8] sm:$0xff]
        %v831 = vld [vmem:[%s348 + $0x1d0] sm:$0xff]
        %v832 = vld [vmem:[%s348 + $0x1d8] sm:$0xff]
        %v833 = vld [vmem:[%s348 + $0x1e0] sm:$0xff]
        %v834 = vld [vmem:[%s348 + $0x1e8] sm:$0xff]
        %v835 = vld [vmem:[%s348 + $0x1f0] sm:$0xff]
        %v836 = vld [vmem:[%s348 + $0x1f8] sm:$0xff]
        %837 = vmatprep.subr.mxu0 %v774
        %838 = vmatpush1.msra.mxu0 %v773
        %839 = vmatprep.subr.mxu0 %v778
        %840 = vmatpush1.msra.mxu0 %v777
        %841 = vmatprep.subr.mxu0 %v782
        %842 = vmatpush1.msra.mxu0 %v781
        %843 = vmatprep.subr.mxu0 %v786
        %844 = vmatpush1.msra.mxu0 %v785
        %845 = vmatprep.subr.mxu0 %v790
        %846 = vmatpush1.msra.mxu0 %v789
        %847 = vmatprep.subr.mxu0 %v794
        %848 = vmatpush1.msra.mxu0 %v793
        %849 = vmatprep.subr.mxu0 %v798
        %850 = vmatpush1.msra.mxu0 %v797
        %851 = vmatprep.subr.mxu0 %v802
        %852 = vmatpush1.msra.mxu0 %v801
        %853 = vmatprep.subr.mxu0 %v806
        %854 = vmatpush1.msra.mxu0 %v805
        %855 = vmatprep.subr.mxu0 %v810
        %856 = vmatpush1.msra.mxu0 %v809
        %857 = vmatprep.subr.mxu0 %v814
        %858 = vmatpush1.msra.mxu0 %v813
        %859 = vmatprep.subr.mxu0 %v818
        %860 = vmatpush1.msra.mxu0 %v817
        %861 = vmatprep.subr.mxu0 %v822
        %862 = vmatpush1.msra.mxu0 %v821
        %863 = vmatprep.subr.mxu0 %v826
        %864 = vmatpush1.msra.mxu0 %v825
        %865 = vmatprep.subr.mxu0 %v830
        %866 = vmatpush1.msra.mxu0 %v829
        %867 = vmatprep.subr.mxu0 %v834
        %868 = vmatpush1.msra.mxu0 %v833
        %869 = vmatprep.subr.mxu0 0.0
        %870 = vmatpush1.msra.mxu0 0.0
        %871 = vmatprep.subr.mxu0 0.0
        %872 = vmatpush1.msra.mxu0 0.0
        %873 = vmatprep.subr.mxu0 0.0
        %874 = vmatpush1.msra.mxu0 0.0
        %875 = vmatprep.subr.mxu0 0.0
        %876 = vmatpush1.msra.mxu0 0.0
        %877 = vmatprep.subr.mxu0 0.0
        %878 = vmatpush1.msra.mxu0 0.0
        %879 = vmatprep.subr.mxu0 0.0
        %880 = vmatpush1.msra.mxu0 0.0
        %881 = vmatprep.subr.mxu0 0.0
        %882 = vmatpush1.msra.mxu0 0.0
        %883 = vmatprep.subr.mxu0 0.0
        %884 = vmatpush1.msra.mxu0 0.0
        %885 = vmatprep.subr.mxu0 0.0
        %886 = vmatpush1.msra.mxu0 0.0
        %887 = vmatprep.subr.mxu0 0.0
        %888 = vmatpush1.msra.mxu0 0.0
        %889 = vmatprep.subr.mxu0 0.0
        %890 = vmatpush1.msra.mxu0 0.0
        %891 = vmatprep.subr.mxu0 0.0
        %892 = vmatpush1.msra.mxu0 0.0
        %893 = vmatprep.subr.mxu0 0.0
        %894 = vmatpush1.msra.mxu0 0.0
        %895 = vmatprep.subr.mxu0 0.0
        %896 = vmatpush1.msra.mxu0 0.0
        %897 = vmatprep.subr.mxu0 0.0
        %898 = vmatpush1.msra.mxu0 0.0
        %899 = vmatprep.subr.mxu0 0.0
        %900 = vmatpush1.msra.mxu0 0.0
        %901 = vmatprep.mubr.f32.mxu0 0.0
        %902 = vmatmul.mubr.f32.gmra.mrb[0].mxu0 0.0
        %v903 = vpop.f32.mrb[0].mxu0
        %v904 = vadd.f32 0.0, %v903
        %v905 = vpop.f32.mrb[0].mxu0
        %v906 = vadd.f32 0.0, %v905
        %907 = vdwg.mxu0
        %908 = vmatprep.subr.mxu0 %v776
        %909 = vmatpush1.msra.mxu0 %v775
        %910 = vmatprep.subr.mxu0 %v780
        %911 = vmatpush1.msra.mxu0 %v779
        %912 = vmatprep.subr.mxu0 %v784
        %913 = vmatpush1.msra.mxu0 %v783
        %914 = vmatprep.subr.mxu0 %v788
        %915 = vmatpush1.msra.mxu0 %v787
        %916 = vmatprep.subr.mxu0 %v792
        %917 = vmatpush1.msra.mxu0 %v791
        %918 = vmatprep.subr.mxu0 %v796
        %919 = vmatpush1.msra.mxu0 %v795
        %920 = vmatprep.subr.mxu0 %v800
        %921 = vmatpush1.msra.mxu0 %v799
        %922 = vmatprep.subr.mxu0 %v804
        %923 = vmatpush1.msra.mxu0 %v803
        %924 = vmatprep.subr.mxu0 %v808
        %925 = vmatpush1.msra.mxu0 %v807
        %926 = vmatprep.subr.mxu0 %v812
        %927 = vmatpush1.msra.mxu0 %v811
        %928 = vmatprep.subr.mxu0 %v816
        %929 = vmatpush1.msra.mxu0 %v815
        %930 = vmatprep.subr.mxu0 %v820
        %931 = vmatpush1.msra.mxu0 %v819
        %932 = vmatprep.subr.mxu0 %v824
        %933 = vmatpush1.msra.mxu0 %v823
        %934 = vmatprep.subr.mxu0 %v828
        %935 = vmatpush1.msra.mxu0 %v827
        %936 = vmatprep.subr.mxu0 %v832
        %937 = vmatpush1.msra.mxu0 %v831
        %938 = vmatprep.subr.mxu0 %v836
        %939 = vmatpush1.msra.mxu0 %v835
        %940 = vmatprep.subr.mxu0 0.0
        %941 = vmatpush1.msra.mxu0 0.0
        %942 = vmatprep.subr.mxu0 0.0
        %943 = vmatpush1.msra.mxu0 0.0
        %944 = vmatprep.subr.mxu0 0.0
        %945 = vmatpush1.msra.mxu0 0.0
        %946 = vmatprep.subr.mxu0 0.0
        %947 = vmatpush1.msra.mxu0 0.0
        %948 = vmatprep.subr.mxu0 0.0
        %949 = vmatpush1.msra.mxu0 0.0
        %950 = vmatprep.subr.mxu0 0.0
        %951 = vmatpush1.msra.mxu0 0.0
        %952 = vmatprep.subr.mxu0 0.0
        %953 = vmatpush1.msra.mxu0 0.0
        %954 = vmatprep.subr.mxu0 0.0
        %955 = vmatpush1.msra.mxu0 0.0
        %956 = vmatprep.subr.mxu0 0.0
        %957 = vmatpush1.msra.mxu0 0.0
        %958 = vmatprep.subr.mxu0 0.0
        %959 = vmatpush1.msra.mxu0 0.0
        %960 = vmatprep.subr.mxu0 0.0
        %961 = vmatpush1.msra.mxu0 0.0
        %962 = vmatprep.subr.mxu0 0.0
        %963 = vmatpush1.msra.mxu0 0.0
        %964 = vmatprep.subr.mxu0 0.0
        %965 = vmatpush1.msra.mxu0 0.0
        %966 = vmatprep.subr.mxu0 0.0
        %967 = vmatpush1.msra.mxu0 0.0
        %968 = vmatprep.subr.mxu0 0.0
        %969 = vmatpush1.msra.mxu0 0.0
        %970 = vmatprep.subr.mxu0 0.0
        %971 = vmatpush1.msra.mxu0 0.0
        %972 = vmatprep.mubr.f32.mxu0 0.0
        %973 = vmatmul.mubr.f32.gmra.mrb[0].mxu0 0.0
        %v974 = vpop.f32.mrb[0].mxu0
        %v975 = vadd.f32 0.0, %v974
        %v976 = vpop.f32.mrb[0].mxu0
        %v977 = vadd.f32 0.0, %v976
        %978 = vdwg.mxu0
        %v979 = vadd.f32 %v769, %v904
        %v980 = vadd.f32 %v770, %v906
        %v981 = vadd.f32 %v771, %v975
        %v982 = vadd.f32 %v772, %v977
        %v983 = vxor.u32 %v979, 2147483648
        %v984 = vxor.u32 %v980, 2147483648
        %v985 = vxor.u32 %v981, 2147483648
        %v986 = vmul.f32 %v983, 1.442695
        %v987 = vpow.pop %v986
        %v988 = vmul.f32 %v984, 1.442695
        %v989 = vpow.pop %v988
        %v990 = vmul.f32 %v985, 1.442695
        %v991 = vpow.pop %v990
        %v992 = vadd.f32 %v987, 1.0
        %v993 = vadd.f32 %v989, 1.0
        %v994 = vadd.f32 %v991, 1.0
        %v995 = vrcp.pop %v992
        %v996 = vmul.f32 1.0, %v995
        %v997 = vrcp.pop %v993
        %v998 = vmul.f32 1.0, %v997
        %v999 = vrcp.pop %v994
        %v1000 = vmul.f32 1.0, %v999
        %v1001 = vtanh.pop %v982
        %v1002 = vmul.f32 %v998, 0.0
        %v1003 = vmul.f32 %v996, %v1001
        %v1004 = vadd.f32 %v1002, %v1003
        %v1005 = vtanh.pop %v1004
        %v1006 = vmul.f32 %v1000, %v1005
        %1007 = vst [vmem:[#allocation2] sm:$0xff] %v1006
        %s1008 = scalar_lea.vmem [#allocation3], 32
        %v1009 = vld [vmem:[%s1008] sm:$0xff]
        %v1010 = vld [vmem:[%s1008 + $0x8] sm:$0xff]
        %v1011 = vld [vmem:[%s1008 + $0x10] sm:$0xff]
        %v1012 = vld [vmem:[%s1008 + $0x18] sm:$0xff]
        %v1013 = vld [vmem:[%s348] sm:$0xff]
        %v1014 = vld [vmem:[%s348 + $0x8] sm:$0xff]
        %v1015 = vld [vmem:[%s348 + $0x10] sm:$0xff]
        %v1016 = vld [vmem:[%s348 + $0x18] sm:$0xff]
        %v1017 = vld [vmem:[%s348 + $0x20] sm:$0xff]
        %v1018 = vld [vmem:[%s348 + $0x28] sm:$0xff]
        %v1019 = vld [vmem:[%s348 + $0x30] sm:$0xff]
        %v1020 = vld [vmem:[%s348 + $0x38] sm:$0xff]
        %v1021 = vld [vmem:[%s348 + $0x40] sm:$0xff]
        %v1022 = vld [vmem:[%s348 + $0x48] sm:$0xff]
        %v1023 = vld [vmem:[%s348 + $0x50] sm:$0xff]
        %v1024 = vld [vmem:[%s348 + $0x58] sm:$0xff]
        %v1025 = vld [vmem:[%s348 + $0x60] sm:$0xff]
        %v1026 = vld [vmem:[%s348 + $0x68] sm:$0xff]
        %v1027 = vld [vmem:[%s348 + $0x70] sm:$0xff]
        %v1028 = vld [vmem:[%s348 + $0x78] sm:$0xff]
        %v1029 = vld [vmem:[%s348 + $0x80] sm:$0xff]
        %v1030 = vld [vmem:[%s348 + $0x88] sm:$0xff]
        %v1031 = vld [vmem:[%s348 + $0x90] sm:$0xff]
        %v1032 = vld [vmem:[%s348 + $0x98] sm:$0xff]
        %v1033 = vld [vmem:[%s348 + $0xa0] sm:$0xff]
        %v1034 = vld [vmem:[%s348 + $0xa8] sm:$0xff]
        %v1035 = vld [vmem:[%s348 + $0xb0] sm:$0xff]
        %v1036 = vld [vmem:[%s348 + $0xb8] sm:$0xff]
        %v1037 = vld [vmem:[%s348 + $0xc0] sm:$0xff]
        %v1038 = vld [vmem:[%s348 + $0xc8] sm:$0xff]
        %v1039 = vld [vmem:[%s348 + $0xd0] sm:$0xff]
        %v1040 = vld [vmem:[%s348 + $0xd8] sm:$0xff]
        %v1041 = vld [vmem:[%s348 + $0xe0] sm:$0xff]
        %v1042 = vld [vmem:[%s348 + $0xe8] sm:$0xff]
        %v1043 = vld [vmem:[%s348 + $0xf0] sm:$0xff]
        %v1044 = vld [vmem:[%s348 + $0xf8] sm:$0xff]
        %v1045 = vld [vmem:[%s348 + $0x100] sm:$0xff]
        %v1046 = vld [vmem:[%s348 + $0x108] sm:$0xff]
        %v1047 = vld [vmem:[%s348 + $0x110] sm:$0xff]
        %v1048 = vld [vmem:[%s348 + $0x118] sm:$0xff]
        %v1049 = vld [vmem:[%s348 + $0x120] sm:$0xff]
        %v1050 = vld [vmem:[%s348 + $0x128] sm:$0xff]
        %v1051 = vld [vmem:[%s348 + $0x130] sm:$0xff]
        %v1052 = vld [vmem:[%s348 + $0x138] sm:$0xff]
        %v1053 = vld [vmem:[%s348 + $0x140] sm:$0xff]
        %v1054 = vld [vmem:[%s348 + $0x148] sm:$0xff]
        %v1055 = vld [vmem:[%s348 + $0x150] sm:$0xff]
        %v1056 = vld [vmem:[%s348 + $0x158] sm:$0xff]
        %v1057 = vld [vmem:[%s348 + $0x160] sm:$0xff]
        %v1058 = vld [vmem:[%s348 + $0x168] sm:$0xff]
        %v1059 = vld [vmem:[%s348 + $0x170] sm:$0xff]
        %v1060 = vld [vmem:[%s348 + $0x178] sm:$0xff]
        %v1061 = vld [vmem:[%s348 + $0x180] sm:$0xff]
        %v1062 = vld [vmem:[%s348 + $0x188] sm:$0xff]
        %v1063 = vld [vmem:[%s348 + $0x190] sm:$0xff]
        %v1064 = vld [vmem:[%s348 + $0x198] sm:$0xff]
        %v1065 = vld [vmem:[%s348 + $0x1a0] sm:$0xff]
        %v1066 = vld [vmem:[%s348 + $0x1a8] sm:$0xff]
        %v1067 = vld [vmem:[%s348 + $0x1b0] sm:$0xff]
        %v1068 = vld [vmem:[%s348 + $0x1b8] sm:$0xff]
        %v1069 = vld [vmem:[%s348 + $0x1c0] sm:$0xff]
        %v1070 = vld [vmem:[%s348 + $0x1c8] sm:$0xff]
        %v1071 = vld [vmem:[%s348 + $0x1d0] sm:$0xff]
        %v1072 = vld [vmem:[%s348 + $0x1d8] sm:$0xff]
        %v1073 = vld [vmem:[%s348 + $0x1e0] sm:$0xff]
        %v1074 = vld [vmem:[%s348 + $0x1e8] sm:$0xff]
        %v1075 = vld [vmem:[%s348 + $0x1f0] sm:$0xff]
        %v1076 = vld [vmem:[%s348 + $0x1f8] sm:$0xff]
        %1077 = vmatprep.subr.mxu0 %v1014
        %1078 = vmatpush1.msra.mxu0 %v1013
        %1079 = vmatprep.subr.mxu0 %v1018
        %1080 = vmatpush1.msra.mxu0 %v1017
        %1081 = vmatprep.subr.mxu0 %v1022
        %1082 = vmatpush1.msra.mxu0 %v1021
        %1083 = vmatprep.subr.mxu0 %v1026
        %1084 = vmatpush1.msra.mxu0 %v1025
        %1085 = vmatprep.subr.mxu0 %v1030
        %1086 = vmatpush1.msra.mxu0 %v1029
        %1087 = vmatprep.subr.mxu0 %v1034
        %1088 = vmatpush1.msra.mxu0 %v1033
        %1089 = vmatprep.subr.mxu0 %v1038
        %1090 = vmatpush1.msra.mxu0 %v1037
        %1091 = vmatprep.subr.mxu0 %v1042
        %1092 = vmatpush1.msra.mxu0 %v1041
        %1093 = vmatprep.subr.mxu0 %v1046
        %1094 = vmatpush1.msra.mxu0 %v1045
        %1095 = vmatprep.subr.mxu0 %v1050
        %1096 = vmatpush1.msra.mxu0 %v1049
        %1097 = vmatprep.subr.mxu0 %v1054
        %1098 = vmatpush1.msra.mxu0 %v1053
        %1099 = vmatprep.subr.mxu0 %v1058
        %1100 = vmatpush1.msra.mxu0 %v1057
        %1101 = vmatprep.subr.mxu0 %v1062
        %1102 = vmatpush1.msra.mxu0 %v1061
        %1103 = vmatprep.subr.mxu0 %v1066
        %1104 = vmatpush1.msra.mxu0 %v1065
        %1105 = vmatprep.subr.mxu0 %v1070
        %1106 = vmatpush1.msra.mxu0 %v1069
        %1107 = vmatprep.subr.mxu0 %v1074
        %1108 = vmatpush1.msra.mxu0 %v1073
        %1109 = vmatprep.subr.mxu0 0.0
        %1110 = vmatpush1.msra.mxu0 0.0
        %1111 = vmatprep.subr.mxu0 0.0
        %1112 = vmatpush1.msra.mxu0 0.0
        %1113 = vmatprep.subr.mxu0 0.0
        %1114 = vmatpush1.msra.mxu0 0.0
        %1115 = vmatprep.subr.mxu0 0.0
        %1116 = vmatpush1.msra.mxu0 0.0
        %1117 = vmatprep.subr.mxu0 0.0
        %1118 = vmatpush1.msra.mxu0 0.0
        %1119 = vmatprep.subr.mxu0 0.0
        %1120 = vmatpush1.msra.mxu0 0.0
        %1121 = vmatprep.subr.mxu0 0.0
        %1122 = vmatpush1.msra.mxu0 0.0
        %1123 = vmatprep.subr.mxu0 0.0
        %1124 = vmatpush1.msra.mxu0 0.0
        %1125 = vmatprep.subr.mxu0 0.0
        %1126 = vmatpush1.msra.mxu0 0.0
        %1127 = vmatprep.subr.mxu0 0.0
        %1128 = vmatpush1.msra.mxu0 0.0
        %1129 = vmatprep.subr.mxu0 0.0
        %1130 = vmatpush1.msra.mxu0 0.0
        %1131 = vmatprep.subr.mxu0 0.0
        %1132 = vmatpush1.msra.mxu0 0.0
        %1133 = vmatprep.subr.mxu0 0.0
        %1134 = vmatpush1.msra.mxu0 0.0
        %1135 = vmatprep.subr.mxu0 0.0
        %1136 = vmatpush1.msra.mxu0 0.0
        %1137 = vmatprep.subr.mxu0 0.0
        %1138 = vmatpush1.msra.mxu0 0.0
        %1139 = vmatprep.subr.mxu0 0.0
        %1140 = vmatpush1.msra.mxu0 0.0
        %1141 = vmatprep.mubr.f32.mxu0 0.0
        %1142 = vmatmul.mubr.f32.gmra.mrb[0].mxu0 %v1006
        %v1143 = vpop.f32.mrb[0].mxu0
        %v1144 = vadd.f32 0.0, %v1143
        %v1145 = vpop.f32.mrb[0].mxu0
        %v1146 = vadd.f32 0.0, %v1145
        %1147 = vdwg.mxu0
        %1148 = vmatprep.subr.mxu0 %v1016
        %1149 = vmatpush1.msra.mxu0 %v1015
        %1150 = vmatprep.subr.mxu0 %v1020
        %1151 = vmatpush1.msra.mxu0 %v1019
        %1152 = vmatprep.subr.mxu0 %v1024
        %1153 = vmatpush1.msra.mxu0 %v1023
        %1154 = vmatprep.subr.mxu0 %v1028
        %1155 = vmatpush1.msra.mxu0 %v1027
        %1156 = vmatprep.subr.mxu0 %v1032
        %1157 = vmatpush1.msra.mxu0 %v1031
        %1158 = vmatprep.subr.mxu0 %v1036
        %1159 = vmatpush1.msra.mxu0 %v1035
        %1160 = vmatprep.subr.mxu0 %v1040
        %1161 = vmatpush1.msra.mxu0 %v1039
        %1162 = vmatprep.subr.mxu0 %v1044
        %1163 = vmatpush1.msra.mxu0 %v1043
        %1164 = vmatprep.subr.mxu0 %v1048
        %1165 = vmatpush1.msra.mxu0 %v1047
        %1166 = vmatprep.subr.mxu0 %v1052
        %1167 = vmatpush1.msra.mxu0 %v1051
        %1168 = vmatprep.subr.mxu0 %v1056
        %1169 = vmatpush1.msra.mxu0 %v1055
        %1170 = vmatprep.subr.mxu0 %v1060
        %1171 = vmatpush1.msra.mxu0 %v1059
        %1172 = vmatprep.subr.mxu0 %v1064
        %1173 = vmatpush1.msra.mxu0 %v1063
        %1174 = vmatprep.subr.mxu0 %v1068
        %1175 = vmatpush1.msra.mxu0 %v1067
        %1176 = vmatprep.subr.mxu0 %v1072
        %1177 = vmatpush1.msra.mxu0 %v1071
        %1178 = vmatprep.subr.mxu0 %v1076
        %1179 = vmatpush1.msra.mxu0 %v1075
        %1180 = vmatprep.subr.mxu0 0.0
        %1181 = vmatpush1.msra.mxu0 0.0
        %1182 = vmatprep.subr.mxu0 0.0
        %1183 = vmatpush1.msra.mxu0 0.0
        %1184 = vmatprep.subr.mxu0 0.0
        %1185 = vmatpush1.msra.mxu0 0.0
        %1186 = vmatprep.subr.mxu0 0.0
        %1187 = vmatpush1.msra.mxu0 0.0
        %1188 = vmatprep.subr.mxu0 0.0
        %1189 = vmatpush1.msra.mxu0 0.0
        %1190 = vmatprep.subr.mxu0 0.0
        %1191 = vmatpush1.msra.mxu0 0.0
        %1192 = vmatprep.subr.mxu0 0.0
        %1193 = vmatpush1.msra.mxu0 0.0
        %1194 = vmatprep.subr.mxu0 0.0
        %1195 = vmatpush1.msra.mxu0 0.0
        %1196 = vmatprep.subr.mxu0 0.0
        %1197 = vmatpush1.msra.mxu0 0.0
        %1198 = vmatprep.subr.mxu0 0.0
        %1199 = vmatpush1.msra.mxu0 0.0
        %1200 = vmatprep.subr.mxu0 0.0
        %1201 = vmatpush1.msra.mxu0 0.0
        %1202 = vmatprep.subr.mxu0 0.0
        %1203 = vmatpush1.msra.mxu0 0.0
        %1204 = vmatprep.subr.mxu0 0.0
        %1205 = vmatpush1.msra.mxu0 0.0
        %1206 = vmatprep.subr.mxu0 0.0
        %1207 = vmatpush1.msra.mxu0 0.0
        %1208 = vmatprep.subr.mxu0 0.0
        %1209 = vmatpush1.msra.mxu0 0.0
        %1210 = vmatprep.subr.mxu0 0.0
        %1211 = vmatpush1.msra.mxu0 0.0
        %1212 = vmatprep.mubr.f32.mxu0 0.0
        %1213 = vmatmul.mubr.f32.gmra.mrb[0].mxu0 %v1006
        %v1214 = vpop.f32.mrb[0].mxu0
        %v1215 = vadd.f32 0.0, %v1214
        %v1216 = vpop.f32.mrb[0].mxu0
        %v1217 = vadd.f32 0.0, %v1216
        %1218 = vdwg.mxu0
        %v1219 = vadd.f32 %v1009, %v1144
        %v1220 = vadd.f32 %v1010, %v1146
        %v1221 = vadd.f32 %v1011, %v1215
        %v1222 = vadd.f32 %v1012, %v1217
        %v1223 = vxor.u32 %v1219, 2147483648
        %v1224 = vxor.u32 %v1220, 2147483648
        %v1225 = vxor.u32 %v1221, 2147483648
        %v1226 = vmul.f32 %v1223, 1.442695
        %v1227 = vpow.pop %v1226
        %v1228 = vmul.f32 %v1224, 1.442695
        %v1229 = vpow.pop %v1228
        %v1230 = vmul.f32 %v1225, 1.442695
        %v1231 = vpow.pop %v1230
        %v1232 = vadd.f32 %v1227, 1.0
        %v1233 = vadd.f32 %v1229, 1.0
        %v1234 = vadd.f32 %v1231, 1.0
        %v1235 = vrcp.pop %v1232
        %v1236 = vmul.f32 1.0, %v1235
        %v1237 = vrcp.pop %v1233
        %v1238 = vmul.f32 1.0, %v1237
        %v1239 = vrcp.pop %v1234
        %v1240 = vmul.f32 1.0, %v1239
        %v1241 = vtanh.pop %v1222
        %v1242 = vmul.f32 %v1238, %v1004
        %v1243 = vmul.f32 %v1236, %v1241
        %v1244 = vadd.f32 %v1242, %v1243
        %v1245 = vtanh.pop %v1244
        %v1246 = vmul.f32 %v1240, %v1245
        %s1247 = scalar_lea.vmem [#allocation2], 8
        %1248 = vst [vmem:[%s1247] sm:$0xff] %v1246
        %s1249 = scalar_lea.vmem [#allocation3], 64
        %v1250 = vld [vmem:[%s1249] sm:$0xff]
        %v1251 = vld [vmem:[%s1249 + $0x8] sm:$0xff]
        %v1252 = vld [vmem:[%s1249 + $0x10] sm:$0xff]
        %v1253 = vld [vmem:[%s1249 + $0x18] sm:$0xff]
        %v1254 = vld [vmem:[%s348] sm:$0xff]
        %v1255 = vld [vmem:[%s348 + $0x8] sm:$0xff]
        %v1256 = vld [vmem:[%s348 + $0x10] sm:$0xff]
        %v1257 = vld [vmem:[%s348 + $0x18] sm:$0xff]
        %v1258 = vld [vmem:[%s348 + $0x20] sm:$0xff]
        %v1259 = vld [vmem:[%s348 + $0x28] sm:$0xff]
        %v1260 = vld [vmem:[%s348 + $0x30] sm:$0xff]
        %v1261 = vld [vmem:[%s348 + $0x38] sm:$0xff]
        %v1262 = vld [vmem:[%s348 + $0x40] sm:$0xff]
        %v1263 = vld [vmem:[%s348 + $0x48] sm:$0xff]
        %v1264 = vld [vmem:[%s348 + $0x50] sm:$0xff]
        %v1265 = vld [vmem:[%s348 + $0x58] sm:$0xff]
        %v1266 = vld [vmem:[%s348 + $0x60] sm:$0xff]
        %v1267 = vld [vmem:[%s348 + $0x68] sm:$0xff]
        %v1268 = vld [vmem:[%s348 + $0x70] sm:$0xff]
        %v1269 = vld [vmem:[%s348 + $0x78] sm:$0xff]
        %v1270 = vld [vmem:[%s348 + $0x80] sm:$0xff]
        %v1271 = vld [vmem:[%s348 + $0x88] sm:$0xff]
        %v1272 = vld [vmem:[%s348 + $0x90] sm:$0xff]
        %v1273 = vld [vmem:[%s348 + $0x98] sm:$0xff]
        %v1274 = vld [vmem:[%s348 + $0xa0] sm:$0xff]
        %v1275 = vld [vmem:[%s348 + $0xa8] sm:$0xff]
        %v1276 = vld [vmem:[%s348 + $0xb0] sm:$0xff]
        %v1277 = vld [vmem:[%s348 + $0xb8] sm:$0xff]
        %v1278 = vld [vmem:[%s348 + $0xc0] sm:$0xff]
        %v1279 = vld [vmem:[%s348 + $0xc8] sm:$0xff]
        %v1280 = vld [vmem:[%s348 + $0xd0] sm:$0xff]
        %v1281 = vld [vmem:[%s348 + $0xd8] sm:$0xff]
        %v1282 = vld [vmem:[%s348 + $0xe0] sm:$0xff]
        %v1283 = vld [vmem:[%s348 + $0xe8] sm:$0xff]
        %v1284 = vld [vmem:[%s348 + $0xf0] sm:$0xff]
        %v1285 = vld [vmem:[%s348 + $0xf8] sm:$0xff]
        %v1286 = vld [vmem:[%s348 + $0x100] sm:$0xff]
        %v1287 = vld [vmem:[%s348 + $0x108] sm:$0xff]
        %v1288 = vld [vmem:[%s348 + $0x110] sm:$0xff]
        %v1289 = vld [vmem:[%s348 + $0x118] sm:$0xff]
        %v1290 = vld [vmem:[%s348 + $0x120] sm:$0xff]
        %v1291 = vld [vmem:[%s348 + $0x128] sm:$0xff]
        %v1292 = vld [vmem:[%s348 + $0x130] sm:$0xff]
        %v1293 = vld [vmem:[%s348 + $0x138] sm:$0xff]
        %v1294 = vld [vmem:[%s348 + $0x140] sm:$0xff]
        %v1295 = vld [vmem:[%s348 + $0x148] sm:$0xff]
        %v1296 = vld [vmem:[%s348 + $0x150] sm:$0xff]
        %v1297 = vld [vmem:[%s348 + $0x158] sm:$0xff]
        %v1298 = vld [vmem:[%s348 + $0x160] sm:$0xff]
        %v1299 = vld [vmem:[%s348 + $0x168] sm:$0xff]
        %v1300 = vld [vmem:[%s348 + $0x170] sm:$0xff]
        %v1301 = vld [vmem:[%s348 + $0x178] sm:$0xff]
        %v1302 = vld [vmem:[%s348 + $0x180] sm:$0xff]
        %v1303 = vld [vmem:[%s348 + $0x188] sm:$0xff]
        %v1304 = vld [vmem:[%s348 + $0x190] sm:$0xff]
        %v1305 = vld [vmem:[%s348 + $0x198] sm:$0xff]
        %v1306 = vld [vmem:[%s348 + $0x1a0] sm:$0xff]
        %v1307 = vld [vmem:[%s348 + $0x1a8] sm:$0xff]
        %v1308 = vld [vmem:[%s348 + $0x1b0] sm:$0xff]
        %v1309 = vld [vmem:[%s348 + $0x1b8] sm:$0xff]
        %v1310 = vld [vmem:[%s348 + $0x1c0] sm:$0xff]
        %v1311 = vld [vmem:[%s348 + $0x1c8] sm:$0xff]
        %v1312 = vld [vmem:[%s348 + $0x1d0] sm:$0xff]
        %v1313 = vld [vmem:[%s348 + $0x1d8] sm:$0xff]
        %v1314 = vld [vmem:[%s348 + $0x1e0] sm:$0xff]
        %v1315 = vld [vmem:[%s348 + $0x1e8] sm:$0xff]
        %v1316 = vld [vmem:[%s348 + $0x1f0] sm:$0xff]
        %v1317 = vld [vmem:[%s348 + $0x1f8] sm:$0xff]
        %1318 = vmatprep.subr.mxu0 %v1255
        %1319 = vmatpush1.msra.mxu0 %v1254
        %1320 = vmatprep.subr.mxu0 %v1259
        %1321 = vmatpush1.msra.mxu0 %v1258
        %1322 = vmatprep.subr.mxu0 %v1263
        %1323 = vmatpush1.msra.mxu0 %v1262
        %1324 = vmatprep.subr.mxu0 %v1267
        %1325 = vmatpush1.msra.mxu0 %v1266
        %1326 = vmatprep.subr.mxu0 %v1271
        %1327 = vmatpush1.msra.mxu0 %v1270
        %1328 = vmatprep.subr.mxu0 %v1275
        %1329 = vmatpush1.msra.mxu0 %v1274
        %1330 = vmatprep.subr.mxu0 %v1279
        %1331 = vmatpush1.msra.mxu0 %v1278
        %1332 = vmatprep.subr.mxu0 %v1283
        %1333 = vmatpush1.msra.mxu0 %v1282
        %1334 = vmatprep.subr.mxu0 %v1287
        %1335 = vmatpush1.msra.mxu0 %v1286
        %1336 = vmatprep.subr.mxu0 %v1291
        %1337 = vmatpush1.msra.mxu0 %v1290
        %1338 = vmatprep.subr.mxu0 %v1295
        %1339 = vmatpush1.msra.mxu0 %v1294
        %1340 = vmatprep.subr.mxu0 %v1299
        %1341 = vmatpush1.msra.mxu0 %v1298
        %1342 = vmatprep.subr.mxu0 %v1303
        %1343 = vmatpush1.msra.mxu0 %v1302
        %1344 = vmatprep.subr.mxu0 %v1307
        %1345 = vmatpush1.msra.mxu0 %v1306
        %1346 = vmatprep.subr.mxu0 %v1311
        %1347 = vmatpush1.msra.mxu0 %v1310
        %1348 = vmatprep.subr.mxu0 %v1315
        %1349 = vmatpush1.msra.mxu0 %v1314
        %1350 = vmatprep.subr.mxu0 0.0
        %1351 = vmatpush1.msra.mxu0 0.0
        %1352 = vmatprep.subr.mxu0 0.0
        %1353 = vmatpush1.msra.mxu0 0.0
        %1354 = vmatprep.subr.mxu0 0.0
        %1355 = vmatpush1.msra.mxu0 0.0
        %1356 = vmatprep.subr.mxu0 0.0
        %1357 = vmatpush1.msra.mxu0 0.0
        %1358 = vmatprep.subr.mxu0 0.0
        %1359 = vmatpush1.msra.mxu0 0.0
        %1360 = vmatprep.subr.mxu0 0.0
        %1361 = vmatpush1.msra.mxu0 0.0
        %1362 = vmatprep.subr.mxu0 0.0
        %1363 = vmatpush1.msra.mxu0 0.0
        %1364 = vmatprep.subr.mxu0 0.0
        %1365 = vmatpush1.msra.mxu0 0.0
        %1366 = vmatprep.subr.mxu0 0.0
        %1367 = vmatpush1.msra.mxu0 0.0
        %1368 = vmatprep.subr.mxu0 0.0
        %1369 = vmatpush1.msra.mxu0 0.0
        %1370 = vmatprep.subr.mxu0 0.0
        %1371 = vmatpush1.msra.mxu0 0.0
        %1372 = vmatprep.subr.mxu0 0.0
        %1373 = vmatpush1.msra.mxu0 0.0
        %1374 = vmatprep.subr.mxu0 0.0
        %1375 = vmatpush1.msra.mxu0 0.0
        %1376 = vmatprep.subr.mxu0 0.0
        %1377 = vmatpush1.msra.mxu0 0.0
        %1378 = vmatprep.subr.mxu0 0.0
        %1379 = vmatpush1.msra.mxu0 0.0
        %1380 = vmatprep.subr.mxu0 0.0
        %1381 = vmatpush1.msra.mxu0 0.0
        %1382 = vmatprep.mubr.f32.mxu0 0.0
        %1383 = vmatmul.mubr.f32.gmra.mrb[0].mxu0 %v1246
        %v1384 = vpop.f32.mrb[0].mxu0
        %v1385 = vadd.f32 0.0, %v1384
        %v1386 = vpop.f32.mrb[0].mxu0
        %v1387 = vadd.f32 0.0, %v1386
        %1388 = vdwg.mxu0
        %1389 = vmatprep.subr.mxu0 %v1257
        %1390 = vmatpush1.msra.mxu0 %v1256
        %1391 = vmatprep.subr.mxu0 %v1261
        %1392 = vmatpush1.msra.mxu0 %v1260
        %1393 = vmatprep.subr.mxu0 %v1265
        %1394 = vmatpush1.msra.mxu0 %v1264
        %1395 = vmatprep.subr.mxu0 %v1269
        %1396 = vmatpush1.msra.mxu0 %v1268
        %1397 = vmatprep.subr.mxu0 %v1273
        %1398 = vmatpush1.msra.mxu0 %v1272
        %1399 = vmatprep.subr.mxu0 %v1277
        %1400 = vmatpush1.msra.mxu0 %v1276
        %1401 = vmatprep.subr.mxu0 %v1281
        %1402 = vmatpush1.msra.mxu0 %v1280
        %1403 = vmatprep.subr.mxu0 %v1285
        %1404 = vmatpush1.msra.mxu0 %v1284
        %1405 = vmatprep.subr.mxu0 %v1289
        %1406 = vmatpush1.msra.mxu0 %v1288
        %1407 = vmatprep.subr.mxu0 %v1293
        %1408 = vmatpush1.msra.mxu0 %v1292
        %1409 = vmatprep.subr.mxu0 %v1297
        %1410 = vmatpush1.msra.mxu0 %v1296
        %1411 = vmatprep.subr.mxu0 %v1301
        %1412 = vmatpush1.msra.mxu0 %v1300
        %1413 = vmatprep.subr.mxu0 %v1305
        %1414 = vmatpush1.msra.mxu0 %v1304
        %1415 = vmatprep.subr.mxu0 %v1309
        %1416 = vmatpush1.msra.mxu0 %v1308
        %1417 = vmatprep.subr.mxu0 %v1313
        %1418 = vmatpush1.msra.mxu0 %v1312
        %1419 = vmatprep.subr.mxu0 %v1317
        %1420 = vmatpush1.msra.mxu0 %v1316
        %1421 = vmatprep.subr.mxu0 0.0
        %1422 = vmatpush1.msra.mxu0 0.0
        %1423 = vmatprep.subr.mxu0 0.0
        %1424 = vmatpush1.msra.mxu0 0.0
        %1425 = vmatprep.subr.mxu0 0.0
        %1426 = vmatpush1.msra.mxu0 0.0
        %1427 = vmatprep.subr.mxu0 0.0
        %1428 = vmatpush1.msra.mxu0 0.0
        %1429 = vmatprep.subr.mxu0 0.0
        %1430 = vmatpush1.msra.mxu0 0.0
        %1431 = vmatprep.subr.mxu0 0.0
        %1432 = vmatpush1.msra.mxu0 0.0
        %1433 = vmatprep.subr.mxu0 0.0
        %1434 = vmatpush1.msra.mxu0 0.0
        %1435 = vmatprep.subr.mxu0 0.0
        %1436 = vmatpush1.msra.mxu0 0.0
        %1437 = vmatprep.subr.mxu0 0.0
        %1438 = vmatpush1.msra.mxu0 0.0
        %1439 = vmatprep.subr.mxu0 0.0
        %1440 = vmatpush1.msra.mxu0 0.0
        %1441 = vmatprep.subr.mxu0 0.0
        %1442 = vmatpush1.msra.mxu0 0.0
        %1443 = vmatprep.subr.mxu0 0.0
        %1444 = vmatpush1.msra.mxu0 0.0
        %1445 = vmatprep.subr.mxu0 0.0
        %1446 = vmatpush1.msra.mxu0 0.0
        %1447 = vmatprep.subr.mxu0 0.0
        %1448 = vmatpush1.msra.mxu0 0.0
        %1449 = vmatprep.subr.mxu0 0.0
        %1450 = vmatpush1.msra.mxu0 0.0
        %1451 = vmatprep.subr.mxu0 0.0
        %1452 = vmatpush1.msra.mxu0 0.0
        %1453 = vmatprep.mubr.f32.mxu0 0.0
        %1454 = vmatmul.mubr.f32.gmra.mrb[0].mxu0 %v1246
        %v1455 = vpop.f32.mrb[0].mxu0
        %v1456 = vadd.f32 0.0, %v1455
        %v1457 = vpop.f32.mrb[0].mxu0
        %v1458 = vadd.f32 0.0, %v1457
        %1459 = vdwg.mxu0
        %v1460 = vadd.f32 %v1250, %v1385
        %v1461 = vadd.f32 %v1251, %v1387
        %v1462 = vadd.f32 %v1252, %v1456
        %v1463 = vadd.f32 %v1253, %v1458
        %v1464 = vxor.u32 %v1460, 2147483648
        %v1465 = vxor.u32 %v1461, 2147483648
        %v1466 = vxor.u32 %v1462, 2147483648
        %v1467 = vmul.f32 %v1464, 1.442695
        %v1468 = vpow.pop %v1467
        %v1469 = vmul.f32 %v1465, 1.442695
        %v1470 = vpow.pop %v1469
        %v1471 = vmul.f32 %v1466, 1.442695
        %v1472 = vpow.pop %v1471
        %v1473 = vadd.f32 %v1468, 1.0
        %v1474 = vadd.f32 %v1470, 1.0
        %v1475 = vadd.f32 %v1472, 1.0
        %v1476 = vrcp.pop %v1473
        %v1477 = vmul.f32 1.0, %v1476
        %v1478 = vrcp.pop %v1474
        %v1479 = vmul.f32 1.0, %v1478
        %v1480 = vrcp.pop %v1475
        %v1481 = vmul.f32 1.0, %v1480
        %v1482 = vtanh.pop %v1463
        %v1483 = vmul.f32 %v1479, %v1244
        %v1484 = vmul.f32 %v1477, %v1482
        %v1485 = vadd.f32 %v1483, %v1484
        %v1486 = vtanh.pop %v1485
        %v1487 = vmul.f32 %v1481, %v1486
        %s1488 = scalar_lea.vmem [#allocation2], 16
        %1489 = vst [vmem:[%s1488] sm:$0xff] %v1487
        %s1490 = scalar_lea.vmem [#allocation3], 96
        %v1491 = vld [vmem:[%s1490] sm:$0xff]
        %v1492 = vld [vmem:[%s1490 + $0x8] sm:$0xff]
        %v1493 = vld [vmem:[%s1490 + $0x10] sm:$0xff]
        %v1494 = vld [vmem:[%s1490 + $0x18] sm:$0xff]
        %v1495 = vld [vmem:[%s348] sm:$0xff]
        %v1496 = vld [vmem:[%s348 + $0x8] sm:$0xff]
        %v1497 = vld [vmem:[%s348 + $0x10] sm:$0xff]
        %v1498 = vld [vmem:[%s348 + $0x18] sm:$0xff]
        %v1499 = vld [vmem:[%s348 + $0x20] sm:$0xff]
        %v1500 = vld [vmem:[%s348 + $0x28] sm:$0xff]
        %v1501 = vld [vmem:[%s348 + $0x30] sm:$0xff]
        %v1502 = vld [vmem:[%s348 + $0x38] sm:$0xff]
        %v1503 = vld [vmem:[%s348 + $0x40] sm:$0xff]
        %v1504 = vld [vmem:[%s348 + $0x48] sm:$0xff]
        %v1505 = vld [vmem:[%s348 + $0x50] sm:$0xff]
        %v1506 = vld [vmem:[%s348 + $0x58] sm:$0xff]
        %v1507 = vld [vmem:[%s348 + $0x60] sm:$0xff]
        %v1508 = vld [vmem:[%s348 + $0x68] sm:$0xff]
        %v1509 = vld [vmem:[%s348 + $0x70] sm:$0xff]
        %v1510 = vld [vmem:[%s348 + $0x78] sm:$0xff]
        %v1511 = vld [vmem:[%s348 + $0x80] sm:$0xff]
        %v1512 = vld [vmem:[%s348 + $0x88] sm:$0xff]
        %v1513 = vld [vmem:[%s348 + $0x90] sm:$0xff]
        %v1514 = vld [vmem:[%s348 + $0x98] sm:$0xff]
        %v1515 = vld [vmem:[%s348 + $0xa0] sm:$0xff]
        %v1516 = vld [vmem:[%s348 + $0xa8] sm:$0xff]
        %v1517 = vld [vmem:[%s348 + $0xb0] sm:$0xff]
        %v1518 = vld [vmem:[%s348 + $0xb8] sm:$0xff]
        %v1519 = vld [vmem:[%s348 + $0xc0] sm:$0xff]
        %v1520 = vld [vmem:[%s348 + $0xc8] sm:$0xff]
        %v1521 = vld [vmem:[%s348 + $0xd0] sm:$0xff]
        %v1522 = vld [vmem:[%s348 + $0xd8] sm:$0xff]
        %v1523 = vld [vmem:[%s348 + $0xe0] sm:$0xff]
        %v1524 = vld [vmem:[%s348 + $0xe8] sm:$0xff]
        %v1525 = vld [vmem:[%s348 + $0xf0] sm:$0xff]
        %v1526 = vld [vmem:[%s348 + $0xf8] sm:$0xff]
        %v1527 = vld [vmem:[%s348 + $0x100] sm:$0xff]
        %v1528 = vld [vmem:[%s348 + $0x108] sm:$0xff]
        %v1529 = vld [vmem:[%s348 + $0x110] sm:$0xff]
        %v1530 = vld [vmem:[%s348 + $0x118] sm:$0xff]
        %v1531 = vld [vmem:[%s348 + $0x120] sm:$0xff]
        %v1532 = vld [vmem:[%s348 + $0x128] sm:$0xff]
        %v1533 = vld [vmem:[%s348 + $0x130] sm:$0xff]
        %v1534 = vld [vmem:[%s348 + $0x138] sm:$0xff]
        %v1535 = vld [vmem:[%s348 + $0x140] sm:$0xff]
        %v1536 = vld [vmem:[%s348 + $0x148] sm:$0xff]
        %v1537 = vld [vmem:[%s348 + $0x150] sm:$0xff]
        %v1538 = vld [vmem:[%s348 + $0x158] sm:$0xff]
        %v1539 = vld [vmem:[%s348 + $0x160] sm:$0xff]
        %v1540 = vld [vmem:[%s348 + $0x168] sm:$0xff]
        %v1541 = vld [vmem:[%s348 + $0x170] sm:$0xff]
        %v1542 = vld [vmem:[%s348 + $0x178] sm:$0xff]
        %v1543 = vld [vmem:[%s348 + $0x180] sm:$0xff]
        %v1544 = vld [vmem:[%s348 + $0x188] sm:$0xff]
        %v1545 = vld [vmem:[%s348 + $0x190] sm:$0xff]
        %v1546 = vld [vmem:[%s348 + $0x198] sm:$0xff]
        %v1547 = vld [vmem:[%s348 + $0x1a0] sm:$0xff]
        %v1548 = vld [vmem:[%s348 + $0x1a8] sm:$0xff]
        %v1549 = vld [vmem:[%s348 + $0x1b0] sm:$0xff]
        %v1550 = vld [vmem:[%s348 + $0x1b8] sm:$0xff]
        %v1551 = vld [vmem:[%s348 + $0x1c0] sm:$0xff]
        %v1552 = vld [vmem:[%s348 + $0x1c8] sm:$0xff]
        %v1553 = vld [vmem:[%s348 + $0x1d0] sm:$0xff]
        %v1554 = vld [vmem:[%s348 + $0x1d8] sm:$0xff]
        %v1555 = vld [vmem:[%s348 + $0x1e0] sm:$0xff]
        %v1556 = vld [vmem:[%s348 + $0x1e8] sm:$0xff]
        %v1557 = vld [vmem:[%s348 + $0x1f0] sm:$0xff]
        %v1558 = vld [vmem:[%s348 + $0x1f8] sm:$0xff]
        %1559 = vmatprep.subr.mxu0 %v1496
        %1560 = vmatpush1.msra.mxu0 %v1495
        %1561 = vmatprep.subr.mxu0 %v1500
        %1562 = vmatpush1.msra.mxu0 %v1499
        %1563 = vmatprep.subr.mxu0 %v1504
        %1564 = vmatpush1.msra.mxu0 %v1503
        %1565 = vmatprep.subr.mxu0 %v1508
        %1566 = vmatpush1.msra.mxu0 %v1507
        %1567 = vmatprep.subr.mxu0 %v1512
        %1568 = vmatpush1.msra.mxu0 %v1511
        %1569 = vmatprep.subr.mxu0 %v1516
        %1570 = vmatpush1.msra.mxu0 %v1515
        %1571 = vmatprep.subr.mxu0 %v1520
        %1572 = vmatpush1.msra.mxu0 %v1519
        %1573 = vmatprep.subr.mxu0 %v1524
        %1574 = vmatpush1.msra.mxu0 %v1523
        %1575 = vmatprep.subr.mxu0 %v1528
        %1576 = vmatpush1.msra.mxu0 %v1527
        %1577 = vmatprep.subr.mxu0 %v1532
        %1578 = vmatpush1.msra.mxu0 %v1531
        %1579 = vmatprep.subr.mxu0 %v1536
        %1580 = vmatpush1.msra.mxu0 %v1535
        %1581 = vmatprep.subr.mxu0 %v1540
        %1582 = vmatpush1.msra.mxu0 %v1539
        %1583 = vmatprep.subr.mxu0 %v1544
        %1584 = vmatpush1.msra.mxu0 %v1543
        %1585 = vmatprep.subr.mxu0 %v1548
        %1586 = vmatpush1.msra.mxu0 %v1547
        %1587 = vmatprep.subr.mxu0 %v1552
        %1588 = vmatpush1.msra.mxu0 %v1551
        %1589 = vmatprep.subr.mxu0 %v1556
        %1590 = vmatpush1.msra.mxu0 %v1555
        %1591 = vmatprep.subr.mxu0 0.0
        %1592 = vmatpush1.msra.mxu0 0.0
        %1593 = vmatprep.subr.mxu0 0.0
        %1594 = vmatpush1.msra.mxu0 0.0
        %1595 = vmatprep.subr.mxu0 0.0
        %1596 = vmatpush1.msra.mxu0 0.0
        %1597 = vmatprep.subr.mxu0 0.0
        %1598 = vmatpush1.msra.mxu0 0.0
        %1599 = vmatprep.subr.mxu0 0.0
        %1600 = vmatpush1.msra.mxu0 0.0
        %1601 = vmatprep.subr.mxu0 0.0
        %1602 = vmatpush1.msra.mxu0 0.0
        %1603 = vmatprep.subr.mxu0 0.0
        %1604 = vmatpush1.msra.mxu0 0.0
        %1605 = vmatprep.subr.mxu0 0.0
        %1606 = vmatpush1.msra.mxu0 0.0
        %1607 = vmatprep.subr.mxu0 0.0
        %1608 = vmatpush1.msra.mxu0 0.0
        %1609 = vmatprep.subr.mxu0 0.0
        %1610 = vmatpush1.msra.mxu0 0.0
        %1611 = vmatprep.subr.mxu0 0.0
        %1612 = vmatpush1.msra.mxu0 0.0
        %1613 = vmatprep.subr.mxu0 0.0
        %1614 = vmatpush1.msra.mxu0 0.0
        %1615 = vmatprep.subr.mxu0 0.0
        %1616 = vmatpush1.msra.mxu0 0.0
        %1617 = vmatprep.subr.mxu0 0.0
        %1618 = vmatpush1.msra.mxu0 0.0
        %1619 = vmatprep.subr.mxu0 0.0
        %1620 = vmatpush1.msra.mxu0 0.0
        %1621 = vmatprep.subr.mxu0 0.0
        %1622 = vmatpush1.msra.mxu0 0.0
        %1623 = vmatprep.mubr.f32.mxu0 0.0
        %1624 = vmatmul.mubr.f32.gmra.mrb[0].mxu0 %v1487
        %v1625 = vpop.f32.mrb[0].mxu0
        %v1626 = vadd.f32 0.0, %v1625
        %v1627 = vpop.f32.mrb[0].mxu0
        %v1628 = vadd.f32 0.0, %v1627
        %1629 = vdwg.mxu0
        %1630 = vmatprep.subr.mxu0 %v1498
        %1631 = vmatpush1.msra.mxu0 %v1497
        %1632 = vmatprep.subr.mxu0 %v1502
        %1633 = vmatpush1.msra.mxu0 %v1501
        %1634 = vmatprep.subr.mxu0 %v1506
        %1635 = vmatpush1.msra.mxu0 %v1505
        %1636 = vmatprep.subr.mxu0 %v1510
        %1637 = vmatpush1.msra.mxu0 %v1509
        %1638 = vmatprep.subr.mxu0 %v1514
        %1639 = vmatpush1.msra.mxu0 %v1513
        %1640 = vmatprep.subr.mxu0 %v1518
        %1641 = vmatpush1.msra.mxu0 %v1517
        %1642 = vmatprep.subr.mxu0 %v1522
        %1643 = vmatpush1.msra.mxu0 %v1521
        %1644 = vmatprep.subr.mxu0 %v1526
        %1645 = vmatpush1.msra.mxu0 %v1525
        %1646 = vmatprep.subr.mxu0 %v1530
        %1647 = vmatpush1.msra.mxu0 %v1529
        %1648 = vmatprep.subr.mxu0 %v1534
        %1649 = vmatpush1.msra.mxu0 %v1533
        %1650 = vmatprep.subr.mxu0 %v1538
        %1651 = vmatpush1.msra.mxu0 %v1537
        %1652 = vmatprep.subr.mxu0 %v1542
        %1653 = vmatpush1.msra.mxu0 %v1541
        %1654 = vmatprep.subr.mxu0 %v1546
        %1655 = vmatpush1.msra.mxu0 %v1545
        %1656 = vmatprep.subr.mxu0 %v1550
        %1657 = vmatpush1.msra.mxu0 %v1549
        %1658 = vmatprep.subr.mxu0 %v1554
        %1659 = vmatpush1.msra.mxu0 %v1553
        %1660 = vmatprep.subr.mxu0 %v1558
        %1661 = vmatpush1.msra.mxu0 %v1557
        %1662 = vmatprep.subr.mxu0 0.0
        %1663 = vmatpush1.msra.mxu0 0.0
        %1664 = vmatprep.subr.mxu0 0.0
        %1665 = vmatpush1.msra.mxu0 0.0
        %1666 = vmatprep.subr.mxu0 0.0
        %1667 = vmatpush1.msra.mxu0 0.0
        %1668 = vmatprep.subr.mxu0 0.0
        %1669 = vmatpush1.msra.mxu0 0.0
        %1670 = vmatprep.subr.mxu0 0.0
        %1671 = vmatpush1.msra.mxu0 0.0
        %1672 = vmatprep.subr.mxu0 0.0
        %1673 = vmatpush1.msra.mxu0 0.0
        %1674 = vmatprep.subr.mxu0 0.0
        %1675 = vmatpush1.msra.mxu0 0.0
        %1676 = vmatprep.subr.mxu0 0.0
        %1677 = vmatpush1.msra.mxu0 0.0
        %1678 = vmatprep.subr.mxu0 0.0
        %1679 = vmatpush1.msra.mxu0 0.0
        %1680 = vmatprep.subr.mxu0 0.0
        %1681 = vmatpush1.msra.mxu0 0.0
        %1682 = vmatprep.subr.mxu0 0.0
        %1683 = vmatpush1.msra.mxu0 0.0
        %1684 = vmatprep.subr.mxu0 0.0
        %1685 = vmatpush1.msra.mxu0 0.0
        %1686 = vmatprep.subr.mxu0 0.0
        %1687 = vmatpush1.msra.mxu0 0.0
        %1688 = vmatprep.subr.mxu0 0.0
        %1689 = vmatpush1.msra.mxu0 0.0
        %1690 = vmatprep.subr.mxu0 0.0
        %1691 = vmatpush1.msra.mxu0 0.0
        %1692 = vmatprep.subr.mxu0 0.0
        %1693 = vmatpush1.msra.mxu0 0.0
        %1694 = vmatprep.mubr.f32.mxu0 0.0
        %1695 = vmatmul.mubr.f32.gmra.mrb[0].mxu0 %v1487
        %v1696 = vpop.f32.mrb[0].mxu0
        %v1697 = vadd.f32 0.0, %v1696
        %v1698 = vpop.f32.mrb[0].mxu0
        %v1699 = vadd.f32 0.0, %v1698
        %1700 = vdwg.mxu0
        %v1701 = vadd.f32 %v1491, %v1626
        %v1702 = vadd.f32 %v1492, %v1628
        %v1703 = vadd.f32 %v1493, %v1697
        %v1704 = vadd.f32 %v1494, %v1699
        %v1705 = vxor.u32 %v1701, 2147483648
        %v1706 = vxor.u32 %v1702, 2147483648
        %v1707 = vxor.u32 %v1703, 2147483648
        %v1708 = vmul.f32 %v1705, 1.442695
        %v1709 = vpow.pop %v1708
        %v1710 = vmul.f32 %v1706, 1.442695
        %v1711 = vpow.pop %v1710
        %v1712 = vmul.f32 %v1707, 1.442695
        %v1713 = vpow.pop %v1712
        %v1714 = vadd.f32 %v1709, 1.0
        %v1715 = vadd.f32 %v1711, 1.0
        %v1716 = vadd.f32 %v1713, 1.0
        %v1717 = vrcp.pop %v1714
        %v1718 = vmul.f32 1.0, %v1717
        %v1719 = vrcp.pop %v1715
        %v1720 = vmul.f32 1.0, %v1719
        %v1721 = vrcp.pop %v1716
        %v1722 = vmul.f32 1.0, %v1721
        %v1723 = vtanh.pop %v1704
        %v1724 = vmul.f32 %v1720, %v1485
        %v1725 = vmul.f32 %v1718, %v1723
        %v1726 = vadd.f32 %v1724, %v1725
        %v1727 = vtanh.pop %v1726
        %v1728 = vmul.f32 %v1722, %v1727
        %s1729 = scalar_lea.vmem [#allocation2], 24
        %1730 = vst [vmem:[%s1729] sm:$0xff] %v1728
        %s1731 = scalar_lea.vmem [#allocation3], 128
        %v1732 = vld [vmem:[%s1731] sm:$0xff]
        %v1733 = vld [vmem:[%s1731 + $0x8] sm:$0xff]
        %v1734 = vld [vmem:[%s1731 + $0x10] sm:$0xff]
        %v1735 = vld [vmem:[%s1731 + $0x18] sm:$0xff]
        %v1736 = vld [vmem:[%s348] sm:$0xff]
        %v1737 = vld [vmem:[%s348 + $0x8] sm:$0xff]
        %v1738 = vld [vmem:[%s348 + $0x10] sm:$0xff]
        %v1739 = vld [vmem:[%s348 + $0x18] sm:$0xff]
        %v1740 = vld [vmem:[%s348 + $0x20] sm:$0xff]
        %v1741 = vld [vmem:[%s348 + $0x28] sm:$0xff]
        %v1742 = vld [vmem:[%s348 + $0x30] sm:$0xff]
        %v1743 = vld [vmem:[%s348 + $0x38] sm:$0xff]
        %v1744 = vld [vmem:[%s348 + $0x40] sm:$0xff]
        %v1745 = vld [vmem:[%s348 + $0x48] sm:$0xff]
        %v1746 = vld [vmem:[%s348 + $0x50] sm:$0xff]
        %v1747 = vld [vmem:[%s348 + $0x58] sm:$0xff]
        %v1748 = vld [vmem:[%s348 + $0x60] sm:$0xff]
        %v1749 = vld [vmem:[%s348 + $0x68] sm:$0xff]
        %v1750 = vld [vmem:[%s348 + $0x70] sm:$0xff]
        %v1751 = vld [vmem:[%s348 + $0x78] sm:$0xff]
        %v1752 = vld [vmem:[%s348 + $0x80] sm:$0xff]
        %v1753 = vld [vmem:[%s348 + $0x88] sm:$0xff]
        %v1754 = vld [vmem:[%s348 + $0x90] sm:$0xff]
        %v1755 = vld [vmem:[%s348 + $0x98] sm:$0xff]
        %v1756 = vld [vmem:[%s348 + $0xa0] sm:$0xff]
        %v1757 = vld [vmem:[%s348 + $0xa8] sm:$0xff]
        %v1758 = vld [vmem:[%s348 + $0xb0] sm:$0xff]
        %v1759 = vld [vmem:[%s348 + $0xb8] sm:$0xff]
        %v1760 = vld [vmem:[%s348 + $0xc0] sm:$0xff]
        %v1761 = vld [vmem:[%s348 + $0xc8] sm:$0xff]
        %v1762 = vld [vmem:[%s348 + $0xd0] sm:$0xff]
        %v1763 = vld [vmem:[%s348 + $0xd8] sm:$0xff]
        %v1764 = vld [vmem:[%s348 + $0xe0] sm:$0xff]
        %v1765 = vld [vmem:[%s348 + $0xe8] sm:$0xff]
        %v1766 = vld [vmem:[%s348 + $0xf0] sm:$0xff]
        %v1767 = vld [vmem:[%s348 + $0xf8] sm:$0xff]
        %v1768 = vld [vmem:[%s348 + $0x100] sm:$0xff]
        %v1769 = vld [vmem:[%s348 + $0x108] sm:$0xff]
        %v1770 = vld [vmem:[%s348 + $0x110] sm:$0xff]
        %v1771 = vld [vmem:[%s348 + $0x118] sm:$0xff]
        %v1772 = vld [vmem:[%s348 + $0x120] sm:$0xff]
        %v1773 = vld [vmem:[%s348 + $0x128] sm:$0xff]
        %v1774 = vld [vmem:[%s348 + $0x130] sm:$0xff]
        %v1775 = vld [vmem:[%s348 + $0x138] sm:$0xff]
        %v1776 = vld [vmem:[%s348 + $0x140] sm:$0xff]
        %v1777 = vld [vmem:[%s348 + $0x148] sm:$0xff]
        %v1778 = vld [vmem:[%s348 + $0x150] sm:$0xff]
        %v1779 = vld [vmem:[%s348 + $0x158] sm:$0xff]
        %v1780 = vld [vmem:[%s348 + $0x160] sm:$0xff]
        %v1781 = vld [vmem:[%s348 + $0x168] sm:$0xff]
        %v1782 = vld [vmem:[%s348 + $0x170] sm:$0xff]
        %v1783 = vld [vmem:[%s348 + $0x178] sm:$0xff]
        %v1784 = vld [vmem:[%s348 + $0x180] sm:$0xff]
        %v1785 = vld [vmem:[%s348 + $0x188] sm:$0xff]
        %v1786 = vld [vmem:[%s348 + $0x190] sm:$0xff]
        %v1787 = vld [vmem:[%s348 + $0x198] sm:$0xff]
        %v1788 = vld [vmem:[%s348 + $0x1a0] sm:$0xff]
        %v1789 = vld [vmem:[%s348 + $0x1a8] sm:$0xff]
        %v1790 = vld [vmem:[%s348 + $0x1b0] sm:$0xff]
        %v1791 = vld [vmem:[%s348 + $0x1b8] sm:$0xff]
        %v1792 = vld [vmem:[%s348 + $0x1c0] sm:$0xff]
        %v1793 = vld [vmem:[%s348 + $0x1c8] sm:$0xff]
        %v1794 = vld [vmem:[%s348 + $0x1d0] sm:$0xff]
        %v1795 = vld [vmem:[%s348 + $0x1d8] sm:$0xff]
        %v1796 = vld [vmem:[%s348 + $0x1e0] sm:$0xff]
        %v1797 = vld [vmem:[%s348 + $0x1e8] sm:$0xff]
        %v1798 = vld [vmem:[%s348 + $0x1f0] sm:$0xff]
        %v1799 = vld [vmem:[%s348 + $0x1f8] sm:$0xff]
        %1800 = vmatprep.subr.mxu0 %v1737
        %1801 = vmatpush1.msra.mxu0 %v1736
        %1802 = vmatprep.subr.mxu0 %v1741
        %1803 = vmatpush1.msra.mxu0 %v1740
        %1804 = vmatprep.subr.mxu0 %v1745
        %1805 = vmatpush1.msra.mxu0 %v1744
        %1806 = vmatprep.subr.mxu0 %v1749
        %1807 = vmatpush1.msra.mxu0 %v1748
        %1808 = vmatprep.subr.mxu0 %v1753
        %1809 = vmatpush1.msra.mxu0 %v1752
        %1810 = vmatprep.subr.mxu0 %v1757
        %1811 = vmatpush1.msra.mxu0 %v1756
        %1812 = vmatprep.subr.mxu0 %v1761
        %1813 = vmatpush1.msra.mxu0 %v1760
        %1814 = vmatprep.subr.mxu0 %v1765
        %1815 = vmatpush1.msra.mxu0 %v1764
        %1816 = vmatprep.subr.mxu0 %v1769
        %1817 = vmatpush1.msra.mxu0 %v1768
        %1818 = vmatprep.subr.mxu0 %v1773
        %1819 = vmatpush1.msra.mxu0 %v1772
        %1820 = vmatprep.subr.mxu0 %v1777
        %1821 = vmatpush1.msra.mxu0 %v1776
        %1822 = vmatprep.subr.mxu0 %v1781
        %1823 = vmatpush1.msra.mxu0 %v1780
        %1824 = vmatprep.subr.mxu0 %v1785
        %1825 = vmatpush1.msra.mxu0 %v1784
        %1826 = vmatprep.subr.mxu0 %v1789
        %1827 = vmatpush1.msra.mxu0 %v1788
        %1828 = vmatprep.subr.mxu0 %v1793
        %1829 = vmatpush1.msra.mxu0 %v1792
        %1830 = vmatprep.subr.mxu0 %v1797
        %1831 = vmatpush1.msra.mxu0 %v1796
        %1832 = vmatprep.subr.mxu0 0.0
        %1833 = vmatpush1.msra.mxu0 0.0
        %1834 = vmatprep.subr.mxu0 0.0
        %1835 = vmatpush1.msra.mxu0 0.0
        %1836 = vmatprep.subr.mxu0 0.0
        %1837 = vmatpush1.msra.mxu0 0.0
        %1838 = vmatprep.subr.mxu0 0.0
        %1839 = vmatpush1.msra.mxu0 0.0
        %1840 = vmatprep.subr.mxu0 0.0
        %1841 = vmatpush1.msra.mxu0 0.0
        %1842 = vmatprep.subr.mxu0 0.0
        %1843 = vmatpush1.msra.mxu0 0.0
        %1844 = vmatprep.subr.mxu0 0.0
        %1845 = vmatpush1.msra.mxu0 0.0
        %1846 = vmatprep.subr.mxu0 0.0
        %1847 = vmatpush1.msra.mxu0 0.0
        %1848 = vmatprep.subr.mxu0 0.0
        %1849 = vmatpush1.msra.mxu0 0.0
        %1850 = vmatprep.subr.mxu0 0.0
        %1851 = vmatpush1.msra.mxu0 0.0
        %1852 = vmatprep.subr.mxu0 0.0
        %1853 = vmatpush1.msra.mxu0 0.0
        %1854 = vmatprep.subr.mxu0 0.0
        %1855 = vmatpush1.msra.mxu0 0.0
        %1856 = vmatprep.subr.mxu0 0.0
        %1857 = vmatpush1.msra.mxu0 0.0
        %1858 = vmatprep.subr.mxu0 0.0
        %1859 = vmatpush1.msra.mxu0 0.0
        %1860 = vmatprep.subr.mxu0 0.0
        %1861 = vmatpush1.msra.mxu0 0.0
        %1862 = vmatprep.subr.mxu0 0.0
        %1863 = vmatpush1.msra.mxu0 0.0
        %1864 = vmatprep.mubr.f32.mxu0 0.0
        %1865 = vmatmul.mubr.f32.gmra.mrb[0].mxu0 %v1728
        %v1866 = vpop.f32.mrb[0].mxu0
        %v1867 = vadd.f32 0.0, %v1866
        %v1868 = vpop.f32.mrb[0].mxu0
        %v1869 = vadd.f32 0.0, %v1868
        %1870 = vdwg.mxu0
        %1871 = vmatprep.subr.mxu0 %v1739
        %1872 = vmatpush1.msra.mxu0 %v1738
        %1873 = vmatprep.subr.mxu0 %v1743
        %1874 = vmatpush1.msra.mxu0 %v1742
        %1875 = vmatprep.subr.mxu0 %v1747
        %1876 = vmatpush1.msra.mxu0 %v1746
        %1877 = vmatprep.subr.mxu0 %v1751
        %1878 = vmatpush1.msra.mxu0 %v1750
        %1879 = vmatprep.subr.mxu0 %v1755
        %1880 = vmatpush1.msra.mxu0 %v1754
        %1881 = vmatprep.subr.mxu0 %v1759
        %1882 = vmatpush1.msra.mxu0 %v1758
        %1883 = vmatprep.subr.mxu0 %v1763
        %1884 = vmatpush1.msra.mxu0 %v1762
        %1885 = vmatprep.subr.mxu0 %v1767
        %1886 = vmatpush1.msra.mxu0 %v1766
        %1887 = vmatprep.subr.mxu0 %v1771
        %1888 = vmatpush1.msra.mxu0 %v1770
        %1889 = vmatprep.subr.mxu0 %v1775
        %1890 = vmatpush1.msra.mxu0 %v1774
        %1891 = vmatprep.subr.mxu0 %v1779
        %1892 = vmatpush1.msra.mxu0 %v1778
        %1893 = vmatprep.subr.mxu0 %v1783
        %1894 = vmatpush1.msra.mxu0 %v1782
        %1895 = vmatprep.subr.mxu0 %v1787
        %1896 = vmatpush1.msra.mxu0 %v1786
        %1897 = vmatprep.subr.mxu0 %v1791
        %1898 = vmatpush1.msra.mxu0 %v1790
        %1899 = vmatprep.subr.mxu0 %v1795
        %1900 = vmatpush1.msra.mxu0 %v1794
        %1901 = vmatprep.subr.mxu0 %v1799
        %1902 = vmatpush1.msra.mxu0 %v1798
        %1903 = vmatprep.subr.mxu0 0.0
        %1904 = vmatpush1.msra.mxu0 0.0
        %1905 = vmatprep.subr.mxu0 0.0
        %1906 = vmatpush1.msra.mxu0 0.0
        %1907 = vmatprep.subr.mxu0 0.0
        %1908 = vmatpush1.msra.mxu0 0.0
        %1909 = vmatprep.subr.mxu0 0.0
        %1910 = vmatpush1.msra.mxu0 0.0
        %1911 = vmatprep.subr.mxu0 0.0
        %1912 = vmatpush1.msra.mxu0 0.0
        %1913 = vmatprep.subr.mxu0 0.0
        %1914 = vmatpush1.msra.mxu0 0.0
        %1915 = vmatprep.subr.mxu0 0.0
        %1916 = vmatpush1.msra.mxu0 0.0
        %1917 = vmatprep.subr.mxu0 0.0
        %1918 = vmatpush1.msra.mxu0 0.0
        %1919 = vmatprep.subr.mxu0 0.0
        %1920 = vmatpush1.msra.mxu0 0.0
        %1921 = vmatprep.subr.mxu0 0.0
        %1922 = vmatpush1.msra.mxu0 0.0
        %1923 = vmatprep.subr.mxu0 0.0
        %1924 = vmatpush1.msra.mxu0 0.0
        %1925 = vmatprep.subr.mxu0 0.0
        %1926 = vmatpush1.msra.mxu0 0.0
        %1927 = vmatprep.subr.mxu0 0.0
        %1928 = vmatpush1.msra.mxu0 0.0
        %1929 = vmatprep.subr.mxu0 0.0
        %1930 = vmatpush1.msra.mxu0 0.0
        %1931 = vmatprep.subr.mxu0 0.0
        %1932 = vmatpush1.msra.mxu0 0.0
        %1933 = vmatprep.subr.mxu0 0.0
        %1934 = vmatpush1.msra.mxu0 0.0
        %1935 = vmatprep.mubr.f32.mxu0 0.0
        %1936 = vmatmul.mubr.f32.gmra.mrb[0].mxu0 %v1728
        %v1937 = vpop.f32.mrb[0].mxu0
        %v1938 = vadd.f32 0.0, %v1937
        %v1939 = vpop.f32.mrb[0].mxu0
        %v1940 = vadd.f32 0.0, %v1939
        %1941 = vdwg.mxu0
        %v1942 = vadd.f32 %v1732, %v1867
        %v1943 = vadd.f32 %v1733, %v1869
        %v1944 = vadd.f32 %v1734, %v1938
        %v1945 = vadd.f32 %v1735, %v1940
        %v1946 = vxor.u32 %v1942, 2147483648
        %v1947 = vxor.u32 %v1943, 2147483648
        %v1948 = vxor.u32 %v1944, 2147483648
        %v1949 = vmul.f32 %v1946, 1.442695
        %v1950 = vpow.pop %v1949
        %v1951 = vmul.f32 %v1947, 1.442695
        %v1952 = vpow.pop %v1951
        %v1953 = vmul.f32 %v1948, 1.442695
        %v1954 = vpow.pop %v1953
        %v1955 = vadd.f32 %v1950, 1.0
        %v1956 = vadd.f32 %v1952, 1.0
        %v1957 = vadd.f32 %v1954, 1.0
        %v1958 = vrcp.pop %v1955
        %v1959 = vmul.f32 1.0, %v1958
        %v1960 = vrcp.pop %v1956
        %v1961 = vmul.f32 1.0, %v1960
        %v1962 = vrcp.pop %v1957
        %v1963 = vmul.f32 1.0, %v1962
        %v1964 = vtanh.pop %v1945
        %v1965 = vmul.f32 %v1961, %v1726
        %v1966 = vmul.f32 %v1959, %v1964
        %v1967 = vadd.f32 %v1965, %v1966
        %v1968 = vtanh.pop %v1967
        %v1969 = vmul.f32 %v1963, %v1968
        %s1970 = scalar_lea.vmem [#allocation2], 32
        %1971 = vst [vmem:[%s1970] sm:$0xff] %v1969
        %s1972 = scalar_lea.vmem [#allocation3], 160
        %v1973 = vld [vmem:[%s1972] sm:$0xff]
        %v1974 = vld [vmem:[%s1972 + $0x8] sm:$0xff]
        %v1975 = vld [vmem:[%s1972 + $0x10] sm:$0xff]
        %v1976 = vld [vmem:[%s1972 + $0x18] sm:$0xff]
        %v1977 = vld [vmem:[%s348] sm:$0xff]
        %v1978 = vld [vmem:[%s348 + $0x8] sm:$0xff]
        %v1979 = vld [vmem:[%s348 + $0x10] sm:$0xff]
        %v1980 = vld [vmem:[%s348 + $0x18] sm:$0xff]
        %v1981 = vld [vmem:[%s348 + $0x20] sm:$0xff]
        %v1982 = vld [vmem:[%s348 + $0x28] sm:$0xff]
        %v1983 = vld [vmem:[%s348 + $0x30] sm:$0xff]
        %v1984 = vld [vmem:[%s348 + $0x38] sm:$0xff]
        %v1985 = vld [vmem:[%s348 + $0x40] sm:$0xff]
        %v1986 = vld [vmem:[%s348 + $0x48] sm:$0xff]
        %v1987 = vld [vmem:[%s348 + $0x50] sm:$0xff]
        %v1988 = vld [vmem:[%s348 + $0x58] sm:$0xff]
        %v1989 = vld [vmem:[%s348 + $0x60] sm:$0xff]
        %v1990 = vld [vmem:[%s348 + $0x68] sm:$0xff]
        %v1991 = vld [vmem:[%s348 + $0x70] sm:$0xff]
        %v1992 = vld [vmem:[%s348 + $0x78] sm:$0xff]
        %v1993 = vld [vmem:[%s348 + $0x80] sm:$0xff]
        %v1994 = vld [vmem:[%s348 + $0x88] sm:$0xff]
        %v1995 = vld [vmem:[%s348 + $0x90] sm:$0xff]
        %v1996 = vld [vmem:[%s348 + $0x98] sm:$0xff]
        %v1997 = vld [vmem:[%s348 + $0xa0] sm:$0xff]
        %v1998 = vld [vmem:[%s348 + $0xa8] sm:$0xff]
        %v1999 = vld [vmem:[%s348 + $0xb0] sm:$0xff]
        %v2000 = vld [vmem:[%s348 + $0xb8] sm:$0xff]
        %v2001 = vld [vmem:[%s348 + $0xc0] sm:$0xff]
        %v2002 = vld [vmem:[%s348 + $0xc8] sm:$0xff]
        %v2003 = vld [vmem:[%s348 + $0xd0] sm:$0xff]
        %v2004 = vld [vmem:[%s348 + $0xd8] sm:$0xff]
        %v2005 = vld [vmem:[%s348 + $0xe0] sm:$0xff]
        %v2006 = vld [vmem:[%s348 + $0xe8] sm:$0xff]
        %v2007 = vld [vmem:[%s348 + $0xf0] sm:$0xff]
        %v2008 = vld [vmem:[%s348 + $0xf8] sm:$0xff]
        %v2009 = vld [vmem:[%s348 + $0x100] sm:$0xff]
        %v2010 = vld [vmem:[%s348 + $0x108] sm:$0xff]
        %v2011 = vld [vmem:[%s348 + $0x110] sm:$0xff]
        %v2012 = vld [vmem:[%s348 + $0x118] sm:$0xff]
        %v2013 = vld [vmem:[%s348 + $0x120] sm:$0xff]
        %v2014 = vld [vmem:[%s348 + $0x128] sm:$0xff]
        %v2015 = vld [vmem:[%s348 + $0x130] sm:$0xff]
        %v2016 = vld [vmem:[%s348 + $0x138] sm:$0xff]
        %v2017 = vld [vmem:[%s348 + $0x140] sm:$0xff]
        %v2018 = vld [vmem:[%s348 + $0x148] sm:$0xff]
        %v2019 = vld [vmem:[%s348 + $0x150] sm:$0xff]
        %v2020 = vld [vmem:[%s348 + $0x158] sm:$0xff]
        %v2021 = vld [vmem:[%s348 + $0x160] sm:$0xff]
        %v2022 = vld [vmem:[%s348 + $0x168] sm:$0xff]
        %v2023 = vld [vmem:[%s348 + $0x170] sm:$0xff]
        %v2024 = vld [vmem:[%s348 + $0x178] sm:$0xff]
        %v2025 = vld [vmem:[%s348 + $0x180] sm:$0xff]
        %v2026 = vld [vmem:[%s348 + $0x188] sm:$0xff]
        %v2027 = vld [vmem:[%s348 + $0x190] sm:$0xff]
        %v2028 = vld [vmem:[%s348 + $0x198] sm:$0xff]
        %v2029 = vld [vmem:[%s348 + $0x1a0] sm:$0xff]
        %v2030 = vld [vmem:[%s348 + $0x1a8] sm:$0xff]
        %v2031 = vld [vmem:[%s348 + $0x1b0] sm:$0xff]
        %v2032 = vld [vmem:[%s348 + $0x1b8] sm:$0xff]
        %v2033 = vld [vmem:[%s348 + $0x1c0] sm:$0xff]
        %v2034 = vld [vmem:[%s348 + $0x1c8] sm:$0xff]
        %v2035 = vld [vmem:[%s348 + $0x1d0] sm:$0xff]
        %v2036 = vld [vmem:[%s348 + $0x1d8] sm:$0xff]
        %v2037 = vld [vmem:[%s348 + $0x1e0] sm:$0xff]
        %v2038 = vld [vmem:[%s348 + $0x1e8] sm:$0xff]
        %v2039 = vld [vmem:[%s348 + $0x1f0] sm:$0xff]
        %v2040 = vld [vmem:[%s348 + $0x1f8] sm:$0xff]
        %2041 = vmatprep.subr.mxu0 %v1978
        %2042 = vmatpush1.msra.mxu0 %v1977
        %2043 = vmatprep.subr.mxu0 %v1982
        %2044 = vmatpush1.msra.mxu0 %v1981
        %2045 = vmatprep.subr.mxu0 %v1986
        %2046 = vmatpush1.msra.mxu0 %v1985
        %2047 = vmatprep.subr.mxu0 %v1990
        %2048 = vmatpush1.msra.mxu0 %v1989
        %2049 = vmatprep.subr.mxu0 %v1994
        %2050 = vmatpush1.msra.mxu0 %v1993
        %2051 = vmatprep.subr.mxu0 %v1998
        %2052 = vmatpush1.msra.mxu0 %v1997
        %2053 = vmatprep.subr.mxu0 %v2002
        %2054 = vmatpush1.msra.mxu0 %v2001
        %2055 = vmatprep.subr.mxu0 %v2006
        %2056 = vmatpush1.msra.mxu0 %v2005
        %2057 = vmatprep.subr.mxu0 %v2010
        %2058 = vmatpush1.msra.mxu0 %v2009
        %2059 = vmatprep.subr.mxu0 %v2014
        %2060 = vmatpush1.msra.mxu0 %v2013
        %2061 = vmatprep.subr.mxu0 %v2018
        %2062 = vmatpush1.msra.mxu0 %v2017
        %2063 = vmatprep.subr.mxu0 %v2022
        %2064 = vmatpush1.msra.mxu0 %v2021
        %2065 = vmatprep.subr.mxu0 %v2026
        %2066 = vmatpush1.msra.mxu0 %v2025
        %2067 = vmatprep.subr.mxu0 %v2030
        %2068 = vmatpush1.msra.mxu0 %v2029
        %2069 = vmatprep.subr.mxu0 %v2034
        %2070 = vmatpush1.msra.mxu0 %v2033
        %2071 = vmatprep.subr.mxu0 %v2038
        %2072 = vmatpush1.msra.mxu0 %v2037
        %2073 = vmatprep.subr.mxu0 0.0
        %2074 = vmatpush1.msra.mxu0 0.0
        %2075 = vmatprep.subr.mxu0 0.0
        %2076 = vmatpush1.msra.mxu0 0.0
        %2077 = vmatprep.subr.mxu0 0.0
        %2078 = vmatpush1.msra.mxu0 0.0
        %2079 = vmatprep.subr.mxu0 0.0
        %2080 = vmatpush1.msra.mxu0 0.0
        %2081 = vmatprep.subr.mxu0 0.0
        %2082 = vmatpush1.msra.mxu0 0.0
        %2083 = vmatprep.subr.mxu0 0.0
        %2084 = vmatpush1.msra.mxu0 0.0
        %2085 = vmatprep.subr.mxu0 0.0
        %2086 = vmatpush1.msra.mxu0 0.0
        %2087 = vmatprep.subr.mxu0 0.0
        %2088 = vmatpush1.msra.mxu0 0.0
        %2089 = vmatprep.subr.mxu0 0.0
        %2090 = vmatpush1.msra.mxu0 0.0
        %2091 = vmatprep.subr.mxu0 0.0
        %2092 = vmatpush1.msra.mxu0 0.0
        %2093 = vmatprep.subr.mxu0 0.0
        %2094 = vmatpush1.msra.mxu0 0.0
        %2095 = vmatprep.subr.mxu0 0.0
        %2096 = vmatpush1.msra.mxu0 0.0
        %2097 = vmatprep.subr.mxu0 0.0
        %2098 = vmatpush1.msra.mxu0 0.0
        %2099 = vmatprep.subr.mxu0 0.0
        %2100 = vmatpush1.msra.mxu0 0.0
        %2101 = vmatprep.subr.mxu0 0.0
        %2102 = vmatpush1.msra.mxu0 0.0
        %2103 = vmatprep.subr.mxu0 0.0
        %2104 = vmatpush1.msra.mxu0 0.0
        %2105 = vmatprep.mubr.f32.mxu0 0.0
        %2106 = vmatmul.mubr.f32.gmra.mrb[0].mxu0 %v1969
        %v2107 = vpop.f32.mrb[0].mxu0
        %v2108 = vadd.f32 0.0, %v2107
        %v2109 = vpop.f32.mrb[0].mxu0
        %v2110 = vadd.f32 0.0, %v2109
        %2111 = vdwg.mxu0
        %2112 = vmatprep.subr.mxu0 %v1980
        %2113 = vmatpush1.msra.mxu0 %v1979
        %2114 = vmatprep.subr.mxu0 %v1984
        %2115 = vmatpush1.msra.mxu0 %v1983
        %2116 = vmatprep.subr.mxu0 %v1988
        %2117 = vmatpush1.msra.mxu0 %v1987
        %2118 = vmatprep.subr.mxu0 %v1992
        %2119 = vmatpush1.msra.mxu0 %v1991
        %2120 = vmatprep.subr.mxu0 %v1996
        %2121 = vmatpush1.msra.mxu0 %v1995
        %2122 = vmatprep.subr.mxu0 %v2000
        %2123 = vmatpush1.msra.mxu0 %v1999
        %2124 = vmatprep.subr.mxu0 %v2004
        %2125 = vmatpush1.msra.mxu0 %v2003
        %2126 = vmatprep.subr.mxu0 %v2008
        %2127 = vmatpush1.msra.mxu0 %v2007
        %2128 = vmatprep.subr.mxu0 %v2012
        %2129 = vmatpush1.msra.mxu0 %v2011
        %2130 = vmatprep.subr.mxu0 %v2016
        %2131 = vmatpush1.msra.mxu0 %v2015
        %2132 = vmatprep.subr.mxu0 %v2020
        %2133 = vmatpush1.msra.mxu0 %v2019
        %2134 = vmatprep.subr.mxu0 %v2024
        %2135 = vmatpush1.msra.mxu0 %v2023
        %2136 = vmatprep.subr.mxu0 %v2028
        %2137 = vmatpush1.msra.mxu0 %v2027
        %2138 = vmatprep.subr.mxu0 %v2032
        %2139 = vmatpush1.msra.mxu0 %v2031
        %2140 = vmatprep.subr.mxu0 %v2036
        %2141 = vmatpush1.msra.mxu0 %v2035
        %2142 = vmatprep.subr.mxu0 %v2040
        %2143 = vmatpush1.msra.mxu0 %v2039
        %2144 = vmatprep.subr.mxu0 0.0
        %2145 = vmatpush1.msra.mxu0 0.0
        %2146 = vmatprep.subr.mxu0 0.0
        %2147 = vmatpush1.msra.mxu0 0.0
        %2148 = vmatprep.subr.mxu0 0.0
        %2149 = vmatpush1.msra.mxu0 0.0
        %2150 = vmatprep.subr.mxu0 0.0
        %2151 = vmatpush1.msra.mxu0 0.0
        %2152 = vmatprep.subr.mxu0 0.0
        %2153 = vmatpush1.msra.mxu0 0.0
        %2154 = vmatprep.subr.mxu0 0.0
        %2155 = vmatpush1.msra.mxu0 0.0
        %2156 = vmatprep.subr.mxu0 0.0
        %2157 = vmatpush1.msra.mxu0 0.0
        %2158 = vmatprep.subr.mxu0 0.0
        %2159 = vmatpush1.msra.mxu0 0.0
        %2160 = vmatprep.subr.mxu0 0.0
        %2161 = vmatpush1.msra.mxu0 0.0
        %2162 = vmatprep.subr.mxu0 0.0
        %2163 = vmatpush1.msra.mxu0 0.0
        %2164 = vmatprep.subr.mxu0 0.0
        %2165 = vmatpush1.msra.mxu0 0.0
        %2166 = vmatprep.subr.mxu0 0.0
        %2167 = vmatpush1.msra.mxu0 0.0
        %2168 = vmatprep.subr.mxu0 0.0
        %2169 = vmatpush1.msra.mxu0 0.0
        %2170 = vmatprep.subr.mxu0 0.0
        %2171 = vmatpush1.msra.mxu0 0.0
        %2172 = vmatprep.subr.mxu0 0.0
        %2173 = vmatpush1.msra.mxu0 0.0
        %2174 = vmatprep.subr.mxu0 0.0
        %2175 = vmatpush1.msra.mxu0 0.0
        %2176 = vmatprep.mubr.f32.mxu0 0.0
        %2177 = vmatmul.mubr.f32.gmra.mrb[0].mxu0 %v1969
        %v2178 = vpop.f32.mrb[0].mxu0
        %v2179 = vadd.f32 0.0, %v2178
        %v2180 = vpop.f32.mrb[0].mxu0
        %v2181 = vadd.f32 0.0, %v2180
        %2182 = vdwg.mxu0
        %v2183 = vadd.f32 %v1973, %v2108
        %v2184 = vadd.f32 %v1974, %v2110
        %v2185 = vadd.f32 %v1975, %v2179
        %v2186 = vadd.f32 %v1976, %v2181
        %v2187 = vxor.u32 %v2183, 2147483648
        %v2188 = vxor.u32 %v2184, 2147483648
        %v2189 = vxor.u32 %v2185, 2147483648
        %v2190 = vmul.f32 %v2187, 1.442695
        %v2191 = vpow.pop %v2190
        %v2192 = vmul.f32 %v2188, 1.442695
        %v2193 = vpow.pop %v2192
        %v2194 = vmul.f32 %v2189, 1.442695
        %v2195 = vpow.pop %v2194
        %v2196 = vadd.f32 %v2191, 1.0
        %v2197 = vadd.f32 %v2193, 1.0
        %v2198 = vadd.f32 %v2195, 1.0
        %v2199 = vrcp.pop %v2196
        %v2200 = vmul.f32 1.0, %v2199
        %v2201 = vrcp.pop %v2197
        %v2202 = vmul.f32 1.0, %v2201
        %v2203 = vrcp.pop %v2198
        %v2204 = vmul.f32 1.0, %v2203
        %v2205 = vtanh.pop %v2186
        %v2206 = vmul.f32 %v2202, %v1967
        %v2207 = vmul.f32 %v2200, %v2205
        %v2208 = vadd.f32 %v2206, %v2207
        %v2209 = vtanh.pop %v2208
        %v2210 = vmul.f32 %v2204, %v2209
        %s2211 = scalar_lea.vmem [#allocation2], 40
        %2212 = vst [vmem:[%s2211] sm:$0xff] %v2210
        %s2213 = scalar_lea.vmem [#allocation3], 192
        %v2214 = vld [vmem:[%s2213] sm:$0xff]
        %v2215 = vld [vmem:[%s2213 + $0x8] sm:$0xff]
        %v2216 = vld [vmem:[%s2213 + $0x10] sm:$0xff]
        %v2217 = vld [vmem:[%s2213 + $0x18] sm:$0xff]
        %v2218 = vld [vmem:[%s348] sm:$0xff]
        %v2219 = vld [vmem:[%s348 + $0x8] sm:$0xff]
        %v2220 = vld [vmem:[%s348 + $0x10] sm:$0xff]
        %v2221 = vld [vmem:[%s348 + $0x18] sm:$0xff]
        %v2222 = vld [vmem:[%s348 + $0x20] sm:$0xff]
        %v2223 = vld [vmem:[%s348 + $0x28] sm:$0xff]
        %v2224 = vld [vmem:[%s348 + $0x30] sm:$0xff]
        %v2225 = vld [vmem:[%s348 + $0x38] sm:$0xff]
        %v2226 = vld [vmem:[%s348 + $0x40] sm:$0xff]
        %v2227 = vld [vmem:[%s348 + $0x48] sm:$0xff]
        %v2228 = vld [vmem:[%s348 + $0x50] sm:$0xff]
        %v2229 = vld [vmem:[%s348 + $0x58] sm:$0xff]
        %v2230 = vld [vmem:[%s348 + $0x60] sm:$0xff]
        %v2231 = vld [vmem:[%s348 + $0x68] sm:$0xff]
        %v2232 = vld [vmem:[%s348 + $0x70] sm:$0xff]
        %v2233 = vld [vmem:[%s348 + $0x78] sm:$0xff]
        %v2234 = vld [vmem:[%s348 + $0x80] sm:$0xff]
        %v2235 = vld [vmem:[%s348 + $0x88] sm:$0xff]
        %v2236 = vld [vmem:[%s348 + $0x90] sm:$0xff]
        %v2237 = vld [vmem:[%s348 + $0x98] sm:$0xff]
        %v2238 = vld [vmem:[%s348 + $0xa0] sm:$0xff]
        %v2239 = vld [vmem:[%s348 + $0xa8] sm:$0xff]
        %v2240 = vld [vmem:[%s348 + $0xb0] sm:$0xff]
        %v2241 = vld [vmem:[%s348 + $0xb8] sm:$0xff]
        %v2242 = vld [vmem:[%s348 + $0xc0] sm:$0xff]
        %v2243 = vld [vmem:[%s348 + $0xc8] sm:$0xff]
        %v2244 = vld [vmem:[%s348 + $0xd0] sm:$0xff]
        %v2245 = vld [vmem:[%s348 + $0xd8] sm:$0xff]
        %v2246 = vld [vmem:[%s348 + $0xe0] sm:$0xff]
        %v2247 = vld [vmem:[%s348 + $0xe8] sm:$0xff]
        %v2248 = vld [vmem:[%s348 + $0xf0] sm:$0xff]
        %v2249 = vld [vmem:[%s348 + $0xf8] sm:$0xff]
        %v2250 = vld [vmem:[%s348 + $0x100] sm:$0xff]
        %v2251 = vld [vmem:[%s348 + $0x108] sm:$0xff]
        %v2252 = vld [vmem:[%s348 + $0x110] sm:$0xff]
        %v2253 = vld [vmem:[%s348 + $0x118] sm:$0xff]
        %v2254 = vld [vmem:[%s348 + $0x120] sm:$0xff]
        %v2255 = vld [vmem:[%s348 + $0x128] sm:$0xff]
        %v2256 = vld [vmem:[%s348 + $0x130] sm:$0xff]
        %v2257 = vld [vmem:[%s348 + $0x138] sm:$0xff]
        %v2258 = vld [vmem:[%s348 + $0x140] sm:$0xff]
        %v2259 = vld [vmem:[%s348 + $0x148] sm:$0xff]
        %v2260 = vld [vmem:[%s348 + $0x150] sm:$0xff]
        %v2261 = vld [vmem:[%s348 + $0x158] sm:$0xff]
        %v2262 = vld [vmem:[%s348 + $0x160] sm:$0xff]
        %v2263 = vld [vmem:[%s348 + $0x168] sm:$0xff]
        %v2264 = vld [vmem:[%s348 + $0x170] sm:$0xff]
        %v2265 = vld [vmem:[%s348 + $0x178] sm:$0xff]
        %v2266 = vld [vmem:[%s348 + $0x180] sm:$0xff]
        %v2267 = vld [vmem:[%s348 + $0x188] sm:$0xff]
        %v2268 = vld [vmem:[%s348 + $0x190] sm:$0xff]
        %v2269 = vld [vmem:[%s348 + $0x198] sm:$0xff]
        %v2270 = vld [vmem:[%s348 + $0x1a0] sm:$0xff]
        %v2271 = vld [vmem:[%s348 + $0x1a8] sm:$0xff]
        %v2272 = vld [vmem:[%s348 + $0x1b0] sm:$0xff]
        %v2273 = vld [vmem:[%s348 + $0x1b8] sm:$0xff]
        %v2274 = vld [vmem:[%s348 + $0x1c0] sm:$0xff]
        %v2275 = vld [vmem:[%s348 + $0x1c8] sm:$0xff]
        %v2276 = vld [vmem:[%s348 + $0x1d0] sm:$0xff]
        %v2277 = vld [vmem:[%s348 + $0x1d8] sm:$0xff]
        %v2278 = vld [vmem:[%s348 + $0x1e0] sm:$0xff]
        %v2279 = vld [vmem:[%s348 + $0x1e8] sm:$0xff]
        %v2280 = vld [vmem:[%s348 + $0x1f0] sm:$0xff]
        %v2281 = vld [vmem:[%s348 + $0x1f8] sm:$0xff]
        %2282 = vmatprep.subr.mxu0 %v2219
        %2283 = vmatpush1.msra.mxu0 %v2218
        %2284 = vmatprep.subr.mxu0 %v2223
        %2285 = vmatpush1.msra.mxu0 %v2222
        %2286 = vmatprep.subr.mxu0 %v2227
        %2287 = vmatpush1.msra.mxu0 %v2226
        %2288 = vmatprep.subr.mxu0 %v2231
        %2289 = vmatpush1.msra.mxu0 %v2230
        %2290 = vmatprep.subr.mxu0 %v2235
        %2291 = vmatpush1.msra.mxu0 %v2234
        %2292 = vmatprep.subr.mxu0 %v2239
        %2293 = vmatpush1.msra.mxu0 %v2238
        %2294 = vmatprep.subr.mxu0 %v2243
        %2295 = vmatpush1.msra.mxu0 %v2242
        %2296 = vmatprep.subr.mxu0 %v2247
        %2297 = vmatpush1.msra.mxu0 %v2246
        %2298 = vmatprep.subr.mxu0 %v2251
        %2299 = vmatpush1.msra.mxu0 %v2250
        %2300 = vmatprep.subr.mxu0 %v2255
        %2301 = vmatpush1.msra.mxu0 %v2254
        %2302 = vmatprep.subr.mxu0 %v2259
        %2303 = vmatpush1.msra.mxu0 %v2258
        %2304 = vmatprep.subr.mxu0 %v2263
        %2305 = vmatpush1.msra.mxu0 %v2262
        %2306 = vmatprep.subr.mxu0 %v2267
        %2307 = vmatpush1.msra.mxu0 %v2266
        %2308 = vmatprep.subr.mxu0 %v2271
        %2309 = vmatpush1.msra.mxu0 %v2270
        %2310 = vmatprep.subr.mxu0 %v2275
        %2311 = vmatpush1.msra.mxu0 %v2274
        %2312 = vmatprep.subr.mxu0 %v2279
        %2313 = vmatpush1.msra.mxu0 %v2278
        %2314 = vmatprep.subr.mxu0 0.0
        %2315 = vmatpush1.msra.mxu0 0.0
        %2316 = vmatprep.subr.mxu0 0.0
        %2317 = vmatpush1.msra.mxu0 0.0
        %2318 = vmatprep.subr.mxu0 0.0
        %2319 = vmatpush1.msra.mxu0 0.0
        %2320 = vmatprep.subr.mxu0 0.0
        %2321 = vmatpush1.msra.mxu0 0.0
        %2322 = vmatprep.subr.mxu0 0.0
        %2323 = vmatpush1.msra.mxu0 0.0
        %2324 = vmatprep.subr.mxu0 0.0
        %2325 = vmatpush1.msra.mxu0 0.0
        %2326 = vmatprep.subr.mxu0 0.0
        %2327 = vmatpush1.msra.mxu0 0.0
        %2328 = vmatprep.subr.mxu0 0.0
        %2329 = vmatpush1.msra.mxu0 0.0
        %2330 = vmatprep.subr.mxu0 0.0
        %2331 = vmatpush1.msra.mxu0 0.0
        %2332 = vmatprep.subr.mxu0 0.0
        %2333 = vmatpush1.msra.mxu0 0.0
        %2334 = vmatprep.subr.mxu0 0.0
        %2335 = vmatpush1.msra.mxu0 0.0
        %2336 = vmatprep.subr.mxu0 0.0
        %2337 = vmatpush1.msra.mxu0 0.0
        %2338 = vmatprep.subr.mxu0 0.0
        %2339 = vmatpush1.msra.mxu0 0.0
        %2340 = vmatprep.subr.mxu0 0.0
        %2341 = vmatpush1.msra.mxu0 0.0
        %2342 = vmatprep.subr.mxu0 0.0
        %2343 = vmatpush1.msra.mxu0 0.0
        %2344 = vmatprep.subr.mxu0 0.0
        %2345 = vmatpush1.msra.mxu0 0.0
        %2346 = vmatprep.mubr.f32.mxu0 0.0
        %2347 = vmatmul.mubr.f32.gmra.mrb[0].mxu0 %v2210
        %v2348 = vpop.f32.mrb[0].mxu0
        %v2349 = vadd.f32 0.0, %v2348
        %v2350 = vpop.f32.mrb[0].mxu0
        %v2351 = vadd.f32 0.0, %v2350
        %2352 = vdwg.mxu0
        %2353 = vmatprep.subr.mxu0 %v2221
        %2354 = vmatpush1.msra.mxu0 %v2220
        %2355 = vmatprep.subr.mxu0 %v2225
        %2356 = vmatpush1.msra.mxu0 %v2224
        %2357 = vmatprep.subr.mxu0 %v2229
        %2358 = vmatpush1.msra.mxu0 %v2228
        %2359 = vmatprep.subr.mxu0 %v2233
        %2360 = vmatpush1.msra.mxu0 %v2232
        %2361 = vmatprep.subr.mxu0 %v2237
        %2362 = vmatpush1.msra.mxu0 %v2236
        %2363 = vmatprep.subr.mxu0 %v2241
        %2364 = vmatpush1.msra.mxu0 %v2240
        %2365 = vmatprep.subr.mxu0 %v2245
        %2366 = vmatpush1.msra.mxu0 %v2244
        %2367 = vmatprep.subr.mxu0 %v2249
        %2368 = vmatpush1.msra.mxu0 %v2248
        %2369 = vmatprep.subr.mxu0 %v2253
        %2370 = vmatpush1.msra.mxu0 %v2252
        %2371 = vmatprep.subr.mxu0 %v2257
        %2372 = vmatpush1.msra.mxu0 %v2256
        %2373 = vmatprep.subr.mxu0 %v2261
        %2374 = vmatpush1.msra.mxu0 %v2260
        %2375 = vmatprep.subr.mxu0 %v2265
        %2376 = vmatpush1.msra.mxu0 %v2264
        %2377 = vmatprep.subr.mxu0 %v2269
        %2378 = vmatpush1.msra.mxu0 %v2268
        %2379 = vmatprep.subr.mxu0 %v2273
        %2380 = vmatpush1.msra.mxu0 %v2272
        %2381 = vmatprep.subr.mxu0 %v2277
        %2382 = vmatpush1.msra.mxu0 %v2276
        %2383 = vmatprep.subr.mxu0 %v2281
        %2384 = vmatpush1.msra.mxu0 %v2280
        %2385 = vmatprep.subr.mxu0 0.0
        %2386 = vmatpush1.msra.mxu0 0.0
        %2387 = vmatprep.subr.mxu0 0.0
        %2388 = vmatpush1.msra.mxu0 0.0
        %2389 = vmatprep.subr.mxu0 0.0
        %2390 = vmatpush1.msra.mxu0 0.0
        %2391 = vmatprep.subr.mxu0 0.0
        %2392 = vmatpush1.msra.mxu0 0.0
        %2393 = vmatprep.subr.mxu0 0.0
        %2394 = vmatpush1.msra.mxu0 0.0
        %2395 = vmatprep.subr.mxu0 0.0
        %2396 = vmatpush1.msra.mxu0 0.0
        %2397 = vmatprep.subr.mxu0 0.0
        %2398 = vmatpush1.msra.mxu0 0.0
        %2399 = vmatprep.subr.mxu0 0.0
        %2400 = vmatpush1.msra.mxu0 0.0
        %2401 = vmatprep.subr.mxu0 0.0
        %2402 = vmatpush1.msra.mxu0 0.0
        %2403 = vmatprep.subr.mxu0 0.0
        %2404 = vmatpush1.msra.mxu0 0.0
        %2405 = vmatprep.subr.mxu0 0.0
        %2406 = vmatpush1.msra.mxu0 0.0
        %2407 = vmatprep.subr.mxu0 0.0
        %2408 = vmatpush1.msra.mxu0 0.0
        %2409 = vmatprep.subr.mxu0 0.0
        %2410 = vmatpush1.msra.mxu0 0.0
        %2411 = vmatprep.subr.mxu0 0.0
        %2412 = vmatpush1.msra.mxu0 0.0
        %2413 = vmatprep.subr.mxu0 0.0
        %2414 = vmatpush1.msra.mxu0 0.0
        %2415 = vmatprep.subr.mxu0 0.0
        %2416 = vmatpush1.msra.mxu0 0.0
        %2417 = vmatprep.mubr.f32.mxu0 0.0
        %2418 = vmatmul.mubr.f32.gmra.mrb[0].mxu0 %v2210
        %v2419 = vpop.f32.mrb[0].mxu0
        %v2420 = vadd.f32 0.0, %v2419
        %v2421 = vpop.f32.mrb[0].mxu0
        %v2422 = vadd.f32 0.0, %v2421
        %2423 = vdwg.mxu0
        %v2424 = vadd.f32 %v2214, %v2349
        %v2425 = vadd.f32 %v2215, %v2351
        %v2426 = vadd.f32 %v2216, %v2420
        %v2427 = vadd.f32 %v2217, %v2422
        %v2428 = vxor.u32 %v2424, 2147483648
        %v2429 = vxor.u32 %v2425, 2147483648
        %v2430 = vxor.u32 %v2426, 2147483648
        %v2431 = vmul.f32 %v2428, 1.442695
        %v2432 = vpow.pop %v2431
        %v2433 = vmul.f32 %v2429, 1.442695
        %v2434 = vpow.pop %v2433
        %v2435 = vmul.f32 %v2430, 1.442695
        %v2436 = vpow.pop %v2435
        %v2437 = vadd.f32 %v2432, 1.0
        %v2438 = vadd.f32 %v2434, 1.0
        %v2439 = vadd.f32 %v2436, 1.0
        %v2440 = vrcp.pop %v2437
        %v2441 = vmul.f32 1.0, %v2440
        %v2442 = vrcp.pop %v2438
        %v2443 = vmul.f32 1.0, %v2442
        %v2444 = vrcp.pop %v2439
        %v2445 = vmul.f32 1.0, %v2444
        %v2446 = vtanh.pop %v2427
        %v2447 = vmul.f32 %v2443, %v2208
        %v2448 = vmul.f32 %v2441, %v2446
        %v2449 = vadd.f32 %v2447, %v2448
        %v2450 = vtanh.pop %v2449
        %v2451 = vmul.f32 %v2445, %v2450
        %s2452 = scalar_lea.vmem [#allocation2], 48
        %2453 = vst [vmem:[%s2452] sm:$0xff] %v2451
        %s2454 = scalar_lea.vmem [#allocation3], 224
        %v2455 = vld [vmem:[%s2454] sm:$0xff]
        %v2456 = vld [vmem:[%s2454 + $0x8] sm:$0xff]
        %v2457 = vld [vmem:[%s2454 + $0x10] sm:$0xff]
        %v2458 = vld [vmem:[%s2454 + $0x18] sm:$0xff]
        %v2459 = vld [vmem:[%s348] sm:$0xff]
        %v2460 = vld [vmem:[%s348 + $0x8] sm:$0xff]
        %v2461 = vld [vmem:[%s348 + $0x10] sm:$0xff]
        %v2462 = vld [vmem:[%s348 + $0x18] sm:$0xff]
        %v2463 = vld [vmem:[%s348 + $0x20] sm:$0xff]
        %v2464 = vld [vmem:[%s348 + $0x28] sm:$0xff]
        %v2465 = vld [vmem:[%s348 + $0x30] sm:$0xff]
        %v2466 = vld [vmem:[%s348 + $0x38] sm:$0xff]
        %v2467 = vld [vmem:[%s348 + $0x40] sm:$0xff]
        %v2468 = vld [vmem:[%s348 + $0x48] sm:$0xff]
        %v2469 = vld [vmem:[%s348 + $0x50] sm:$0xff]
        %v2470 = vld [vmem:[%s348 + $0x58] sm:$0xff]
        %v2471 = vld [vmem:[%s348 + $0x60] sm:$0xff]
        %v2472 = vld [vmem:[%s348 + $0x68] sm:$0xff]
        %v2473 = vld [vmem:[%s348 + $0x70] sm:$0xff]
        %v2474 = vld [vmem:[%s348 + $0x78] sm:$0xff]
        %v2475 = vld [vmem:[%s348 + $0x80] sm:$0xff]
        %v2476 = vld [vmem:[%s348 + $0x88] sm:$0xff]
        %v2477 = vld [vmem:[%s348 + $0x90] sm:$0xff]
        %v2478 = vld [vmem:[%s348 + $0x98] sm:$0xff]
        %v2479 = vld [vmem:[%s348 + $0xa0] sm:$0xff]
        %v2480 = vld [vmem:[%s348 + $0xa8] sm:$0xff]
        %v2481 = vld [vmem:[%s348 + $0xb0] sm:$0xff]
        %v2482 = vld [vmem:[%s348 + $0xb8] sm:$0xff]
        %v2483 = vld [vmem:[%s348 + $0xc0] sm:$0xff]
        %v2484 = vld [vmem:[%s348 + $0xc8] sm:$0xff]
        %v2485 = vld [vmem:[%s348 + $0xd0] sm:$0xff]
        %v2486 = vld [vmem:[%s348 + $0xd8] sm:$0xff]
        %v2487 = vld [vmem:[%s348 + $0xe0] sm:$0xff]
        %v2488 = vld [vmem:[%s348 + $0xe8] sm:$0xff]
        %v2489 = vld [vmem:[%s348 + $0xf0] sm:$0xff]
        %v2490 = vld [vmem:[%s348 + $0xf8] sm:$0xff]
        %v2491 = vld [vmem:[%s348 + $0x100] sm:$0xff]
        %v2492 = vld [vmem:[%s348 + $0x108] sm:$0xff]
        %v2493 = vld [vmem:[%s348 + $0x110] sm:$0xff]
        %v2494 = vld [vmem:[%s348 + $0x118] sm:$0xff]
        %v2495 = vld [vmem:[%s348 + $0x120] sm:$0xff]
        %v2496 = vld [vmem:[%s348 + $0x128] sm:$0xff]
        %v2497 = vld [vmem:[%s348 + $0x130] sm:$0xff]
        %v2498 = vld [vmem:[%s348 + $0x138] sm:$0xff]
        %v2499 = vld [vmem:[%s348 + $0x140] sm:$0xff]
        %v2500 = vld [vmem:[%s348 + $0x148] sm:$0xff]
        %v2501 = vld [vmem:[%s348 + $0x150] sm:$0xff]
        %v2502 = vld [vmem:[%s348 + $0x158] sm:$0xff]
        %v2503 = vld [vmem:[%s348 + $0x160] sm:$0xff]
        %v2504 = vld [vmem:[%s348 + $0x168] sm:$0xff]
        %v2505 = vld [vmem:[%s348 + $0x170] sm:$0xff]
        %v2506 = vld [vmem:[%s348 + $0x178] sm:$0xff]
        %v2507 = vld [vmem:[%s348 + $0x180] sm:$0xff]
        %v2508 = vld [vmem:[%s348 + $0x188] sm:$0xff]
        %v2509 = vld [vmem:[%s348 + $0x190] sm:$0xff]
        %v2510 = vld [vmem:[%s348 + $0x198] sm:$0xff]
        %v2511 = vld [vmem:[%s348 + $0x1a0] sm:$0xff]
        %v2512 = vld [vmem:[%s348 + $0x1a8] sm:$0xff]
        %v2513 = vld [vmem:[%s348 + $0x1b0] sm:$0xff]
        %v2514 = vld [vmem:[%s348 + $0x1b8] sm:$0xff]
        %v2515 = vld [vmem:[%s348 + $0x1c0] sm:$0xff]
        %v2516 = vld [vmem:[%s348 + $0x1c8] sm:$0xff]
        %v2517 = vld [vmem:[%s348 + $0x1d0] sm:$0xff]
        %v2518 = vld [vmem:[%s348 + $0x1d8] sm:$0xff]
        %v2519 = vld [vmem:[%s348 + $0x1e0] sm:$0xff]
        %v2520 = vld [vmem:[%s348 + $0x1e8] sm:$0xff]
        %v2521 = vld [vmem:[%s348 + $0x1f0] sm:$0xff]
        %v2522 = vld [vmem:[%s348 + $0x1f8] sm:$0xff]
        %2523 = vmatprep.subr.mxu0 %v2460
        %2524 = vmatpush1.msra.mxu0 %v2459
        %2525 = vmatprep.subr.mxu0 %v2464
        %2526 = vmatpush1.msra.mxu0 %v2463
        %2527 = vmatprep.subr.mxu0 %v2468
        %2528 = vmatpush1.msra.mxu0 %v2467
        %2529 = vmatprep.subr.mxu0 %v2472
        %2530 = vmatpush1.msra.mxu0 %v2471
        %2531 = vmatprep.subr.mxu0 %v2476
        %2532 = vmatpush1.msra.mxu0 %v2475
        %2533 = vmatprep.subr.mxu0 %v2480
        %2534 = vmatpush1.msra.mxu0 %v2479
        %2535 = vmatprep.subr.mxu0 %v2484
        %2536 = vmatpush1.msra.mxu0 %v2483
        %2537 = vmatprep.subr.mxu0 %v2488
        %2538 = vmatpush1.msra.mxu0 %v2487
        %2539 = vmatprep.subr.mxu0 %v2492
        %2540 = vmatpush1.msra.mxu0 %v2491
        %2541 = vmatprep.subr.mxu0 %v2496
        %2542 = vmatpush1.msra.mxu0 %v2495
        %2543 = vmatprep.subr.mxu0 %v2500
        %2544 = vmatpush1.msra.mxu0 %v2499
        %2545 = vmatprep.subr.mxu0 %v2504
        %2546 = vmatpush1.msra.mxu0 %v2503
        %2547 = vmatprep.subr.mxu0 %v2508
        %2548 = vmatpush1.msra.mxu0 %v2507
        %2549 = vmatprep.subr.mxu0 %v2512
        %2550 = vmatpush1.msra.mxu0 %v2511
        %2551 = vmatprep.subr.mxu0 %v2516
        %2552 = vmatpush1.msra.mxu0 %v2515
        %2553 = vmatprep.subr.mxu0 %v2520
        %2554 = vmatpush1.msra.mxu0 %v2519
        %2555 = vmatprep.subr.mxu0 0.0
        %2556 = vmatpush1.msra.mxu0 0.0
        %2557 = vmatprep.subr.mxu0 0.0
        %2558 = vmatpush1.msra.mxu0 0.0
        %2559 = vmatprep.subr.mxu0 0.0
        %2560 = vmatpush1.msra.mxu0 0.0
        %2561 = vmatprep.subr.mxu0 0.0
        %2562 = vmatpush1.msra.mxu0 0.0
        %2563 = vmatprep.subr.mxu0 0.0
        %2564 = vmatpush1.msra.mxu0 0.0
        %2565 = vmatprep.subr.mxu0 0.0
        %2566 = vmatpush1.msra.mxu0 0.0
        %2567 = vmatprep.subr.mxu0 0.0
        %2568 = vmatpush1.msra.mxu0 0.0
        %2569 = vmatprep.subr.mxu0 0.0
        %2570 = vmatpush1.msra.mxu0 0.0
        %2571 = vmatprep.subr.mxu0 0.0
        %2572 = vmatpush1.msra.mxu0 0.0
        %2573 = vmatprep.subr.mxu0 0.0
        %2574 = vmatpush1.msra.mxu0 0.0
        %2575 = vmatprep.subr.mxu0 0.0
        %2576 = vmatpush1.msra.mxu0 0.0
        %2577 = vmatprep.subr.mxu0 0.0
        %2578 = vmatpush1.msra.mxu0 0.0
        %2579 = vmatprep.subr.mxu0 0.0
        %2580 = vmatpush1.msra.mxu0 0.0
        %2581 = vmatprep.subr.mxu0 0.0
        %2582 = vmatpush1.msra.mxu0 0.0
        %2583 = vmatprep.subr.mxu0 0.0
        %2584 = vmatpush1.msra.mxu0 0.0
        %2585 = vmatprep.subr.mxu0 0.0
        %2586 = vmatpush1.msra.mxu0 0.0
        %2587 = vmatprep.mubr.f32.mxu0 0.0
        %2588 = vmatmul.mubr.f32.gmra.mrb[0].mxu0 %v2451
        %v2589 = vpop.f32.mrb[0].mxu0
        %v2590 = vadd.f32 0.0, %v2589
        %v2591 = vpop.f32.mrb[0].mxu0
        %v2592 = vadd.f32 0.0, %v2591
        %2593 = vdwg.mxu0
        %2594 = vmatprep.subr.mxu0 %v2462
        %2595 = vmatpush1.msra.mxu0 %v2461
        %2596 = vmatprep.subr.mxu0 %v2466
        %2597 = vmatpush1.msra.mxu0 %v2465
        %2598 = vmatprep.subr.mxu0 %v2470
        %2599 = vmatpush1.msra.mxu0 %v2469
        %2600 = vmatprep.subr.mxu0 %v2474
        %2601 = vmatpush1.msra.mxu0 %v2473
        %2602 = vmatprep.subr.mxu0 %v2478
        %2603 = vmatpush1.msra.mxu0 %v2477
        %2604 = vmatprep.subr.mxu0 %v2482
        %2605 = vmatpush1.msra.mxu0 %v2481
        %2606 = vmatprep.subr.mxu0 %v2486
        %2607 = vmatpush1.msra.mxu0 %v2485
        %2608 = vmatprep.subr.mxu0 %v2490
        %2609 = vmatpush1.msra.mxu0 %v2489
        %2610 = vmatprep.subr.mxu0 %v2494
        %2611 = vmatpush1.msra.mxu0 %v2493
        %2612 = vmatprep.subr.mxu0 %v2498
        %2613 = vmatpush1.msra.mxu0 %v2497
        %2614 = vmatprep.subr.mxu0 %v2502
        %2615 = vmatpush1.msra.mxu0 %v2501
        %2616 = vmatprep.subr.mxu0 %v2506
        %2617 = vmatpush1.msra.mxu0 %v2505
        %2618 = vmatprep.subr.mxu0 %v2510
        %2619 = vmatpush1.msra.mxu0 %v2509
        %2620 = vmatprep.subr.mxu0 %v2514
        %2621 = vmatpush1.msra.mxu0 %v2513
        %2622 = vmatprep.subr.mxu0 %v2518
        %2623 = vmatpush1.msra.mxu0 %v2517
        %2624 = vmatprep.subr.mxu0 %v2522
        %2625 = vmatpush1.msra.mxu0 %v2521
        %2626 = vmatprep.subr.mxu0 0.0
        %2627 = vmatpush1.msra.mxu0 0.0
        %2628 = vmatprep.subr.mxu0 0.0
        %2629 = vmatpush1.msra.mxu0 0.0
        %2630 = vmatprep.subr.mxu0 0.0
        %2631 = vmatpush1.msra.mxu0 0.0
        %2632 = vmatprep.subr.mxu0 0.0
        %2633 = vmatpush1.msra.mxu0 0.0
        %2634 = vmatprep.subr.mxu0 0.0
        %2635 = vmatpush1.msra.mxu0 0.0
        %2636 = vmatprep.subr.mxu0 0.0
        %2637 = vmatpush1.msra.mxu0 0.0
        %2638 = vmatprep.subr.mxu0 0.0
        %2639 = vmatpush1.msra.mxu0 0.0
        %2640 = vmatprep.subr.mxu0 0.0
        %2641 = vmatpush1.msra.mxu0 0.0
        %2642 = vmatprep.subr.mxu0 0.0
        %2643 = vmatpush1.msra.mxu0 0.0
        %2644 = vmatprep.subr.mxu0 0.0
        %2645 = vmatpush1.msra.mxu0 0.0
        %2646 = vmatprep.subr.mxu0 0.0
        %2647 = vmatpush1.msra.mxu0 0.0
        %2648 = vmatprep.subr.mxu0 0.0
        %2649 = vmatpush1.msra.mxu0 0.0
        %2650 = vmatprep.subr.mxu0 0.0
        %2651 = vmatpush1.msra.mxu0 0.0
        %2652 = vmatprep.subr.mxu0 0.0
        %2653 = vmatpush1.msra.mxu0 0.0
        %2654 = vmatprep.subr.mxu0 0.0
        %2655 = vmatpush1.msra.mxu0 0.0
        %2656 = vmatprep.subr.mxu0 0.0
        %2657 = vmatpush1.msra.mxu0 0.0
        %2658 = vmatprep.mubr.f32.mxu0 0.0
        %2659 = vmatmul.mubr.f32.gmra.mrb[0].mxu0 %v2451
        %v2660 = vpop.f32.mrb[0].mxu0
        %v2661 = vadd.f32 0.0, %v2660
        %v2662 = vpop.f32.mrb[0].mxu0
        %v2663 = vadd.f32 0.0, %v2662
        %2664 = vdwg.mxu0
        %v2665 = vadd.f32 %v2455, %v2590
        %v2666 = vadd.f32 %v2456, %v2592
        %v2667 = vadd.f32 %v2457, %v2661
        %v2668 = vadd.f32 %v2458, %v2663
        %v2669 = vxor.u32 %v2665, 2147483648
        %v2670 = vxor.u32 %v2666, 2147483648
        %v2671 = vxor.u32 %v2667, 2147483648
        %v2672 = vmul.f32 %v2669, 1.442695
        %v2673 = vpow.pop %v2672
        %v2674 = vmul.f32 %v2670, 1.442695
        %v2675 = vpow.pop %v2674
        %v2676 = vmul.f32 %v2671, 1.442695
        %v2677 = vpow.pop %v2676
        %v2678 = vadd.f32 %v2673, 1.0
        %v2679 = vadd.f32 %v2675, 1.0
        %v2680 = vadd.f32 %v2677, 1.0
        %v2681 = vrcp.pop %v2678
        %v2682 = vmul.f32 1.0, %v2681
        %v2683 = vrcp.pop %v2679
        %v2684 = vmul.f32 1.0, %v2683
        %v2685 = vrcp.pop %v2680
        %v2686 = vmul.f32 1.0, %v2685
        %v2687 = vtanh.pop %v2668
        %v2688 = vmul.f32 %v2684, %v2449
        %v2689 = vmul.f32 %v2682, %v2687
        %v2690 = vadd.f32 %v2688, %v2689
        %v2691 = vtanh.pop %v2690
        %v2692 = vmul.f32 %v2686, %v2691
        %s2693 = scalar_lea.vmem [#allocation2], 56
        %2694 = vst [vmem:[%s2693] sm:$0xff] %v2692
        %p2695 = scmp.eq.s32.totalorder %s26, 1
        // Predicated region
        $region73: #{reg_lstm_forward.1} parent=51 // pred_check
          %p2696 = pneg %p2695
        $region74: #{reg_lstm_forward.1} parent=51 // pred_check_branch
          %2698 = sbr.rel (%p2696) target = $region76
        $region75: #{reg_lstm_forward.1} parent=51 // pred_region
          %v2699 = vld [vmem:[#allocation2] sm:$0xff]
          %v2700 = vld [vmem:[#allocation2 + $0x8] sm:$0xff]
          %v2701 = vld [vmem:[#allocation2 + $0x10] sm:$0xff]
          %v2702 = vld [vmem:[#allocation2 + $0x18] sm:$0xff]
          %v2703 = vld [vmem:[#allocation2 + $0x20] sm:$0xff]
          %v2704 = vld [vmem:[#allocation2 + $0x28] sm:$0xff]
          %v2705 = vld [vmem:[#allocation2 + $0x30] sm:$0xff]
          %v2706 = vld [vmem:[#allocation2 + $0x38] sm:$0xff]
          %v2707 = vld [vmem:[#allocation8] sm:$0xff]
          %v2708 = vld [vmem:[#allocation8 + $0x8] sm:$0xff]
          %v2709 = vld [vmem:[#allocation8 + $0x10] sm:$0xff]
          %v2710 = vld [vmem:[#allocation8 + $0x18] sm:$0xff]
          %v2711 = vld [vmem:[#allocation8 + $0x20] sm:$0xff]
          %v2712 = vld [vmem:[#allocation8 + $0x28] sm:$0xff]
          %v2713 = vld [vmem:[#allocation8 + $0x30] sm:$0xff]
          %v2714 = vld [vmem:[#allocation8 + $0x38] sm:$0xff]
          %v2715 = vld [vmem:[#allocation8 + $0x40] sm:$0xff]
          %v2716 = vld [vmem:[#allocation8 + $0x48] sm:$0xff]
          %v2717 = vld [vmem:[#allocation8 + $0x50] sm:$0xff]
          %v2718 = vld [vmem:[#allocation8 + $0x58] sm:$0xff]
          %v2719 = vld [vmem:[#allocation8 + $0x60] sm:$0xff]
          %v2720 = vld [vmem:[#allocation8 + $0x68] sm:$0xff]
          %v2721 = vld [vmem:[#allocation8 + $0x70] sm:$0xff]
          %v2722 = vld [vmem:[#allocation8 + $0x78] sm:$0xff]
          %v2723 = vld [vmem:[%s5] sm:$0x1]
          %v2725 = vlaneseq
          %v2726 = vshrl.u32 %v2725, 7
          %v2727 = vsub.s32 0, %v2726
          %v2728 = vrot.slane %v2723, %v2727
          %2730 = vmatprep.subr.mxu0 0.0
          %2731 = vmatpush1.msra.mxu0 %v2707
          %2732 = vmatprep.subr.mxu0 0.0
          %2733 = vmatpush1.msra.mxu0 %v2708
          %2734 = vmatprep.subr.mxu0 0.0
          %2735 = vmatpush1.msra.mxu0 %v2709
          %2736 = vmatprep.subr.mxu0 0.0
          %2737 = vmatpush1.msra.mxu0 %v2710
          %2738 = vmatprep.subr.mxu0 0.0
          %2739 = vmatpush1.msra.mxu0 %v2711
          %2740 = vmatprep.subr.mxu0 0.0
          %2741 = vmatpush1.msra.mxu0 %v2712
          %2742 = vmatprep.subr.mxu0 0.0
          %2743 = vmatpush1.msra.mxu0 %v2713
          %2744 = vmatprep.subr.mxu0 0.0
          %2745 = vmatpush1.msra.mxu0 %v2714
          %2746 = vmatprep.subr.mxu0 0.0
          %2747 = vmatpush1.msra.mxu0 %v2715
          %2748 = vmatprep.subr.mxu0 0.0
          %2749 = vmatpush1.msra.mxu0 %v2716
          %2750 = vmatprep.subr.mxu0 0.0
          %2751 = vmatpush1.msra.mxu0 %v2717
          %2752 = vmatprep.subr.mxu0 0.0
          %2753 = vmatpush1.msra.mxu0 %v2718
          %2754 = vmatprep.subr.mxu0 0.0
          %2755 = vmatpush1.msra.mxu0 %v2719
          %2756 = vmatprep.subr.mxu0 0.0
          %2757 = vmatpush1.msra.mxu0 %v2720
          %2758 = vmatprep.subr.mxu0 0.0
          %2759 = vmatpush1.msra.mxu0 %v2721
          %2760 = vmatprep.subr.mxu0 0.0
          %2761 = vmatpush1.msra.mxu0 %v2722
          %2762 = vmatprep.subr.mxu0 0.0
          %2763 = vmatpush1.msra.mxu0 0.0
          %2764 = vmatprep.subr.mxu0 0.0
          %2765 = vmatpush1.msra.mxu0 0.0
          %2766 = vmatprep.subr.mxu0 0.0
          %2767 = vmatpush1.msra.mxu0 0.0
          %2768 = vmatprep.subr.mxu0 0.0
          %2769 = vmatpush1.msra.mxu0 0.0
          %2770 = vmatprep.subr.mxu0 0.0
          %2771 = vmatpush1.msra.mxu0 0.0
          %2772 = vmatprep.subr.mxu0 0.0
          %2773 = vmatpush1.msra.mxu0 0.0
          %2774 = vmatprep.subr.mxu0 0.0
          %2775 = vmatpush1.msra.mxu0 0.0
          %2776 = vmatprep.subr.mxu0 0.0
          %2777 = vmatpush1.msra.mxu0 0.0
          %2778 = vmatprep.subr.mxu0 0.0
          %2779 = vmatpush1.msra.mxu0 0.0
          %2780 = vmatprep.subr.mxu0 0.0
          %2781 = vmatpush1.msra.mxu0 0.0
          %2782 = vmatprep.subr.mxu0 0.0
          %2783 = vmatpush1.msra.mxu0 0.0
          %2784 = vmatprep.subr.mxu0 0.0
          %2785 = vmatpush1.msra.mxu0 0.0
          %2786 = vmatprep.subr.mxu0 0.0
          %2787 = vmatpush1.msra.mxu0 0.0
          %2788 = vmatprep.subr.mxu0 0.0
          %2789 = vmatpush1.msra.mxu0 0.0
          %2790 = vmatprep.subr.mxu0 0.0
          %2791 = vmatpush1.msra.mxu0 0.0
          %2792 = vmatprep.subr.mxu0 0.0
          %2793 = vmatpush1.msra.mxu0 0.0
          %2794 = vmatprep.mubr.f32.mxu0 0.0
          %2795 = vmatmul.mubr.f32.gmra.mrb[0].mxu0 %v2699
          %v2796 = vpop.f32.mrb[0].mxu0
          %v2797 = vadd.f32 %v2728, %v2796
          %v2798 = vpop.f32.mrb[0].mxu0
          %2799 = vmatprep.mubr.f32.mxu0 0.0
          %2800 = vmatmul.mubr.f32.gmra.mrb[0].mxu0 %v2700
          %v2801 = vpop.f32.mrb[0].mxu0
          %v2802 = vadd.f32 %v2728, %v2801
          %v2803 = vpop.f32.mrb[0].mxu0
          %2804 = vmatprep.mubr.f32.mxu0 0.0
          %2805 = vmatmul.mubr.f32.gmra.mrb[0].mxu0 %v2701
          %v2806 = vpop.f32.mrb[0].mxu0
          %v2807 = vadd.f32 %v2728, %v2806
          %v2808 = vpop.f32.mrb[0].mxu0
          %2809 = vmatprep.mubr.f32.mxu0 0.0
          %2810 = vmatmul.mubr.f32.gmra.mrb[0].mxu0 %v2702
          %v2811 = vpop.f32.mrb[0].mxu0
          %v2812 = vadd.f32 %v2728, %v2811
          %v2813 = vpop.f32.mrb[0].mxu0
          %2814 = vmatprep.mubr.f32.mxu0 0.0
          %2815 = vmatmul.mubr.f32.gmra.mrb[0].mxu0 %v2703
          %v2816 = vpop.f32.mrb[0].mxu0
          %v2817 = vadd.f32 %v2728, %v2816
          %v2818 = vpop.f32.mrb[0].mxu0
          %2819 = vmatprep.mubr.f32.mxu0 0.0
          %2820 = vmatmul.mubr.f32.gmra.mrb[0].mxu0 %v2704
          %v2821 = vpop.f32.mrb[0].mxu0
          %v2822 = vadd.f32 %v2728, %v2821
          %v2823 = vpop.f32.mrb[0].mxu0
          %2824 = vmatprep.mubr.f32.mxu0 0.0
          %2825 = vmatmul.mubr.f32.gmra.mrb[0].mxu0 %v2705
          %v2826 = vpop.f32.mrb[0].mxu0
          %v2827 = vadd.f32 %v2728, %v2826
          %v2828 = vpop.f32.mrb[0].mxu0
          %2829 = vmatprep.mubr.f32.mxu0 0.0
          %2830 = vmatmul.mubr.f32.gmra.mrb[0].mxu0 %v2706
          %v2831 = vpop.f32.mrb[0].mxu0
          %v2832 = vadd.f32 %v2728, %v2831
          %v2833 = vpop.f32.mrb[0].mxu0
          %2834 = vdwg.mxu0
          %v2835 = vtanh.pop %v2797
          %v2836 = vtanh.pop %v2802
          %v2837 = vtanh.pop %v2807
          %v2838 = vtanh.pop %v2812
          %v2839 = vtanh.pop %v2817
          %v2840 = vtanh.pop %v2822
          %v2841 = vtanh.pop %v2827
          %v2842 = vtanh.pop %v2832
          %v2843 = vld [vmem:[#allocation9] sm:$0xff]
          %v2844 = vld [vmem:[#allocation9 + $0x8] sm:$0xff]
          %v2845 = vld [vmem:[#allocation9 + $0x10] sm:$0xff]
          %v2846 = vld [vmem:[#allocation9 + $0x18] sm:$0xff]
          %v2847 = vld [vmem:[#allocation9 + $0x20] sm:$0xff]
          %v2848 = vld [vmem:[#allocation9 + $0x28] sm:$0xff]
          %v2849 = vld [vmem:[#allocation9 + $0x30] sm:$0xff]
          %v2850 = vld [vmem:[#allocation9 + $0x38] sm:$0xff]
          %v2851 = vld [vmem:[#allocation9 + $0x40] sm:$0xff]
          %v2852 = vld [vmem:[#allocation9 + $0x48] sm:$0xff]
          %v2853 = vld [vmem:[#allocation9 + $0x50] sm:$0xff]
          %v2854 = vld [vmem:[#allocation9 + $0x58] sm:$0xff]
          %v2855 = vld [vmem:[#allocation9 + $0x60] sm:$0xff]
          %v2856 = vld [vmem:[#allocation9 + $0x68] sm:$0xff]
          %v2857 = vld [vmem:[#allocation9 + $0x70] sm:$0xff]
          %v2858 = vld [vmem:[#allocation9 + $0x78] sm:$0xff]
          %v2859 = vld [vmem:[%s7] sm:$0x1]
          %v2861 = vlaneseq
          %v2862 = vshrl.u32 %v2861, 7
          %v2863 = vsub.s32 0, %v2862
          %v2864 = vrot.slane %v2859, %v2863
          %2866 = vmatprep.subr.mxu0 0.0
          %2867 = vmatpush1.msra.mxu0 %v2843
          %2868 = vmatprep.subr.mxu0 0.0
          %2869 = vmatpush1.msra.mxu0 %v2844
          %2870 = vmatprep.subr.mxu0 0.0
          %2871 = vmatpush1.msra.mxu0 %v2845
          %2872 = vmatprep.subr.mxu0 0.0
          %2873 = vmatpush1.msra.mxu0 %v2846
          %2874 = vmatprep.subr.mxu0 0.0
          %2875 = vmatpush1.msra.mxu0 %v2847
          %2876 = vmatprep.subr.mxu0 0.0
          %2877 = vmatpush1.msra.mxu0 %v2848
          %2878 = vmatprep.subr.mxu0 0.0
          %2879 = vmatpush1.msra.mxu0 %v2849
          %2880 = vmatprep.subr.mxu0 0.0
          %2881 = vmatpush1.msra.mxu0 %v2850
          %2882 = vmatprep.subr.mxu0 0.0
          %2883 = vmatpush1.msra.mxu0 %v2851
          %2884 = vmatprep.subr.mxu0 0.0
          %2885 = vmatpush1.msra.mxu0 %v2852
          %2886 = vmatprep.subr.mxu0 0.0
          %2887 = vmatpush1.msra.mxu0 %v2853
          %2888 = vmatprep.subr.mxu0 0.0
          %2889 = vmatpush1.msra.mxu0 %v2854
          %2890 = vmatprep.subr.mxu0 0.0
          %2891 = vmatpush1.msra.mxu0 %v2855
          %2892 = vmatprep.subr.mxu0 0.0
          %2893 = vmatpush1.msra.mxu0 %v2856
          %2894 = vmatprep.subr.mxu0 0.0
          %2895 = vmatpush1.msra.mxu0 %v2857
          %2896 = vmatprep.subr.mxu0 0.0
          %2897 = vmatpush1.msra.mxu0 %v2858
          %2898 = vmatprep.subr.mxu0 0.0
          %2899 = vmatpush1.msra.mxu0 0.0
          %2900 = vmatprep.subr.mxu0 0.0
          %2901 = vmatpush1.msra.mxu0 0.0
          %2902 = vmatprep.subr.mxu0 0.0
          %2903 = vmatpush1.msra.mxu0 0.0
          %2904 = vmatprep.subr.mxu0 0.0
          %2905 = vmatpush1.msra.mxu0 0.0
          %2906 = vmatprep.subr.mxu0 0.0
          %2907 = vmatpush1.msra.mxu0 0.0
          %2908 = vmatprep.subr.mxu0 0.0
          %2909 = vmatpush1.msra.mxu0 0.0
          %2910 = vmatprep.subr.mxu0 0.0
          %2911 = vmatpush1.msra.mxu0 0.0
          %2912 = vmatprep.subr.mxu0 0.0
          %2913 = vmatpush1.msra.mxu0 0.0
          %2914 = vmatprep.subr.mxu0 0.0
          %2915 = vmatpush1.msra.mxu0 0.0
          %2916 = vmatprep.subr.mxu0 0.0
          %2917 = vmatpush1.msra.mxu0 0.0
          %2918 = vmatprep.subr.mxu0 0.0
          %2919 = vmatpush1.msra.mxu0 0.0
          %2920 = vmatprep.subr.mxu0 0.0
          %2921 = vmatpush1.msra.mxu0 0.0
          %2922 = vmatprep.subr.mxu0 0.0
          %2923 = vmatpush1.msra.mxu0 0.0
          %2924 = vmatprep.subr.mxu0 0.0
          %2925 = vmatpush1.msra.mxu0 0.0
          %2926 = vmatprep.subr.mxu0 0.0
          %2927 = vmatpush1.msra.mxu0 0.0
          %2928 = vmatprep.subr.mxu0 0.0
          %2929 = vmatpush1.msra.mxu0 0.0
          %2930 = vmatprep.mubr.f32.mxu0 0.0
          %2931 = vmatmul.mubr.f32.gmra.mrb[0].mxu0 %v2835
          %v2932 = vpop.f32.mrb[0].mxu0
          %v2933 = vadd.f32 %v2864, %v2932
          %v2934 = vpop.f32.mrb[0].mxu0
          %2935 = vmatprep.mubr.f32.mxu0 0.0
          %2936 = vmatmul.mubr.f32.gmra.mrb[0].mxu0 %v2836
          %v2937 = vpop.f32.mrb[0].mxu0
          %v2938 = vadd.f32 %v2864, %v2937
          %v2939 = vpop.f32.mrb[0].mxu0
          %2940 = vmatprep.mubr.f32.mxu0 0.0
          %2941 = vmatmul.mubr.f32.gmra.mrb[0].mxu0 %v2837
          %v2942 = vpop.f32.mrb[0].mxu0
          %v2943 = vadd.f32 %v2864, %v2942
          %v2944 = vpop.f32.mrb[0].mxu0
          %2945 = vmatprep.mubr.f32.mxu0 0.0
          %2946 = vmatmul.mubr.f32.gmra.mrb[0].mxu0 %v2838
          %v2947 = vpop.f32.mrb[0].mxu0
          %v2948 = vadd.f32 %v2864, %v2947
          %v2949 = vpop.f32.mrb[0].mxu0
          %2950 = vmatprep.mubr.f32.mxu0 0.0
          %2951 = vmatmul.mubr.f32.gmra.mrb[0].mxu0 %v2839
          %v2952 = vpop.f32.mrb[0].mxu0
          %v2953 = vadd.f32 %v2864, %v2952
          %v2954 = vpop.f32.mrb[0].mxu0
          %2955 = vmatprep.mubr.f32.mxu0 0.0
          %2956 = vmatmul.mubr.f32.gmra.mrb[0].mxu0 %v2840
          %v2957 = vpop.f32.mrb[0].mxu0
          %v2958 = vadd.f32 %v2864, %v2957
          %v2959 = vpop.f32.mrb[0].mxu0
          %2960 = vmatprep.mubr.f32.mxu0 0.0
          %2961 = vmatmul.mubr.f32.gmra.mrb[0].mxu0 %v2841
          %v2962 = vpop.f32.mrb[0].mxu0
          %v2963 = vadd.f32 %v2864, %v2962
          %v2964 = vpop.f32.mrb[0].mxu0
          %2965 = vmatprep.mubr.f32.mxu0 0.0
          %2966 = vmatmul.mubr.f32.gmra.mrb[0].mxu0 %v2842
          %v2967 = vpop.f32.mrb[0].mxu0
          %v2968 = vadd.f32 %v2864, %v2967
          %v2969 = vpop.f32.mrb[0].mxu0
          %2970 = vdwg.mxu0
          %2971 = vst [vmem:[%s8] sm:$0xff] %v2933
          %2972 = vst [vmem:[%s8 + $0x8] sm:$0xff] %v2938
          %2973 = vst [vmem:[%s8 + $0x10] sm:$0xff] %v2943
          %2974 = vst [vmem:[%s8 + $0x18] sm:$0xff] %v2948
          %2975 = vst [vmem:[%s8 + $0x20] sm:$0xff] %v2953
          %2976 = vst [vmem:[%s8 + $0x28] sm:$0xff] %v2958
          %2977 = vst [vmem:[%s8 + $0x30] sm:$0xff] %v2963
          %2978 = vst [vmem:[%s8 + $0x38] sm:$0xff] %v2968
        $region76: #{reg_lstm_forward.1} parent=51 // pred_fallthru
          _
        // Predicated region
        $region77: #{reg_lstm_forward.1} parent=51 // pred_check
          %p2979 = pneg %p222
        $region78: #{reg_lstm_forward.1} parent=51 // pred_check_branch
          %2981 = sbr.rel (%p2979) target = $region80
        $region79: #{reg_lstm_forward.1} parent=51 // pred_region
          _
        $region80: #{reg_lstm_forward.1} parent=51 // pred_fallthru
          _
        // Predicated region
        $region81: #{reg_lstm_forward.1} parent=51 // pred_check
          %p2982 = pneg %p222
        $region82: #{reg_lstm_forward.1} parent=51 // pred_check_branch
          %2984 = sbr.rel (%p2982) target = $region84
        $region83: #{reg_lstm_forward.1} parent=51 // pred_region
          _
        $region84: #{reg_lstm_forward.1} parent=51 // pred_fallthru
          _
      $region52: #{reg_lstm_forward.1} parent=5 // pred_fallthru
        _
      %p2985 = scmp.le.s32.totalorder 2, %s21
      // Predicated region
      $region85: #{reg_lstm_forward.1} parent=5 // pred_check
        %p2986 = pneg %p2985
      $region86: #{reg_lstm_forward.1} parent=5 // pred_check_branch
        %2988 = sbr.rel (%p2986) target = $region88
      $region87: #{reg_lstm_forward.1} parent=5 // pred_region
        %s2989 = ssub.s32 %s21, 2
      $region88: #{reg_lstm_forward.1} parent=5 // pred_fallthru
        _
    $region6: #{reg_lstm_forward.1} parent=1 // loop_footer
      %s25 = sadd.s32 1, %s21
    $region7: #{reg_lstm_forward.1} parent=1 // loop_footer_branch
      %20 = sbr.rel target = $region3
    $region8: #{reg_lstm_forward.1} parent=1 // loop_exit
      _
    %2990 = vsyncpa [#allocation5], 1
    %s2991 = scalar_lea.sflag [#allocation5], 1
    %2992 = vsyncpa %s2991, 1
    %2993 = vsyncpa [#allocation7], 1
    %s2994 = scalar_lea.sflag [#allocation7], 1
    %2995 = vsyncpa %s2994, 1
    %2996 = vsyncpa [#allocation10], 1

</llo_original>
